<compile_context>
chip_gen: v6e
topology: v6e:2x2x1
jax: 0.10.0
libtpu: 0.0.40
codegen_flags: <defaults>
</compile_context>

<pallas_src>
import math
from functools import partial

import jax
import jax.numpy as jnp
from jax import lax
from jax.experimental import pallas as pl
from jax.experimental.pallas import tpu as pltpu


def _ima_kernel(n_head, d_k, compute_dtype, has_mask, exact_softmax, *refs):
    """One (batch, q-tile) grid step.

    q_ref            : (1, TQ, D)        VMEM, compute_dtype
    k_ref, v_ref     : (1, Sk, D)        VMEM, compute_dtype (resident per batch)
    mask_ref         : (1, TQ, Sk) int32 VMEM (only when has_mask)
    wqt_ref, wkt_ref : (D, H*d_k)        VMEM, pre-transposed, compute_dtype
    bq_ref, bk_ref   : (1, H*d_k)        VMEM, f32
    wvt_ref          : (D, d_v)          VMEM, pre-transposed, compute_dtype
    bv_ref           : (1, d_v)          VMEM, f32
    wht_ref          : (d_v, D)          VMEM, pre-transposed, compute_dtype
    out_ref          : (1, TQ, D)        VMEM, f32
    attn_ref         : (1, TQ, H*Sk)     VMEM (per-head lane slabs, module order)
    ks_cache         : (Sk, H*d_k)       VMEM scratch, persists across q-tiles
    vs_cache         : (Sk, d_v)         VMEM scratch, persists across q-tiles
    """
    if has_mask:
        (q_ref, k_ref, v_ref, mask_ref,
         wqt_ref, bq_ref, wkt_ref, bk_ref, wvt_ref, bv_ref, wht_ref,
         out_ref, attn_ref, ks_cache, vs_cache) = refs
    else:
        (q_ref, k_ref, v_ref,
         wqt_ref, bq_ref, wkt_ref, bk_ref, wvt_ref, bv_ref, wht_ref,
         out_ref, attn_ref, ks_cache, vs_cache) = refs
        mask_ref = None

    # --- per-batch K/V projection cache -------------------------------------
    # ks_all / vs depend only on the batch index; compute them once at the
    # first q-tile of each batch (inner grid axis is "arbitrary", so every
    # batch starts at q-tile 0 on whichever core owns it) and reuse from VMEM.
    @pl.when(pl.program_id(1) == 0)
    def _():
        k = k_ref[0]                                              # (Sk, D)
        v = v_ref[0]                                              # (Sk, D)
        ks_all = jnp.dot(k, wkt_ref[...],
                         preferred_element_type=jnp.float32) + bk_ref[0]
        vs = jnp.dot(v, wvt_ref[...],
                     preferred_element_type=jnp.float32) + bv_ref[0]
        ks_cache[...] = ks_all.astype(compute_dtype)
        vs_cache[...] = vs.astype(compute_dtype)

    # --- per-q-tile work -----------------------------------------------------
    q = q_ref[0]                                                  # (TQ, D)
    qs_all = jnp.dot(q, wqt_ref[...],
                     preferred_element_type=jnp.float32) + bq_ref[0]
    qs_all_c = qs_all.astype(compute_dtype)                       # (TQ, H*d_k)
    ks_all_c = ks_cache[...]                                      # (Sk, H*d_k)
    vs_c = vs_cache[...]                                          # (Sk, d_v)

    tq = qs_all_c.shape[0]
    sk = ks_all_c.shape[0]
    scale = 1.0 / math.sqrt(float(d_k))
    attn_sum = jnp.zeros((tq, sk), dtype=jnp.float32)
    if has_mask:
        masked = mask_ref[0] != 0                                 # (TQ, Sk) bool

    dim_nums = (((1,), (1,)), ((), ()))       # contract d_k with d_k, no batch

    for h in range(n_head):                   # n_head is static -> unrolled
        qh = qs_all_c[:, h * d_k:(h + 1) * d_k]                   # (TQ, d_k)
        kh = ks_all_c[:, h * d_k:(h + 1) * d_k]                   # (Sk, d_k)
        scores = lax.dot_general(qh, kh, dim_nums,
                                 preferred_element_type=jnp.float32) * scale
        if has_mask:
            scores = jnp.where(masked, jnp.float32(-1e9), scores)
        scores = scores - jnp.max(scores, axis=-1, keepdims=True)
        e = jnp.exp(scores)
        denom = jnp.sum(e, axis=-1, keepdims=True)
        if exact_softmax:
            attn = e / denom                                      # strict parity
        else:
            attn = e * pl.reciprocal(denom, approx=True)          # EUP, off VALU

        # Static lane-slice store in the module's (Sq, H, Sk) order: head h
        # occupies lanes [h*Sk, (h+1)*Sk) of the flat (TQ, H*Sk) block, so the
        # wrapper reshape back to (B, Sq, H, Sk) is free (no HBM transpose).
        attn_ref[0, :, h * sk:(h + 1) * sk] = attn.astype(attn_ref.dtype)
        attn_sum = attn_sum + attn

    # Shared V projection => mean_h(attn_h @ vs) == (mean_h attn_h) @ vs:
    # one (TQ, Sk) x (Sk, d_v) matmul instead of H of them.
    mean_attn = (attn_sum * (1.0 / float(n_head))).astype(compute_dtype)
    mean_head = jnp.dot(mean_attn, vs_c,
                        preferred_element_type=jnp.float32)       # (TQ, d_v)
    out = jnp.dot(mean_head.astype(compute_dtype), wht_ref[...],
                  preferred_element_type=jnp.float32)             # (TQ, D)
    out_ref[0] = out.astype(out_ref.dtype)


def _round_up(x, m):
    return -(-x // m) * m


def _padded_block_bytes(shape, dtype):
    """VMEM bytes for one block, padded to its dtype's (sublane, lane) tiling."""
    itemsize = jnp.dtype(dtype).itemsize
    s = [int(d) for d in shape]
    if len(s) >= 1:
        s[-1] = _round_up(s[-1], 128)
    if len(s) >= 2:
        s[-2] = _round_up(s[-2], max(8, 32 // itemsize))  # 8/f32, 16/bf16, 32/i8
    n = 1
    for d in s:
        n *= d
    return n * itemsize


def _vmem_capacity_bytes():
    try:
        return int(pltpu.get_tpu_info().vmem_capacity_bytes)
    except Exception:
        return 64 << 20          # conservative (v7x per-core VMEM)


def _footprint_bytes(tq, sk, d_model, n_head, d_k, d_v,
                     compute_dtype, attn_dtype, has_mask, single_buffer):
    """Padded VMEM footprint of one pipelined grid step."""
    streamed = [((1, tq, d_model), compute_dtype),            # q block
                ((1, tq, d_model), jnp.float32),              # out block
                ((1, tq, n_head * sk), attn_dtype)]           # attn block
    if has_mask:
        streamed.append(((1, tq, sk), jnp.int32))
    resident = [((1, sk, d_model), compute_dtype),            # k
                ((1, sk, d_model), compute_dtype),            # v
                ((d_model, n_head * d_k), compute_dtype),     # wq_t
                ((1, n_head * d_k), jnp.float32),             # bq
                ((d_model, n_head * d_k), compute_dtype),     # wk_t
                ((1, n_head * d_k), jnp.float32),             # bk
                ((d_model, d_v), compute_dtype),              # wv_t
                ((1, d_v), jnp.float32),                      # bv
                ((d_v, d_model), compute_dtype)]              # wh_t
    scratch = [((sk, n_head * d_k), compute_dtype),           # ks cache
               ((sk, d_v), compute_dtype)]                    # vs cache
    total = 2 * sum(_padded_block_bytes(s, d) for s, d in streamed)
    total += (1 if single_buffer else 2) * sum(
        _padded_block_bytes(s, d) for s, d in resident)
    total += sum(_padded_block_bytes(s, d) for s, d in scratch)
    # Unrolled per-head f32 temporaries (scores / e / attn / attn_sum) plus
    # the f32 projection intermediates.
    total += 6 * _padded_block_bytes((tq, sk), jnp.float32)
    total += 3 * _padded_block_bytes((tq, n_head * d_k), jnp.float32)
    return total


def _pick_q_tile(sq, fits, target):
    """Largest sublane-aligned divisor of Sq (<= target) whose footprint fits."""
    cands = sorted({d for d in range(8, min(sq, target) + 1, 8) if sq % d == 0}
                   | ({sq} if sq <= target else set()), reverse=True)
    if not cands:
        cands = [sq]
    for t in cands:
        if fits(t):
            return t
    return cands[-1]


def ima_forward(q, k, v, params, n_head, mask=None, *,
                compute_dtype=jnp.bfloat16, attn_dtype=jnp.bfloat16,
                block_q=None):
    """IMA forward pass. q, k, v: (B, S, d_model) float32.

    Returns (outputs (B, Sq, d_model) f32, attn (B, Sq, n_head, Sk) attn_dtype),
    matching the PyTorch module with dropout p=0.  `mask` (optional) is a
    boolean/int (B, Sq, Sk) array; nonzero entries are filled with -1e9 before
    the softmax (masked_fill semantics).  compute_dtype=jnp.float32 gives
    strict numerical parity (incl. exact softmax division); bf16 (default)
    runs the MXU at full rate with f32 accumulation.  attn_dtype=bf16 (default)
    halves the attention-probability writeback (~3 significant digits).
    """
    B, Sq, D = q.shape
    Sk = k.shape[1]
    d_k = D // n_head
    d_v = d_k
    has_mask = mask is not None
    exact_softmax = (jnp.dtype(compute_dtype) == jnp.dtype(jnp.float32))

    wq, bq, wk, bk = params["wq"], params["bq"], params["wk"], params["bk"]
    wv, bv, wh = params["wv"], params["bv"], params["wh"]

    # Pre-fuse / pre-transpose / pre-cast weights AND activations in the
    # wrapper so the kernel streams compute-dtype blocks and never transposes.
    wq_t = wq.reshape(n_head * d_k, D).T.astype(compute_dtype)     # (D, H*d_k)
    wk_t = wk.reshape(n_head * d_k, D).T.astype(compute_dtype)     # (D, H*d_k)
    wv_t = wv.T.astype(compute_dtype)                              # (D, d_v)
    wh_t = wh.T.astype(compute_dtype)                              # (d_v, D)
    bq_f = bq.reshape(1, n_head * d_k).astype(jnp.float32)
    bk_f = bk.reshape(1, n_head * d_k).astype(jnp.float32)
    bv_f = bv.reshape(1, d_v).astype(jnp.float32)
    q_c = q.astype(compute_dtype)
    k_c = k.astype(compute_dtype)
    v_c = v.astype(compute_dtype)
    mask_i = mask.astype(jnp.int32) if has_mask else None

    # Generation-aware VMEM budget (v5e/v6e: 128 MiB, v7x: 64 MiB per core),
    # keeping ~20% headroom for Mosaic internal scratch.
    vmem_cap = _vmem_capacity_bytes()
    vmem_budget = int(vmem_cap * 0.80)
    tq_target = 512 if vmem_cap >= (96 << 20) else 256

    def fits(t):
        fp = _footprint_bytes(t, Sk, D, n_head, d_k, d_v, compute_dtype,
                              attn_dtype, has_mask, single_buffer=True)
        return fp <= int(vmem_budget * 0.9)

    tq = block_q if block_q is not None else _pick_q_tile(Sq, fits, tq_target)
    assert Sq % tq == 0, "block_q must divide the query sequence length"
    n_q = Sq // tq

    kernel = partial(_ima_kernel, n_head, d_k, compute_dtype, has_mask,
                     exact_softmax)

    out_shape = (
        jax.ShapeDtypeStruct((B, Sq, D), jnp.float32),
        # Flat (B, Sq, H*Sk) is already the module's (B, Sq, H, Sk) row-major
        # order, so the final reshape is free (no HBM transpose round trip).
        jax.ShapeDtypeStruct((B, Sq, n_head * Sk), attn_dtype),
    )
    scratch_shapes = [pltpu.VMEM((Sk, n_head * d_k), compute_dtype),
                      pltpu.VMEM((Sk, d_v), compute_dtype)]
    args = (q_c, k_c, v_c) + ((mask_i,) if has_mask else ()) + \
           (wq_t, bq_f, wk_t, bk_f, wv_t, bv_f, wh_t)

    def build(single_buffer_resident):
        def res_spec(shape, imap):
            # Blocks whose index never changes along the inner axis don't need
            # double buffering; single-buffering frees VMEM for larger q-tiles.
            if single_buffer_resident:
                return pl.BlockSpec(shape, imap,
                                    pipeline_mode=pl.Buffered(buffer_count=1))
            return pl.BlockSpec(shape, imap)

        in_specs = [
            pl.BlockSpec((1, tq, D), lambda b, i: (b, i, 0)),      # q (streamed)
            res_spec((1, Sk, D), lambda b, i: (b, 0, 0)),          # k (per batch)
            res_spec((1, Sk, D), lambda b, i: (b, 0, 0)),          # v (per batch)
        ]
        if has_mask:
            in_specs.append(pl.BlockSpec((1, tq, Sk), lambda b, i: (b, i, 0)))
        in_specs += [
            res_spec(wq_t.shape, lambda b, i: (0, 0)),
            res_spec(bq_f.shape, lambda b, i: (0, 0)),
            res_spec(wk_t.shape, lambda b, i: (0, 0)),
            res_spec(bk_f.shape, lambda b, i: (0, 0)),
            res_spec(wv_t.shape, lambda b, i: (0, 0)),
            res_spec(bv_f.shape, lambda b, i: (0, 0)),
            res_spec(wh_t.shape, lambda b, i: (0, 0)),
        ]
        out_specs = [
            pl.BlockSpec((1, tq, D), lambda b, i: (b, i, 0)),
            pl.BlockSpec((1, tq, n_head * Sk), lambda b, i: (b, i, 0)),
        ]
        return pl.pallas_call(
            kernel,
            out_shape=out_shape,
            grid_spec=pltpu.PrefetchScalarGridSpec(
                num_scalar_prefetch=0,
                grid=(B, n_q),
                in_specs=in_specs,
                out_specs=out_specs,
                scratch_shapes=scratch_shapes,
            ),
            compiler_params=pltpu.CompilerParams(
                # Batch axis parallel (megacore); q-tile axis arbitrary so the
                # per-batch K/V-projection cache is always refreshed at tile 0.
                dimension_semantics=("parallel", "arbitrary"),
                vmem_limit_bytes=vmem_budget,
            ),
        )

    try:
        out, attn_flat = build(True)(*args)
    except Exception:
        # Fallback for jax versions without BlockSpec pipeline_mode support.
        out, attn_flat = build(False)(*args)

    attn = attn_flat.reshape(B, Sq, n_head, Sk)   # free: row-major compatible
    return out, attn


def init_ima_params(key, n_head, d_model):
    """Deterministic xavier_uniform weights / zero biases (matches init_weights)."""
    d_k = d_model // n_head

    def xavier(key, shape):
        # PyTorch Linear weight shape = (out, in); fan_in = in, fan_out = out
        fan_out, fan_in = shape[-2], shape[-1]
        bound = math.sqrt(6.0 / (fan_in + fan_out))
        return jax.random.uniform(key, shape, jnp.float32, -bound, bound)

    ks = jax.random.split(key, 4)
    params = {
        "wq": xavier(ks[0], (n_head, d_k, d_model)),   # q_layers[i].weight stacked
        "bq": jnp.zeros((n_head, d_k), jnp.float32),
        "wk": xavier(ks[1], (n_head, d_k, d_model)),   # k_layers[i].weight stacked
        "bk": jnp.zeros((n_head, d_k), jnp.float32),
        "wv": xavier(ks[2], (d_k, d_model)),           # v_layer.weight
        "bv": jnp.zeros((d_k,), jnp.float32),
        "wh": xavier(ks[3], (d_model, d_k)),           # w_h.weight (no bias)
    }
    return params


def ima_reference(q, k, v, params, n_head, mask=None, compute_dtype=jnp.float32):
    """Pure-JAX reference mirroring the PyTorch forward (dropout p=0)."""
    cd = compute_dtype

    def mm(a, b):
        return jnp.dot(a.astype(cd), b.astype(cd),
                       preferred_element_type=jnp.float32)

    wq, bq, wk, bk = params["wq"], params["bq"], params["wk"], params["bk"]
    wv, bv, wh = params["wv"], params["bv"], params["wh"]
    d_k = wq.shape[1]

    vs = mm(v, wv.T) + bv                                  # (B, Sk, d_v)
    heads, attns = [], []
    for h in range(n_head):
        qs = mm(q, wq[h].T) + bq[h]
        ks = mm(k, wk[h].T) + bk[h]
        scores = jnp.einsum("bqd,bkd->bqk", qs.astype(cd), ks.astype(cd),
                            preferred_element_type=jnp.float32)
        scores = scores / jnp.sqrt(jnp.float32(d_k))
        if mask is not None:
            scores = jnp.where(mask, jnp.float32(-1e9), scores)
        attn = jax.nn.softmax(scores, axis=-1)
        heads.append(jnp.einsum("bqk,bkd->bqd", attn.astype(cd), vs.astype(cd),
                                preferred_element_type=jnp.float32))
        attns.append(attn)
    head = jnp.stack(heads, axis=2)                        # (B, Sq, H, d_v)
    attn = jnp.stack(attns, axis=2)                        # (B, Sq, H, Sk)
    outputs = mm(jnp.mean(head, axis=2), wh.T)             # (B, Sq, d_model)
    return outputs, attn


if __name__ == "__main__":
    B, S, d_model, n_head = 2, 8, 32, 4

    key = jax.random.PRNGKey(0)
    kq, kk, kv, kp = jax.random.split(key, 4)
    q = jax.random.normal(kq, (B, S, d_model), jnp.float32)
    k = jax.random.normal(kk, (B, S, d_model), jnp.float32)
    v = jax.random.normal(kv, (B, S, d_model), jnp.float32)

    params = init_ima_params(kp, n_head, d_model)

    # Fast path: bf16 MXU operands / bf16 attn output, f32 accumulation.
    out, attn = ima_forward(q, k, v, params, n_head)
    out = jax.block_until_ready(out)
    attn = jax.block_until_ready(attn)
    assert out.shape == (B, S, d_model) and out.dtype == jnp.float32
    assert attn.shape == (B, S, n_head, S)

    out_ref, attn_ref = ima_reference(q, k, v, params, n_head,
                                      compute_dtype=jnp.bfloat16)
    assert jnp.allclose(out, out_ref, atol=3e-2, rtol=3e-2)
    assert jnp.allclose(attn.astype(jnp.float32), attn_ref, atol=3e-2, rtol=3e-2)

    # Strict-parity path: f32 everywhere, exact softmax division.
    out32, attn32 = ima_forward(q, k, v, params, n_head,
                                compute_dtype=jnp.float32,
                                attn_dtype=jnp.float32)
    out32 = jax.block_until_ready(out32)
    attn32 = jax.block_until_ready(attn32)
    out_ref32, attn_ref32 = ima_reference(q, k, v, params, n_head)
    assert jnp.allclose(out32, out_ref32, atol=1e-2, rtol=1e-2)
    assert jnp.allclose(attn32, attn_ref32, atol=1e-2, rtol=1e-2)

    # Masked path (masked_fill(mask, -1e9) before the softmax), causal mask.
    causal = jnp.triu(jnp.ones((S, S), jnp.int32), k=1).astype(jnp.bool_)
    mask = jnp.broadcast_to(causal, (B, S, S))
    out_m, attn_m = ima_forward(q, k, v, params, n_head, mask=mask,
                                compute_dtype=jnp.float32,
                                attn_dtype=jnp.float32)
    out_m = jax.block_until_ready(out_m)
    attn_m = jax.block_until_ready(attn_m)
    out_ref_m, attn_ref_m = ima_reference(q, k, v, params, n_head, mask=mask)
    assert jnp.allclose(out_m, out_ref_m, atol=1e-2, rtol=1e-2)
    assert jnp.allclose(attn_m, attn_ref_m, atol=1e-2, rtol=1e-2)

    print("KERNEL_OK")
</pallas_src>

<mosaic_0001>
module attributes {stable_mosaic.version = 11 : i64} {
  func.func @_ima_kernel(%arg0: i32, %arg1: i32, %arg2: memref<1x8x32xbf16, #tpu.memory_space<vmem>>, %arg3: memref<1x8x32xbf16, #tpu.memory_space<vmem>>, %arg4: memref<1x8x32xbf16, #tpu.memory_space<vmem>>, %arg5: memref<32x32xbf16, #tpu.memory_space<vmem>>, %arg6: memref<1x32xf32, #tpu.memory_space<vmem>>, %arg7: memref<32x32xbf16, #tpu.memory_space<vmem>>, %arg8: memref<1x32xf32, #tpu.memory_space<vmem>>, %arg9: memref<32x8xbf16, #tpu.memory_space<vmem>>, %arg10: memref<1x8xf32, #tpu.memory_space<vmem>>, %arg11: memref<8x32xbf16, #tpu.memory_space<vmem>>, %arg12: memref<1x8x32xf32, #tpu.memory_space<vmem>>, %arg13: memref<1x8x32xbf16, #tpu.memory_space<vmem>>, %arg14: memref<8x32xbf16, #tpu.memory_space<vmem>>, %arg15: memref<8x8xbf16, #tpu.memory_space<vmem>>) attributes {dimension_semantics = [#tpu.dimension_semantics<parallel>, #tpu.dimension_semantics<arbitrary>], iteration_bounds = array<i64: 2, 1>, scalar_prefetch = 0 : i64, scratch_operands = 2 : i64, tpu.core_type = #tpu.core_type<tc>, window_params = [{transform_indices = @transform_0, window_bounds = array<i64: 1, 8, 32>}, {pipeline_mode = #tpu.pipeline_mode<synchronous>, transform_indices = @transform_1, window_bounds = array<i64: 1, 8, 32>}, {pipeline_mode = #tpu.pipeline_mode<synchronous>, transform_indices = @transform_2, window_bounds = array<i64: 1, 8, 32>}, {pipeline_mode = #tpu.pipeline_mode<synchronous>, transform_indices = @transform_3, window_bounds = array<i64: 32, 32>}, {pipeline_mode = #tpu.pipeline_mode<synchronous>, transform_indices = @transform_4, window_bounds = array<i64: 1, 32>}, {pipeline_mode = #tpu.pipeline_mode<synchronous>, transform_indices = @transform_5, window_bounds = array<i64: 32, 32>}, {pipeline_mode = #tpu.pipeline_mode<synchronous>, transform_indices = @transform_6, window_bounds = array<i64: 1, 32>}, {pipeline_mode = #tpu.pipeline_mode<synchronous>, transform_indices = @transform_7, window_bounds = array<i64: 32, 8>}, {pipeline_mode = #tpu.pipeline_mode<synchronous>, transform_indices = @transform_8, window_bounds = array<i64: 1, 8>}, {pipeline_mode = #tpu.pipeline_mode<synchronous>, transform_indices = @transform_9, window_bounds = array<i64: 8, 32>}, {transform_indices = @transform_10, window_bounds = array<i64: 1, 8, 32>}, {transform_indices = @transform_11, window_bounds = array<i64: 1, 8, 32>}]} {
    %c0_i32 = arith.constant 0 : i32
    %0 = arith.cmpi eq, %arg1, %c0_i32 : i32
    %1 = arith.extui %0 : i1 to i32
    %c0_i32_0 = arith.constant 0 : i32
    %2 = arith.cmpi ne, %1, %c0_i32_0 : i32
    scf.if %2 {
      %c0_45 = arith.constant 0 : index
      %c0_46 = arith.constant 0 : index
      %c0_47 = arith.constant 0 : index
      %106 = vector.load %arg3[%c0_45, %c0_46, %c0_47] : memref<1x8x32xbf16, #tpu.memory_space<vmem>>, vector<1x8x32xbf16>
      %107 = vector.shape_cast %106 : vector<1x8x32xbf16> to vector<8x32xbf16>
      %c0_48 = arith.constant 0 : index
      %c0_49 = arith.constant 0 : index
      %c0_50 = arith.constant 0 : index
      %108 = vector.load %arg4[%c0_48, %c0_49, %c0_50] : memref<1x8x32xbf16, #tpu.memory_space<vmem>>, vector<1x8x32xbf16>
      %109 = vector.shape_cast %108 : vector<1x8x32xbf16> to vector<8x32xbf16>
      %c0_51 = arith.constant 0 : index
      %c0_52 = arith.constant 0 : index
      %110 = vector.load %arg7[%c0_51, %c0_52] : memref<32x32xbf16, #tpu.memory_space<vmem>>, vector<32x32xbf16>
      %cst_53 = arith.constant dense<0.000000e+00> : vector<8x32xf32>
      %111 = tpu.matmul %107, %110, %cst_53 {dimension_numbers = #tpu.dot_dimension_numbers<[1], [0], [0], [1], [0, 0, 1, 1], [], []>} : vector<8x32xbf16>, vector<32x32xbf16>, vector<8x32xf32> -> vector<8x32xf32>
      %c0_54 = arith.constant 0 : index
      %c0_55 = arith.constant 0 : index
      %112 = vector.load %arg8[%c0_54, %c0_55] : memref<1x32xf32, #tpu.memory_space<vmem>>, vector<1x32xf32>
      %113 = vector.shape_cast %112 : vector<1x32xf32> to vector<32xf32>
      %114 = vector.shape_cast %113 : vector<32xf32> to vector<1x32xf32>
      %115 = vector.broadcast %114 : vector<1x32xf32> to vector<8x32xf32>
      %116 = arith.addf %111, %115 : vector<8x32xf32>
      %c0_56 = arith.constant 0 : index
      %c0_57 = arith.constant 0 : index
      %117 = vector.load %arg9[%c0_56, %c0_57] : memref<32x8xbf16, #tpu.memory_space<vmem>>, vector<32x8xbf16>
      %cst_58 = arith.constant dense<0.000000e+00> : vector<8x8xf32>
      %118 = tpu.matmul %109, %117, %cst_58 {dimension_numbers = #tpu.dot_dimension_numbers<[1], [0], [0], [1], [0, 0, 1, 1], [], []>} : vector<8x32xbf16>, vector<32x8xbf16>, vector<8x8xf32> -> vector<8x8xf32>
      %c0_59 = arith.constant 0 : index
      %c0_60 = arith.constant 0 : index
      %119 = vector.load %arg10[%c0_59, %c0_60] : memref<1x8xf32, #tpu.memory_space<vmem>>, vector<1x8xf32>
      %120 = vector.shape_cast %119 : vector<1x8xf32> to vector<8xf32>
      %121 = vector.shape_cast %120 : vector<8xf32> to vector<1x8xf32>
      %122 = vector.broadcast %121 : vector<1x8xf32> to vector<8x8xf32>
      %123 = arith.addf %118, %122 : vector<8x8xf32>
      %124 = arith.truncf %116 : vector<8x32xf32> to vector<8x32xbf16>
      %c0_61 = arith.constant 0 : index
      %c0_62 = arith.constant 0 : index
      %125 = vector.load %arg14[%c0_61, %c0_62] : memref<8x32xbf16, #tpu.memory_space<vmem>>, vector<8x32xbf16>
      tpu.vector_store %arg14[%c0_61, %c0_62], %124 {strides = array<i32>} : memref<8x32xbf16, #tpu.memory_space<vmem>>, vector<8x32xbf16>,
      %126 = arith.truncf %123 : vector<8x8xf32> to vector<8x8xbf16>
      %c0_63 = arith.constant 0 : index
      %c0_64 = arith.constant 0 : index
      %127 = vector.load %arg15[%c0_63, %c0_64] : memref<8x8xbf16, #tpu.memory_space<vmem>>, vector<8x8xbf16>
      tpu.vector_store %arg15[%c0_63, %c0_64], %126 {strides = array<i32>} : memref<8x8xbf16, #tpu.memory_space<vmem>>, vector<8x8xbf16>,
    } else {
    }
    %c0 = arith.constant 0 : index
    %c0_1 = arith.constant 0 : index
    %c0_2 = arith.constant 0 : index
    %3 = vector.load %arg2[%c0, %c0_1, %c0_2] : memref<1x8x32xbf16, #tpu.memory_space<vmem>>, vector<1x8x32xbf16>
    %4 = vector.shape_cast %3 : vector<1x8x32xbf16> to vector<8x32xbf16>
    %c0_3 = arith.constant 0 : index
    %c0_4 = arith.constant 0 : index
    %5 = vector.load %arg5[%c0_3, %c0_4] : memref<32x32xbf16, #tpu.memory_space<vmem>>, vector<32x32xbf16>
    %cst = arith.constant dense<0.000000e+00> : vector<8x32xf32>
    %6 = tpu.matmul %4, %5, %cst {dimension_numbers = #tpu.dot_dimension_numbers<[1], [0], [0], [1], [0, 0, 1, 1], [], []>} : vector<8x32xbf16>, vector<32x32xbf16>, vector<8x32xf32> -> vector<8x32xf32>
    %c0_5 = arith.constant 0 : index
    %c0_6 = arith.constant 0 : index
    %7 = vector.load %arg6[%c0_5, %c0_6] : memref<1x32xf32, #tpu.memory_space<vmem>>, vector<1x32xf32>
    %8 = vector.shape_cast %7 : vector<1x32xf32> to vector<32xf32>
    %9 = vector.shape_cast %8 : vector<32xf32> to vector<1x32xf32>
    %10 = vector.broadcast %9 : vector<1x32xf32> to vector<8x32xf32>
    %11 = arith.addf %6, %10 : vector<8x32xf32>
    %12 = arith.truncf %11 : vector<8x32xf32> to vector<8x32xbf16>
    %c0_7 = arith.constant 0 : index
    %c0_8 = arith.constant 0 : index
    %13 = vector.load %arg14[%c0_7, %c0_8] : memref<8x32xbf16, #tpu.memory_space<vmem>>, vector<8x32xbf16>
    %c0_9 = arith.constant 0 : index
    %c0_10 = arith.constant 0 : index
    %14 = vector.load %arg15[%c0_9, %c0_10] : memref<8x8xbf16, #tpu.memory_space<vmem>>, vector<8x8xbf16>
    %cst_11 = arith.constant 0.000000e+00 : f32
    %15 = vector.broadcast %cst_11 : f32 to vector<8x8xf32>
    %16 = vector.extract_strided_slice %12 {offsets = [0, 0], sizes = [8, 8], strides = [1, 1]} : vector<8x32xbf16> to vector<8x8xbf16>
    %17 = vector.extract_strided_slice %13 {offsets = [0, 0], sizes = [8, 8], strides = [1, 1]} : vector<8x32xbf16> to vector<8x8xbf16>
    %cst_12 = arith.constant dense<0.000000e+00> : vector<8x8xf32>
    %18 = tpu.matmul %16, %17, %cst_12 {dimension_numbers = #tpu.dot_dimension_numbers<[1], [1], [0], [0], [0, 0, 1, 0], [], []>} : vector<8x8xbf16>, vector<8x8xbf16>, vector<8x8xf32> -> vector<8x8xf32>
    %cst_13 = arith.constant 0.353553385 : f32
    %19 = vector.broadcast %cst_13 : f32 to vector<8x8xf32>
    %20 = arith.mulf %18, %19 : vector<8x8xf32>
    %cst_14 = arith.constant dense<0xFF800000> : vector<8xf32>
    %21 = vector.multi_reduction <maximumf>, %20, %cst_14 [1] : vector<8x8xf32> to vector<8xf32>
    %22 = vector.shape_cast %21 : vector<8xf32> to vector<8x1xf32>
    %23 = vector.broadcast %22 : vector<8x1xf32> to vector<8x8xf32>
    %24 = arith.subf %20, %23 : vector<8x8xf32>
    %25 = math.exp %24 : vector<8x8xf32>
    %cst_15 = arith.constant dense<0.000000e+00> : vector<8xf32>
    %26 = vector.multi_reduction <add>, %25, %cst_15 [1] : vector<8x8xf32> to vector<8xf32>
    %27 = vector.shape_cast %26 : vector<8xf32> to vector<8x1xf32>
    %28 = tpu.reciprocal %27 {approx = true} : vector<8x1xf32> -> vector<8x1xf32>
    %29 = vector.broadcast %28 : vector<8x1xf32> to vector<8x8xf32>
    %30 = arith.mulf %25, %29 : vector<8x8xf32>
    %31 = arith.truncf %30 : vector<8x8xf32> to vector<8x8xbf16>
    %c0_16 = arith.constant 0 : index
    %c0_17 = arith.constant 0 : index
    %c0_18 = arith.constant 0 : index
    %32 = vector.load %arg13[%c0_16, %c0_17, %c0_18] : memref<1x8x32xbf16, #tpu.memory_space<vmem>>, vector<1x8x8xbf16>
    %33 = vector.shape_cast %32 : vector<1x8x8xbf16> to vector<8x8xbf16>
    %34 = vector.shape_cast %31 : vector<8x8xbf16> to vector<1x8x8xbf16>
    tpu.vector_store %arg13[%c0_16, %c0_17, %c0_18], %34 {strides = array<i32>} : memref<1x8x32xbf16, #tpu.memory_space<vmem>>, vector<1x8x8xbf16>,
    %35 = arith.addf %15, %30 : vector<8x8xf32>
    %36 = vector.extract_strided_slice %12 {offsets = [0, 8], sizes = [8, 8], strides = [1, 1]} : vector<8x32xbf16> to vector<8x8xbf16>
    %37 = vector.extract_strided_slice %13 {offsets = [0, 8], sizes = [8, 8], strides = [1, 1]} : vector<8x32xbf16> to vector<8x8xbf16>
    %cst_19 = arith.constant dense<0.000000e+00> : vector<8x8xf32>
    %38 = tpu.matmul %36, %37, %cst_19 {dimension_numbers = #tpu.dot_dimension_numbers<[1], [1], [0], [0], [0, 0, 1, 0], [], []>} : vector<8x8xbf16>, vector<8x8xbf16>, vector<8x8xf32> -> vector<8x8xf32>
    %cst_20 = arith.constant 0.353553385 : f32
    %39 = vector.broadcast %cst_20 : f32 to vector<8x8xf32>
    %40 = arith.mulf %38, %39 : vector<8x8xf32>
    %cst_21 = arith.constant dense<0xFF800000> : vector<8xf32>
    %41 = vector.multi_reduction <maximumf>, %40, %cst_21 [1] : vector<8x8xf32> to vector<8xf32>
    %42 = vector.shape_cast %41 : vector<8xf32> to vector<8x1xf32>
    %43 = vector.broadcast %42 : vector<8x1xf32> to vector<8x8xf32>
    %44 = arith.subf %40, %43 : vector<8x8xf32>
    %45 = math.exp %44 : vector<8x8xf32>
    %cst_22 = arith.constant dense<0.000000e+00> : vector<8xf32>
    %46 = vector.multi_reduction <add>, %45, %cst_22 [1] : vector<8x8xf32> to vector<8xf32>
    %47 = vector.shape_cast %46 : vector<8xf32> to vector<8x1xf32>
    %48 = tpu.reciprocal %47 {approx = true} : vector<8x1xf32> -> vector<8x1xf32>
    %49 = vector.broadcast %48 : vector<8x1xf32> to vector<8x8xf32>
    %50 = arith.mulf %45, %49 : vector<8x8xf32>
    %51 = arith.truncf %50 : vector<8x8xf32> to vector<8x8xbf16>
    %c0_23 = arith.constant 0 : index
    %c0_24 = arith.constant 0 : index
    %c8 = arith.constant 8 : index
    %52 = vector.load %arg13[%c0_23, %c0_24, %c8] : memref<1x8x32xbf16, #tpu.memory_space<vmem>>, vector<1x8x8xbf16>
    %53 = vector.shape_cast %52 : vector<1x8x8xbf16> to vector<8x8xbf16>
    %54 = vector.shape_cast %51 : vector<8x8xbf16> to vector<1x8x8xbf16>
    tpu.vector_store %arg13[%c0_23, %c0_24, %c8], %54 {strides = array<i32>} : memref<1x8x32xbf16, #tpu.memory_space<vmem>>, vector<1x8x8xbf16>,
    %55 = arith.addf %35, %50 : vector<8x8xf32>
    %56 = vector.extract_strided_slice %12 {offsets = [0, 16], sizes = [8, 8], strides = [1, 1]} : vector<8x32xbf16> to vector<8x8xbf16>
    %57 = vector.extract_strided_slice %13 {offsets = [0, 16], sizes = [8, 8], strides = [1, 1]} : vector<8x32xbf16> to vector<8x8xbf16>
    %cst_25 = arith.constant dense<0.000000e+00> : vector<8x8xf32>
    %58 = tpu.matmul %56, %57, %cst_25 {dimension_numbers = #tpu.dot_dimension_numbers<[1], [1], [0], [0], [0, 0, 1, 0], [], []>} : vector<8x8xbf16>, vector<8x8xbf16>, vector<8x8xf32> -> vector<8x8xf32>
    %cst_26 = arith.constant 0.353553385 : f32
    %59 = vector.broadcast %cst_26 : f32 to vector<8x8xf32>
    %60 = arith.mulf %58, %59 : vector<8x8xf32>
    %cst_27 = arith.constant dense<0xFF800000> : vector<8xf32>
    %61 = vector.multi_reduction <maximumf>, %60, %cst_27 [1] : vector<8x8xf32> to vector<8xf32>
    %62 = vector.shape_cast %61 : vector<8xf32> to vector<8x1xf32>
    %63 = vector.broadcast %62 : vector<8x1xf32> to vector<8x8xf32>
    %64 = arith.subf %60, %63 : vector<8x8xf32>
    %65 = math.exp %64 : vector<8x8xf32>
    %cst_28 = arith.constant dense<0.000000e+00> : vector<8xf32>
    %66 = vector.multi_reduction <add>, %65, %cst_28 [1] : vector<8x8xf32> to vector<8xf32>
    %67 = vector.shape_cast %66 : vector<8xf32> to vector<8x1xf32>
    %68 = tpu.reciprocal %67 {approx = true} : vector<8x1xf32> -> vector<8x1xf32>
    %69 = vector.broadcast %68 : vector<8x1xf32> to vector<8x8xf32>
    %70 = arith.mulf %65, %69 : vector<8x8xf32>
    %71 = arith.truncf %70 : vector<8x8xf32> to vector<8x8xbf16>
    %c0_29 = arith.constant 0 : index
    %c0_30 = arith.constant 0 : index
    %c16 = arith.constant 16 : index
    %72 = vector.load %arg13[%c0_29, %c0_30, %c16] : memref<1x8x32xbf16, #tpu.memory_space<vmem>>, vector<1x8x8xbf16>
    %73 = vector.shape_cast %72 : vector<1x8x8xbf16> to vector<8x8xbf16>
    %74 = vector.shape_cast %71 : vector<8x8xbf16> to vector<1x8x8xbf16>
    tpu.vector_store %arg13[%c0_29, %c0_30, %c16], %74 {strides = array<i32>} : memref<1x8x32xbf16, #tpu.memory_space<vmem>>, vector<1x8x8xbf16>,
    %75 = arith.addf %55, %70 : vector<8x8xf32>
    %76 = vector.extract_strided_slice %12 {offsets = [0, 24], sizes = [8, 8], strides = [1, 1]} : vector<8x32xbf16> to vector<8x8xbf16>
    %77 = vector.extract_strided_slice %13 {offsets = [0, 24], sizes = [8, 8], strides = [1, 1]} : vector<8x32xbf16> to vector<8x8xbf16>
    %cst_31 = arith.constant dense<0.000000e+00> : vector<8x8xf32>
    %78 = tpu.matmul %76, %77, %cst_31 {dimension_numbers = #tpu.dot_dimension_numbers<[1], [1], [0], [0], [0, 0, 1, 0], [], []>} : vector<8x8xbf16>, vector<8x8xbf16>, vector<8x8xf32> -> vector<8x8xf32>
    %cst_32 = arith.constant 0.353553385 : f32
    %79 = vector.broadcast %cst_32 : f32 to vector<8x8xf32>
    %80 = arith.mulf %78, %79 : vector<8x8xf32>
    %cst_33 = arith.constant dense<0xFF800000> : vector<8xf32>
    %81 = vector.multi_reduction <maximumf>, %80, %cst_33 [1] : vector<8x8xf32> to vector<8xf32>
    %82 = vector.shape_cast %81 : vector<8xf32> to vector<8x1xf32>
    %83 = vector.broadcast %82 : vector<8x1xf32> to vector<8x8xf32>
    %84 = arith.subf %80, %83 : vector<8x8xf32>
    %85 = math.exp %84 : vector<8x8xf32>
    %cst_34 = arith.constant dense<0.000000e+00> : vector<8xf32>
    %86 = vector.multi_reduction <add>, %85, %cst_34 [1] : vector<8x8xf32> to vector<8xf32>
    %87 = vector.shape_cast %86 : vector<8xf32> to vector<8x1xf32>
    %88 = tpu.reciprocal %87 {approx = true} : vector<8x1xf32> -> vector<8x1xf32>
    %89 = vector.broadcast %88 : vector<8x1xf32> to vector<8x8xf32>
    %90 = arith.mulf %85, %89 : vector<8x8xf32>
    %91 = arith.truncf %90 : vector<8x8xf32> to vector<8x8xbf16>
    %c0_35 = arith.constant 0 : index
    %c0_36 = arith.constant 0 : index
    %c24 = arith.constant 24 : index
    %92 = vector.load %arg13[%c0_35, %c0_36, %c24] : memref<1x8x32xbf16, #tpu.memory_space<vmem>>, vector<1x8x8xbf16>
    %93 = vector.shape_cast %92 : vector<1x8x8xbf16> to vector<8x8xbf16>
    %94 = vector.shape_cast %91 : vector<8x8xbf16> to vector<1x8x8xbf16>
    tpu.vector_store %arg13[%c0_35, %c0_36, %c24], %94 {strides = array<i32>} : memref<1x8x32xbf16, #tpu.memory_space<vmem>>, vector<1x8x8xbf16>,
    %95 = arith.addf %75, %90 : vector<8x8xf32>
    %cst_37 = arith.constant 2.500000e-01 : f32
    %96 = vector.broadcast %cst_37 : f32 to vector<8x8xf32>
    %97 = arith.mulf %95, %96 : vector<8x8xf32>
    %98 = arith.truncf %97 : vector<8x8xf32> to vector<8x8xbf16>
    %cst_38 = arith.constant dense<0.000000e+00> : vector<8x8xf32>
    %99 = tpu.matmul %98, %14, %cst_38 {dimension_numbers = #tpu.dot_dimension_numbers<[1], [0], [0], [1], [0, 0, 1, 1], [], []>} : vector<8x8xbf16>, vector<8x8xbf16>, vector<8x8xf32> -> vector<8x8xf32>
    %100 = arith.truncf %99 : vector<8x8xf32> to vector<8x8xbf16>
    %c0_39 = arith.constant 0 : index
    %c0_40 = arith.constant 0 : index
    %101 = vector.load %arg11[%c0_39, %c0_40] : memref<8x32xbf16, #tpu.memory_space<vmem>>, vector<8x32xbf16>
    %cst_41 = arith.constant dense<0.000000e+00> : vector<8x32xf32>
    %102 = tpu.matmul %100, %101, %cst_41 {dimension_numbers = #tpu.dot_dimension_numbers<[1], [0], [0], [1], [0, 0, 1, 1], [], []>} : vector<8x8xbf16>, vector<8x32xbf16>, vector<8x32xf32> -> vector<8x32xf32>
    %c0_42 = arith.constant 0 : index
    %c0_43 = arith.constant 0 : index
    %c0_44 = arith.constant 0 : index
    %103 = vector.load %arg12[%c0_42, %c0_43, %c0_44] : memref<1x8x32xf32, #tpu.memory_space<vmem>>, vector<1x8x32xf32>
    %104 = vector.shape_cast %103 : vector<1x8x32xf32> to vector<8x32xf32>
    %105 = vector.shape_cast %102 : vector<8x32xf32> to vector<1x8x32xf32>
    tpu.vector_store %arg12[%c0_42, %c0_43, %c0_44], %105 {strides = array<i32>} : memref<1x8x32xf32, #tpu.memory_space<vmem>>, vector<1x8x32xf32>,
    return
  }
  func.func @transform_0(%arg0: i32, %arg1: i32) -> (i32, i32, i32) {
    %c0_i32 = arith.constant 0 : i32
    %c0_i32_0 = arith.constant 0 : i32
    return %arg0, %arg1, %c0_i32 : i32, i32, i32
  }
  func.func @transform_1(%arg0: i32, %arg1: i32) -> (i32, i32, i32) {
    %c0_i32 = arith.constant 0 : i32
    %c0_i32_0 = arith.constant 0 : i32
    %c0_i32_1 = arith.constant 0 : i32
    return %arg0, %c0_i32, %c0_i32_0 : i32, i32, i32
  }
  func.func @transform_2(%arg0: i32, %arg1: i32) -> (i32, i32, i32) {
    %c0_i32 = arith.constant 0 : i32
    %c0_i32_0 = arith.constant 0 : i32
    %c0_i32_1 = arith.constant 0 : i32
    return %arg0, %c0_i32, %c0_i32_0 : i32, i32, i32
  }
  func.func @transform_3(%arg0: i32, %arg1: i32) -> (i32, i32) {
    %c0_i32 = arith.constant 0 : i32
    %c0_i32_0 = arith.constant 0 : i32
    %c0_i32_1 = arith.constant 0 : i32
    return %c0_i32, %c0_i32_0 : i32, i32
  }
  func.func @transform_4(%arg0: i32, %arg1: i32) -> (i32, i32) {
    %c0_i32 = arith.constant 0 : i32
    %c0_i32_0 = arith.constant 0 : i32
    %c0_i32_1 = arith.constant 0 : i32
    return %c0_i32, %c0_i32_0 : i32, i32
  }
  func.func @transform_5(%arg0: i32, %arg1: i32) -> (i32, i32) {
    %c0_i32 = arith.constant 0 : i32
    %c0_i32_0 = arith.constant 0 : i32
    %c0_i32_1 = arith.constant 0 : i32
    return %c0_i32, %c0_i32_0 : i32, i32
  }
  func.func @transform_6(%arg0: i32, %arg1: i32) -> (i32, i32) {
    %c0_i32 = arith.constant 0 : i32
    %c0_i32_0 = arith.constant 0 : i32
    %c0_i32_1 = arith.constant 0 : i32
    return %c0_i32, %c0_i32_0 : i32, i32
  }
  func.func @transform_7(%arg0: i32, %arg1: i32) -> (i32, i32) {
    %c0_i32 = arith.constant 0 : i32
    %c0_i32_0 = arith.constant 0 : i32
    %c0_i32_1 = arith.constant 0 : i32
    return %c0_i32, %c0_i32_0 : i32, i32
  }
  func.func @transform_8(%arg0: i32, %arg1: i32) -> (i32, i32) {
    %c0_i32 = arith.constant 0 : i32
    %c0_i32_0 = arith.constant 0 : i32
    %c0_i32_1 = arith.constant 0 : i32
    return %c0_i32, %c0_i32_0 : i32, i32
  }
  func.func @transform_9(%arg0: i32, %arg1: i32) -> (i32, i32) {
    %c0_i32 = arith.constant 0 : i32
    %c0_i32_0 = arith.constant 0 : i32
    %c0_i32_1 = arith.constant 0 : i32
    return %c0_i32, %c0_i32_0 : i32, i32
  }
  func.func @transform_10(%arg0: i32, %arg1: i32) -> (i32, i32, i32) {
    %c0_i32 = arith.constant 0 : i32
    %c0_i32_0 = arith.constant 0 : i32
    return %arg0, %arg1, %c0_i32 : i32, i32, i32
  }
  func.func @transform_11(%arg0: i32, %arg1: i32) -> (i32, i32, i32) {
    %c0_i32 = arith.constant 0 : i32
    %c0_i32_0 = arith.constant 0 : i32
    return %arg0, %arg1, %c0_i32 : i32, i32, i32
  }
}

module attributes {stable_mosaic.version = 11 : i64} {
  func.func @_ima_kernel(%arg0: i32, %arg1: i32, %arg2: memref<1x8x32xbf16, #tpu.memory_space<vmem>>, %arg3: memref<1x8x32xbf16, #tpu.memory_space<vmem>>, %arg4: memref<1x8x32xbf16, #tpu.memory_space<vmem>>, %arg5: memref<32x32xbf16, #tpu.memory_space<vmem>>, %arg6: memref<1x32xf32, #tpu.memory_space<vmem>>, %arg7: memref<32x32xbf16, #tpu.memory_space<vmem>>, %arg8: memref<1x32xf32, #tpu.memory_space<vmem>>, %arg9: memref<32x8xbf16, #tpu.memory_space<vmem>>, %arg10: memref<1x8xf32, #tpu.memory_space<vmem>>, %arg11: memref<8x32xbf16, #tpu.memory_space<vmem>>, %arg12: memref<1x8x32xf32, #tpu.memory_space<vmem>>, %arg13: memref<1x8x32xbf16, #tpu.memory_space<vmem>>, %arg14: memref<8x32xbf16, #tpu.memory_space<vmem>>, %arg15: memref<8x8xbf16, #tpu.memory_space<vmem>>) attributes {dimension_semantics = [#tpu.dimension_semantics<parallel>, #tpu.dimension_semantics<arbitrary>], iteration_bounds = array<i64: 2, 1>, scalar_prefetch = 0 : i64, scratch_operands = 2 : i64, tpu.core_type = #tpu.core_type<tc>, window_params = [{transform_indices = @transform_0, window_bounds = array<i64: 1, 8, 32>}, {transform_indices = @transform_1, window_bounds = array<i64: 1, 8, 32>}, {transform_indices = @transform_2, window_bounds = array<i64: 1, 8, 32>}, {pipeline_mode = #tpu.pipeline_mode<synchronous>, transform_indices = @transform_3, window_bounds = array<i64: 32, 32>}, {pipeline_mode = #tpu.pipeline_mode<synchronous>, transform_indices = @transform_4, window_bounds = array<i64: 1, 32>}, {pipeline_mode = #tpu.pipeline_mode<synchronous>, transform_indices = @transform_5, window_bounds = array<i64: 32, 32>}, {pipeline_mode = #tpu.pipeline_mode<synchronous>, transform_indices = @transform_6, window_bounds = array<i64: 1, 32>}, {pipeline_mode = #tpu.pipeline_mode<synchronous>, transform_indices = @transform_7, window_bounds = array<i64: 32, 8>}, {pipeline_mode = #tpu.pipeline_mode<synchronous>, transform_indices = @transform_8, window_bounds = array<i64: 1, 8>}, {pipeline_mode = #tpu.pipeline_mode<synchronous>, transform_indices = @transform_9, window_bounds = array<i64: 8, 32>}, {transform_indices = @transform_10, window_bounds = array<i64: 1, 8, 32>}, {transform_indices = @transform_11, window_bounds = array<i64: 1, 8, 32>}]} {
    %c0_i32 = arith.constant 0 : i32
    %0 = arith.cmpi eq, %arg1, %c0_i32 : i32
    %1 = arith.extui %0 : i1 to i32
    %c0_i32_0 = arith.constant 0 : i32
    %2 = arith.cmpi ne, %1, %c0_i32_0 : i32
    scf.if %2 {
      %c0_45 = arith.constant 0 : index
      %c0_46 = arith.constant 0 : index
      %c0_47 = arith.constant 0 : index
      %106 = vector.load %arg3[%c0_45, %c0_46, %c0_47] : memref<1x8x32xbf16, #tpu.memory_space<vmem>>, vector<1x8x32xbf16>
      %107 = vector.shape_cast %106 : vector<1x8x32xbf16> to vector<8x32xbf16>
      %c0_48 = arith.constant 0 : index
      %c0_49 = arith.constant 0 : index
      %c0_50 = arith.constant 0 : index
      %108 = vector.load %arg4[%c0_48, %c0_49, %c0_50] : memref<1x8x32xbf16, #tpu.memory_space<vmem>>, vector<1x8x32xbf16>
      %109 = vector.shape_cast %108 : vector<1x8x32xbf16> to vector<8x32xbf16>
      %c0_51 = arith.constant 0 : index
      %c0_52 = arith.constant 0 : index
      %110 = vector.load %arg7[%c0_51, %c0_52] : memref<32x32xbf16, #tpu.memory_space<vmem>>, vector<32x32xbf16>
      %cst_53 = arith.constant dense<0.000000e+00> : vector<8x32xf32>
      %111 = tpu.matmul %107, %110, %cst_53 {dimension_numbers = #tpu.dot_dimension_numbers<[1], [0], [0], [1], [0, 0, 1, 1], [], []>} : vector<8x32xbf16>, vector<32x32xbf16>, vector<8x32xf32> -> vector<8x32xf32>
      %c0_54 = arith.constant 0 : index
      %c0_55 = arith.constant 0 : index
      %112 = vector.load %arg8[%c0_54, %c0_55] : memref<1x32xf32, #tpu.memory_space<vmem>>, vector<1x32xf32>
      %113 = vector.shape_cast %112 : vector<1x32xf32> to vector<32xf32>
      %114 = vector.shape_cast %113 : vector<32xf32> to vector<1x32xf32>
      %115 = vector.broadcast %114 : vector<1x32xf32> to vector<8x32xf32>
      %116 = arith.addf %111, %115 : vector<8x32xf32>
      %c0_56 = arith.constant 0 : index
      %c0_57 = arith.constant 0 : index
      %117 = vector.load %arg9[%c0_56, %c0_57] : memref<32x8xbf16, #tpu.memory_space<vmem>>, vector<32x8xbf16>
      %cst_58 = arith.constant dense<0.000000e+00> : vector<8x8xf32>
      %118 = tpu.matmul %109, %117, %cst_58 {dimension_numbers = #tpu.dot_dimension_numbers<[1], [0], [0], [1], [0, 0, 1, 1], [], []>} : vector<8x32xbf16>, vector<32x8xbf16>, vector<8x8xf32> -> vector<8x8xf32>
      %c0_59 = arith.constant 0 : index
      %c0_60 = arith.constant 0 : index
      %119 = vector.load %arg10[%c0_59, %c0_60] : memref<1x8xf32, #tpu.memory_space<vmem>>, vector<1x8xf32>
      %120 = vector.shape_cast %119 : vector<1x8xf32> to vector<8xf32>
      %121 = vector.shape_cast %120 : vector<8xf32> to vector<1x8xf32>
      %122 = vector.broadcast %121 : vector<1x8xf32> to vector<8x8xf32>
      %123 = arith.addf %118, %122 : vector<8x8xf32>
      %124 = arith.truncf %116 : vector<8x32xf32> to vector<8x32xbf16>
      %c0_61 = arith.constant 0 : index
      %c0_62 = arith.constant 0 : index
      %125 = vector.load %arg14[%c0_61, %c0_62] : memref<8x32xbf16, #tpu.memory_space<vmem>>, vector<8x32xbf16>
      tpu.vector_store %arg14[%c0_61, %c0_62], %124 {strides = array<i32>} : memref<8x32xbf16, #tpu.memory_space<vmem>>, vector<8x32xbf16>,
      %126 = arith.truncf %123 : vector<8x8xf32> to vector<8x8xbf16>
      %c0_63 = arith.constant 0 : index
      %c0_64 = arith.constant 0 : index
      %127 = vector.load %arg15[%c0_63, %c0_64] : memref<8x8xbf16, #tpu.memory_space<vmem>>, vector<8x8xbf16>
      tpu.vector_store %arg15[%c0_63, %c0_64], %126 {strides = array<i32>} : memref<8x8xbf16, #tpu.memory_space<vmem>>, vector<8x8xbf16>,
    } else {
    }
    %c0 = arith.constant 0 : index
    %c0_1 = arith.constant 0 : index
    %c0_2 = arith.constant 0 : index
    %3 = vector.load %arg2[%c0, %c0_1, %c0_2] : memref<1x8x32xbf16, #tpu.memory_space<vmem>>, vector<1x8x32xbf16>
    %4 = vector.shape_cast %3 : vector<1x8x32xbf16> to vector<8x32xbf16>
    %c0_3 = arith.constant 0 : index
    %c0_4 = arith.constant 0 : index
    %5 = vector.load %arg5[%c0_3, %c0_4] : memref<32x32xbf16, #tpu.memory_space<vmem>>, vector<32x32xbf16>
    %cst = arith.constant dense<0.000000e+00> : vector<8x32xf32>
    %6 = tpu.matmul %4, %5, %cst {dimension_numbers = #tpu.dot_dimension_numbers<[1], [0], [0], [1], [0, 0, 1, 1], [], []>} : vector<8x32xbf16>, vector<32x32xbf16>, vector<8x32xf32> -> vector<8x32xf32>
    %c0_5 = arith.constant 0 : index
    %c0_6 = arith.constant 0 : index
    %7 = vector.load %arg6[%c0_5, %c0_6] : memref<1x32xf32, #tpu.memory_space<vmem>>, vector<1x32xf32>
    %8 = vector.shape_cast %7 : vector<1x32xf32> to vector<32xf32>
    %9 = vector.shape_cast %8 : vector<32xf32> to vector<1x32xf32>
    %10 = vector.broadcast %9 : vector<1x32xf32> to vector<8x32xf32>
    %11 = arith.addf %6, %10 : vector<8x32xf32>
    %12 = arith.truncf %11 : vector<8x32xf32> to vector<8x32xbf16>
    %c0_7 = arith.constant 0 : index
    %c0_8 = arith.constant 0 : index
    %13 = vector.load %arg14[%c0_7, %c0_8] : memref<8x32xbf16, #tpu.memory_space<vmem>>, vector<8x32xbf16>
    %c0_9 = arith.constant 0 : index
    %c0_10 = arith.constant 0 : index
    %14 = vector.load %arg15[%c0_9, %c0_10] : memref<8x8xbf16, #tpu.memory_space<vmem>>, vector<8x8xbf16>
    %cst_11 = arith.constant 0.000000e+00 : f32
    %15 = vector.broadcast %cst_11 : f32 to vector<8x8xf32>
    %16 = vector.extract_strided_slice %12 {offsets = [0, 0], sizes = [8, 8], strides = [1, 1]} : vector<8x32xbf16> to vector<8x8xbf16>
    %17 = vector.extract_strided_slice %13 {offsets = [0, 0], sizes = [8, 8], strides = [1, 1]} : vector<8x32xbf16> to vector<8x8xbf16>
    %cst_12 = arith.constant dense<0.000000e+00> : vector<8x8xf32>
    %18 = tpu.matmul %16, %17, %cst_12 {dimension_numbers = #tpu.dot_dimension_numbers<[1], [1], [0], [0], [0, 0, 1, 0], [], []>} : vector<8x8xbf16>, vector<8x8xbf16>, vector<8x8xf32> -> vector<8x8xf32>
    %cst_13 = arith.constant 0.353553385 : f32
    %19 = vector.broadcast %cst_13 : f32 to vector<8x8xf32>
    %20 = arith.mulf %18, %19 : vector<8x8xf32>
    %cst_14 = arith.constant dense<0xFF800000> : vector<8xf32>
    %21 = vector.multi_reduction <maximumf>, %20, %cst_14 [1] : vector<8x8xf32> to vector<8xf32>
    %22 = vector.shape_cast %21 : vector<8xf32> to vector<8x1xf32>
    %23 = vector.broadcast %22 : vector<8x1xf32> to vector<8x8xf32>
    %24 = arith.subf %20, %23 : vector<8x8xf32>
    %25 = math.exp %24 : vector<8x8xf32>
    %cst_15 = arith.constant dense<0.000000e+00> : vector<8xf32>
    %26 = vector.multi_reduction <add>, %25, %cst_15 [1] : vector<8x8xf32> to vector<8xf32>
    %27 = vector.shape_cast %26 : vector<8xf32> to vector<8x1xf32>
    %28 = tpu.reciprocal %27 {approx = true} : vector<8x1xf32> -> vector<8x1xf32>
    %29 = vector.broadcast %28 : vector<8x1xf32> to vector<8x8xf32>
    %30 = arith.mulf %25, %29 : vector<8x8xf32>
    %31 = arith.truncf %30 : vector<8x8xf32> to vector<8x8xbf16>
    %c0_16 = arith.constant 0 : index
    %c0_17 = arith.constant 0 : index
    %c0_18 = arith.constant 0 : index
    %32 = vector.load %arg13[%c0_16, %c0_17, %c0_18] : memref<1x8x32xbf16, #tpu.memory_space<vmem>>, vector<1x8x8xbf16>
    %33 = vector.shape_cast %32 : vector<1x8x8xbf16> to vector<8x8xbf16>
    %34 = vector.shape_cast %31 : vector<8x8xbf16> to vector<1x8x8xbf16>
    tpu.vector_store %arg13[%c0_16, %c0_17, %c0_18], %34 {strides = array<i32>} : memref<1x8x32xbf16, #tpu.memory_space<vmem>>, vector<1x8x8xbf16>,
    %35 = arith.addf %15, %30 : vector<8x8xf32>
    %36 = vector.extract_strided_slice %12 {offsets = [0, 8], sizes = [8, 8], strides = [1, 1]} : vector<8x32xbf16> to vector<8x8xbf16>
    %37 = vector.extract_strided_slice %13 {offsets = [0, 8], sizes = [8, 8], strides = [1, 1]} : vector<8x32xbf16> to vector<8x8xbf16>
    %cst_19 = arith.constant dense<0.000000e+00> : vector<8x8xf32>
    %38 = tpu.matmul %36, %37, %cst_19 {dimension_numbers = #tpu.dot_dimension_numbers<[1], [1], [0], [0], [0, 0, 1, 0], [], []>} : vector<8x8xbf16>, vector<8x8xbf16>, vector<8x8xf32> -> vector<8x8xf32>
    %cst_20 = arith.constant 0.353553385 : f32
    %39 = vector.broadcast %cst_20 : f32 to vector<8x8xf32>
    %40 = arith.mulf %38, %39 : vector<8x8xf32>
    %cst_21 = arith.constant dense<0xFF800000> : vector<8xf32>
    %41 = vector.multi_reduction <maximumf>, %40, %cst_21 [1] : vector<8x8xf32> to vector<8xf32>
    %42 = vector.shape_cast %41 : vector<8xf32> to vector<8x1xf32>
    %43 = vector.broadcast %42 : vector<8x1xf32> to vector<8x8xf32>
    %44 = arith.subf %40, %43 : vector<8x8xf32>
    %45 = math.exp %44 : vector<8x8xf32>
    %cst_22 = arith.constant dense<0.000000e+00> : vector<8xf32>
    %46 = vector.multi_reduction <add>, %45, %cst_22 [1] : vector<8x8xf32> to vector<8xf32>
    %47 = vector.shape_cast %46 : vector<8xf32> to vector<8x1xf32>
    %48 = tpu.reciprocal %47 {approx = true} : vector<8x1xf32> -> vector<8x1xf32>
    %49 = vector.broadcast %48 : vector<8x1xf32> to vector<8x8xf32>
    %50 = arith.mulf %45, %49 : vector<8x8xf32>
    %51 = arith.truncf %50 : vector<8x8xf32> to vector<8x8xbf16>
    %c0_23 = arith.constant 0 : index
    %c0_24 = arith.constant 0 : index
    %c8 = arith.constant 8 : index
    %52 = vector.load %arg13[%c0_23, %c0_24, %c8] : memref<1x8x32xbf16, #tpu.memory_space<vmem>>, vector<1x8x8xbf16>
    %53 = vector.shape_cast %52 : vector<1x8x8xbf16> to vector<8x8xbf16>
    %54 = vector.shape_cast %51 : vector<8x8xbf16> to vector<1x8x8xbf16>
    tpu.vector_store %arg13[%c0_23, %c0_24, %c8], %54 {strides = array<i32>} : memref<1x8x32xbf16, #tpu.memory_space<vmem>>, vector<1x8x8xbf16>,
    %55 = arith.addf %35, %50 : vector<8x8xf32>
    %56 = vector.extract_strided_slice %12 {offsets = [0, 16], sizes = [8, 8], strides = [1, 1]} : vector<8x32xbf16> to vector<8x8xbf16>
    %57 = vector.extract_strided_slice %13 {offsets = [0, 16], sizes = [8, 8], strides = [1, 1]} : vector<8x32xbf16> to vector<8x8xbf16>
    %cst_25 = arith.constant dense<0.000000e+00> : vector<8x8xf32>
    %58 = tpu.matmul %56, %57, %cst_25 {dimension_numbers = #tpu.dot_dimension_numbers<[1], [1], [0], [0], [0, 0, 1, 0], [], []>} : vector<8x8xbf16>, vector<8x8xbf16>, vector<8x8xf32> -> vector<8x8xf32>
    %cst_26 = arith.constant 0.353553385 : f32
    %59 = vector.broadcast %cst_26 : f32 to vector<8x8xf32>
    %60 = arith.mulf %58, %59 : vector<8x8xf32>
    %cst_27 = arith.constant dense<0xFF800000> : vector<8xf32>
    %61 = vector.multi_reduction <maximumf>, %60, %cst_27 [1] : vector<8x8xf32> to vector<8xf32>
    %62 = vector.shape_cast %61 : vector<8xf32> to vector<8x1xf32>
    %63 = vector.broadcast %62 : vector<8x1xf32> to vector<8x8xf32>
    %64 = arith.subf %60, %63 : vector<8x8xf32>
    %65 = math.exp %64 : vector<8x8xf32>
    %cst_28 = arith.constant dense<0.000000e+00> : vector<8xf32>
    %66 = vector.multi_reduction <add>, %65, %cst_28 [1] : vector<8x8xf32> to vector<8xf32>
    %67 = vector.shape_cast %66 : vector<8xf32> to vector<8x1xf32>
    %68 = tpu.reciprocal %67 {approx = true} : vector<8x1xf32> -> vector<8x1xf32>
    %69 = vector.broadcast %68 : vector<8x1xf32> to vector<8x8xf32>
    %70 = arith.mulf %65, %69 : vector<8x8xf32>
    %71 = arith.truncf %70 : vector<8x8xf32> to vector<8x8xbf16>
    %c0_29 = arith.constant 0 : index
    %c0_30 = arith.constant 0 : index
    %c16 = arith.constant 16 : index
    %72 = vector.load %arg13[%c0_29, %c0_30, %c16] : memref<1x8x32xbf16, #tpu.memory_space<vmem>>, vector<1x8x8xbf16>
    %73 = vector.shape_cast %72 : vector<1x8x8xbf16> to vector<8x8xbf16>
    %74 = vector.shape_cast %71 : vector<8x8xbf16> to vector<1x8x8xbf16>
    tpu.vector_store %arg13[%c0_29, %c0_30, %c16], %74 {strides = array<i32>} : memref<1x8x32xbf16, #tpu.memory_space<vmem>>, vector<1x8x8xbf16>,
    %75 = arith.addf %55, %70 : vector<8x8xf32>
    %76 = vector.extract_strided_slice %12 {offsets = [0, 24], sizes = [8, 8], strides = [1, 1]} : vector<8x32xbf16> to vector<8x8xbf16>
    %77 = vector.extract_strided_slice %13 {offsets = [0, 24], sizes = [8, 8], strides = [1, 1]} : vector<8x32xbf16> to vector<8x8xbf16>
    %cst_31 = arith.constant dense<0.000000e+00> : vector<8x8xf32>
    %78 = tpu.matmul %76, %77, %cst_31 {dimension_numbers = #tpu.dot_dimension_numbers<[1], [1], [0], [0], [0, 0, 1, 0], [], []>} : vector<8x8xbf16>, vector<8x8xbf16>, vector<8x8xf32> -> vector<8x8xf32>
    %cst_32 = arith.constant 0.353553385 : f32
    %79 = vector.broadcast %cst_32 : f32 to vector<8x8xf32>
    %80 = arith.mulf %78, %79 : vector<8x8xf32>
    %cst_33 = arith.constant dense<0xFF800000> : vector<8xf32>
    %81 = vector.multi_reduction <maximumf>, %80, %cst_33 [1] : vector<8x8xf32> to vector<8xf32>
    %82 = vector.shape_cast %81 : vector<8xf32> to vector<8x1xf32>
    %83 = vector.broadcast %82 : vector<8x1xf32> to vector<8x8xf32>
    %84 = arith.subf %80, %83 : vector<8x8xf32>
    %85 = math.exp %84 : vector<8x8xf32>
    %cst_34 = arith.constant dense<0.000000e+00> : vector<8xf32>
    %86 = vector.multi_reduction <add>, %85, %cst_34 [1] : vector<8x8xf32> to vector<8xf32>
    %87 = vector.shape_cast %86 : vector<8xf32> to vector<8x1xf32>
    %88 = tpu.reciprocal %87 {approx = true} : vector<8x1xf32> -> vector<8x1xf32>
    %89 = vector.broadcast %88 : vector<8x1xf32> to vector<8x8xf32>
    %90 = arith.mulf %85, %89 : vector<8x8xf32>
    %91 = arith.truncf %90 : vector<8x8xf32> to vector<8x8xbf16>
    %c0_35 = arith.constant 0 : index
    %c0_36 = arith.constant 0 : index
    %c24 = arith.constant 24 : index
    %92 = vector.load %arg13[%c0_35, %c0_36, %c24] : memref<1x8x32xbf16, #tpu.memory_space<vmem>>, vector<1x8x8xbf16>
    %93 = vector.shape_cast %92 : vector<1x8x8xbf16> to vector<8x8xbf16>
    %94 = vector.shape_cast %91 : vector<8x8xbf16> to vector<1x8x8xbf16>
    tpu.vector_store %arg13[%c0_35, %c0_36, %c24], %94 {strides = array<i32>} : memref<1x8x32xbf16, #tpu.memory_space<vmem>>, vector<1x8x8xbf16>,
    %95 = arith.addf %75, %90 : vector<8x8xf32>
    %cst_37 = arith.constant 2.500000e-01 : f32
    %96 = vector.broadcast %cst_37 : f32 to vector<8x8xf32>
    %97 = arith.mulf %95, %96 : vector<8x8xf32>
    %98 = arith.truncf %97 : vector<8x8xf32> to vector<8x8xbf16>
    %cst_38 = arith.constant dense<0.000000e+00> : vector<8x8xf32>
    %99 = tpu.matmul %98, %14, %cst_38 {dimension_numbers = #tpu.dot_dimension_numbers<[1], [0], [0], [1], [0, 0, 1, 1], [], []>} : vector<8x8xbf16>, vector<8x8xbf16>, vector<8x8xf32> -> vector<8x8xf32>
    %100 = arith.truncf %99 : vector<8x8xf32> to vector<8x8xbf16>
    %c0_39 = arith.constant 0 : index
    %c0_40 = arith.constant 0 : index
    %101 = vector.load %arg11[%c0_39, %c0_40] : memref<8x32xbf16, #tpu.memory_space<vmem>>, vector<8x32xbf16>
    %cst_41 = arith.constant dense<0.000000e+00> : vector<8x32xf32>
    %102 = tpu.matmul %100, %101, %cst_41 {dimension_numbers = #tpu.dot_dimension_numbers<[1], [0], [0], [1], [0, 0, 1, 1], [], []>} : vector<8x8xbf16>, vector<8x32xbf16>, vector<8x32xf32> -> vector<8x32xf32>
    %c0_42 = arith.constant 0 : index
    %c0_43 = arith.constant 0 : index
    %c0_44 = arith.constant 0 : index
    %103 = vector.load %arg12[%c0_42, %c0_43, %c0_44] : memref<1x8x32xf32, #tpu.memory_space<vmem>>, vector<1x8x32xf32>
    %104 = vector.shape_cast %103 : vector<1x8x32xf32> to vector<8x32xf32>
    %105 = vector.shape_cast %102 : vector<8x32xf32> to vector<1x8x32xf32>
    tpu.vector_store %arg12[%c0_42, %c0_43, %c0_44], %105 {strides = array<i32>} : memref<1x8x32xf32, #tpu.memory_space<vmem>>, vector<1x8x32xf32>,
    return
  }
  func.func @transform_0(%arg0: i32, %arg1: i32) -> (i32, i32, i32) {
    %c0_i32 = arith.constant 0 : i32
    %c0_i32_0 = arith.constant 0 : i32
    return %arg0, %arg1, %c0_i32 : i32, i32, i32
  }
  func.func @transform_1(%arg0: i32, %arg1: i32) -> (i32, i32, i32) {
    %c0_i32 = arith.constant 0 : i32
    %c0_i32_0 = arith.constant 0 : i32
    %c0_i32_1 = arith.constant 0 : i32
    return %arg0, %c0_i32, %c0_i32_0 : i32, i32, i32
  }
  func.func @transform_2(%arg0: i32, %arg1: i32) -> (i32, i32, i32) {
    %c0_i32 = arith.constant 0 : i32
    %c0_i32_0 = arith.constant 0 : i32
    %c0_i32_1 = arith.constant 0 : i32
    return %arg0, %c0_i32, %c0_i32_0 : i32, i32, i32
  }
  func.func @transform_3(%arg0: i32, %arg1: i32) -> (i32, i32) {
    %c0_i32 = arith.constant 0 : i32
    %c0_i32_0 = arith.constant 0 : i32
    %c0_i32_1 = arith.constant 0 : i32
    return %c0_i32, %c0_i32_0 : i32, i32
  }
  func.func @transform_4(%arg0: i32, %arg1: i32) -> (i32, i32) {
    %c0_i32 = arith.constant 0 : i32
    %c0_i32_0 = arith.constant 0 : i32
    %c0_i32_1 = arith.constant 0 : i32
    return %c0_i32, %c0_i32_0 : i32, i32
  }
  func.func @transform_5(%arg0: i32, %arg1: i32) -> (i32, i32) {
    %c0_i32 = arith.constant 0 : i32
    %c0_i32_0 = arith.constant 0 : i32
    %c0_i32_1 = arith.constant 0 : i32
    return %c0_i32, %c0_i32_0 : i32, i32
  }
  func.func @transform_6(%arg0: i32, %arg1: i32) -> (i32, i32) {
    %c0_i32 = arith.constant 0 : i32
    %c0_i32_0 = arith.constant 0 : i32
    %c0_i32_1 = arith.constant 0 : i32
    return %c0_i32, %c0_i32_0 : i32, i32
  }
  func.func @transform_7(%arg0: i32, %arg1: i32) -> (i32, i32) {
    %c0_i32 = arith.constant 0 : i32
    %c0_i32_0 = arith.constant 0 : i32
    %c0_i32_1 = arith.constant 0 : i32
    return %c0_i32, %c0_i32_0 : i32, i32
  }
  func.func @transform_8(%arg0: i32, %arg1: i32) -> (i32, i32) {
    %c0_i32 = arith.constant 0 : i32
    %c0_i32_0 = arith.constant 0 : i32
    %c0_i32_1 = arith.constant 0 : i32
    return %c0_i32, %c0_i32_0 : i32, i32
  }
  func.func @transform_9(%arg0: i32, %arg1: i32) -> (i32, i32) {
    %c0_i32 = arith.constant 0 : i32
    %c0_i32_0 = arith.constant 0 : i32
    %c0_i32_1 = arith.constant 0 : i32
    return %c0_i32, %c0_i32_0 : i32, i32
  }
  func.func @transform_10(%arg0: i32, %arg1: i32) -> (i32, i32, i32) {
    %c0_i32 = arith.constant 0 : i32
    %c0_i32_0 = arith.constant 0 : i32
    return %arg0, %arg1, %c0_i32 : i32, i32, i32
  }
  func.func @transform_11(%arg0: i32, %arg1: i32) -> (i32, i32, i32) {
    %c0_i32 = arith.constant 0 : i32
    %c0_i32_0 = arith.constant 0 : i32
    return %arg0, %arg1, %c0_i32 : i32, i32, i32
  }
}

</mosaic_0001>

<llo_original>
// kernel: tpu_custom_call.1
$region0: #{tpu_custom_call.1}
  #allocation0 [shape = 'u32[]', space=smem, size = 0x4, offset = 0x4, fixed_abs, tag = 'smem constant byte address 0x4 - core index']
  #allocation1 [shape = 'u32[144,128]{1,0:T(1,128)}', space=vmem, size = 0x12000, scoped, tag = 'internal scratch']
  #allocation2 [shape = 'bf16[8,32]{1,0:T(8,128)(2,1)}', space=vmem, size = 0x800, scoped, tag = 'scratch operand']
  #allocation3 [shape = 'bf16[8,8]{1,0:T(8,128)(2,1)}', space=vmem, size = 0x800, scoped, tag = 'scratch operand']
  %s0 = inlined_call_operand.vmem [shape: bf16[2,8,32], index: 0, kind: input, shape index: {}]
  %s1 = inlined_call_operand.hbm [shape: bf16[2,8,32], index: 1, kind: input, shape index: {}]
  %s2 = inlined_call_operand.hbm [shape: bf16[2,8,32], index: 2, kind: input, shape index: {}]
  %s3 = inlined_call_operand.vmem [shape: bf16[32,32], index: 3, kind: input, shape index: {}]
  %s4 = inlined_call_operand.hbm [shape: f32[1,32], index: 4, kind: input, shape index: {}]
  %s5 = inlined_call_operand.hbm [shape: bf16[32,32], index: 5, kind: input, shape index: {}]
  %s6 = inlined_call_operand.hbm [shape: f32[1,32], index: 6, kind: input, shape index: {}]
  %s7 = inlined_call_operand.vmem [shape: bf16[32,8], index: 7, kind: input, shape index: {}]
  %s8 = inlined_call_operand.vmem [shape: f32[1,8], index: 8, kind: input, shape index: {}]
  %s9 = inlined_call_operand.vmem [shape: bf16[8,32], index: 9, kind: input, shape index: {}]
  %s10 = inlined_call_operand.hbm [shape: f32[2,8,32], index: 10, kind: output, shape index: {0}]
  %s11 = inlined_call_operand.hbm [shape: bf16[2,8,32], index: 11, kind: output, shape index: {1}]
  %12 = xla_tuple %s10, %s11
  %s13 = sld [smem:[#allocation0]]
  $region105: #{tpu_custom_call.1} parent=0
    _
  %s15 = ssub.s32 1, %s13
  %s16 = scalar_select 0, %s15, %s13
  $region1: #{tpu_custom_call.1} parent=0
    #allocation4 [shape = 'u8[2048]{0}', space=vmem, size = 0x800, scoped, tag = 'input window, operand 1, single buffered']
    #allocation5 [shape = 's32[2]{0}', space=sflag, size = 0x8, scoped, tag = 'scoped memory for tpu_custom_call.1']
    #allocation6 [shape = 's32[2]{0}', space=sflag, size = 0x8, scoped, tag = 'scoped memory for tpu_custom_call.1']
    #allocation7 [shape = 'u8[2048]{0}', space=vmem, size = 0x800, scoped, tag = 'input window, operand 2, single buffered']
    #allocation8 [shape = 's32[1]{0}', space=sflag, size = 0x4, scoped, tag = 'scoped memory for tpu_custom_call.1']
    #allocation9 [shape = 'u8[512]{0}', space=vmem, size = 0x400, scoped, tag = 'input window, operand 4, single buffered']
    #allocation10 [shape = 'u8[8192]{0}', space=vmem, size = 0x2000, scoped, tag = 'input window, operand 5, single buffered']
    #allocation11 [shape = 's32[1]{0}', space=sflag, size = 0x4, scoped, tag = 'scoped memory for tpu_custom_call.1']
    #allocation12 [shape = 'u8[512]{0}', space=vmem, size = 0x400, scoped, tag = 'input window, operand 6, single buffered']
    #allocation13 [shape = 'u8[8192]{0}', space=vmem, size = 0x2000, scoped, tag = 'output window, operand 0']
    #allocation14 [shape = 'u8[4096]{0}', space=vmem, size = 0x1000, scoped, tag = 'output window, operand 1']
    #allocation15 [shape = 's32[2]{0}', space=sflag, size = 0x8, scoped, tag = 'scoped memory for tpu_custom_call.1']
    %17 = vsyncpa [#allocation5], 0
    %18 = vsyncpa [#allocation8], 0
    %19 = vsyncpa [#allocation11], 0
    %20 = vsyncpa [#allocation6], 0
    %s21 = scalar_lea.sflag [#allocation6], 1
    %22 = vsyncpa %s21, 0
    %23 = vsyncpa [#allocation15], 0
    %s24 = scalar_lea.sflag [#allocation15], 1
    %25 = vsyncpa %s24, 0
    loop: start=0, step=1, limit=4
    $region2: #{tpu_custom_call.1} parent=1 // loop_pre_header
      _
    $region3: #{tpu_custom_call.1} parent=1 // loop_header
      %s27 = sphi 0, %s31
      %p28 = scmp.ge.s32.totalorder %s27, 4
      %s34 = sphi 0, %s46
      %s35 = sphi 0, %s42
      %s36 = sphi 0, %s34
      %s37 = sphi 0, %s35
      %s38 = sphi 0, %s36
      %s39 = sphi 0, %s37
      %s51 = sphi 0, %s53
      %s54 = sphi 0, %s51
      %s55 = sphi 0, %s54
      %s71 = sphi 0, %s55
      %s77 = sphi 0, %s79
      %s80 = sphi 0, %s77
      %s81 = sphi 0, %s80
      %s97 = sphi 0, %s81
      %s103 = sphi 0, %s105
      %s106 = sphi 0, %s103
      %s107 = sphi 0, %s106
      %s123 = sphi 0, %s107
      %s127 = sphi 0, %s127
      %s129 = sphi 0, %s127
      %s130 = sphi 0, %s129
      %s144 = sphi 0, %s130
      %s148 = sphi 0, %s148
      %s150 = sphi 0, %s148
      %s151 = sphi 0, %s150
      %s165 = sphi 0, %s151
      %s169 = sphi 0, %s169
      %s171 = sphi 0, %s169
      %s172 = sphi 0, %s171
      %s186 = sphi 0, %s172
      %s190 = sphi 0, %s190
      %s192 = sphi 0, %s190
      %s193 = sphi 0, %s192
      %s207 = sphi 0, %s193
      %s211 = sphi 0, %s211
      %s213 = sphi 0, %s211
      %s214 = sphi 0, %s213
      %s228 = sphi 0, %s214
      %s232 = sphi 0, %s232
      %s234 = sphi 0, %s232
      %s235 = sphi 0, %s234
      %s249 = sphi 0, %s235
      %s253 = sphi 0, %s253
      %s255 = sphi 0, %s253
      %s256 = sphi 0, %s255
      %s270 = sphi 0, %s256
      %s278 = sphi 0, %s280
      %s281 = sphi 0, %s278
      %s282 = sphi 0, %s281
      %s298 = sphi 0, %s282
      %s306 = sphi 0, %s308
      %s309 = sphi 0, %s306
      %s310 = sphi 0, %s309
      %s326 = sphi 0, %s310
    $region4: #{tpu_custom_call.1} parent=1 // loop_header_branch
      %30 = sbr.rel (%p28) target = $region8
    $region5: #{tpu_custom_call.1} parent=1 // loop_body
      %s32 = ssub.s32 %s27, 1
      %s33 = ssub.s32 %s27, 2
      %s40 = sadd.s32 1, %s35
      %p41 = scmp.ge.s32.totalorder %s40, 1
      %s42 = scalar_select %p41, 0, %s40
      %s43 = sadd.s32 1, %s34
      %s44 = scalar_select %p41, %s43, %s34
      %p45 = scmp.ge.s32.totalorder %s44, 2
      %s46 = scalar_select %p45, 0, %s44
      %s47 = ssub.s32 %s34, %s46
      %s48 = ssub.s32 %s35, %s42
      %s49 = sor.u32 %s47, %s48
      %p50 = scmp.eq.s32.totalorder %s49, 0
      %s52 = sadd.s32 %s51, 1
      %s53 = scalar_select %p50, %s51, %s52
      %p56 = pneg %p50
      %p57 = scmp.eq.s32.totalorder %s27, 1
      %p58 = por %p56, %p57
      %p59 = scmp.ne.s32.totalorder %s51, %s54
      %p60 = scmp.eq.s32.totalorder %s27, 0
      %p61 = por %p59, %p60
      %p62 = scmp.ne.s32.totalorder %s51, %s54
      %p63 = scmp.eq.s32.totalorder %s32, 1
      %p64 = por %p62, %p63
      %p65 = scmp.ne.s32.totalorder %s54, %s55
      %p66 = scmp.eq.s32.totalorder %s32, 0
      %p67 = por %p65, %p66
      %p68 = scmp.ne.s32.totalorder %s54, %s55
      %p69 = scmp.eq.s32.totalorder %s33, 1
      %p70 = por %p68, %p69
      %p72 = scmp.ne.s32.totalorder %s55, %s71
      %p73 = scmp.eq.s32.totalorder %s33, 0
      %p74 = por %p72, %p73
      %s75 = ssub.s32 %s34, %s46
      %p76 = scmp.eq.s32.totalorder %s75, 0
      %s78 = sadd.s32 %s77, 1
      %s79 = scalar_select %p76, %s77, %s78
      %p82 = pneg %p76
      %p83 = scmp.eq.s32.totalorder %s27, 1
      %p84 = por %p82, %p83
      %p85 = scmp.ne.s32.totalorder %s77, %s80
      %p86 = scmp.eq.s32.totalorder %s27, 0
      %p87 = por %p85, %p86
      %p88 = scmp.ne.s32.totalorder %s77, %s80
      %p89 = scmp.eq.s32.totalorder %s32, 1
      %p90 = por %p88, %p89
      %p91 = scmp.ne.s32.totalorder %s80, %s81
      %p92 = scmp.eq.s32.totalorder %s32, 0
      %p93 = por %p91, %p92
      %p94 = scmp.ne.s32.totalorder %s80, %s81
      %p95 = scmp.eq.s32.totalorder %s33, 1
      %p96 = por %p94, %p95
      %p98 = scmp.ne.s32.totalorder %s81, %s97
      %p99 = scmp.eq.s32.totalorder %s33, 0
      %p100 = por %p98, %p99
      %s101 = ssub.s32 %s34, %s46
      %p102 = scmp.eq.s32.totalorder %s101, 0
      %s104 = sadd.s32 %s103, 1
      %s105 = scalar_select %p102, %s103, %s104
      %p108 = pneg %p102
      %p109 = scmp.eq.s32.totalorder %s27, 1
      %p110 = por %p108, %p109
      %p111 = scmp.ne.s32.totalorder %s103, %s106
      %p112 = scmp.eq.s32.totalorder %s27, 0
      %p113 = por %p111, %p112
      %p114 = scmp.ne.s32.totalorder %s103, %s106
      %p115 = scmp.eq.s32.totalorder %s32, 1
      %p116 = por %p114, %p115
      %p117 = scmp.ne.s32.totalorder %s106, %s107
      %p118 = scmp.eq.s32.totalorder %s32, 0
      %p119 = por %p117, %p118
      %p120 = scmp.ne.s32.totalorder %s106, %s107
      %p121 = scmp.eq.s32.totalorder %s33, 1
      %p122 = por %p120, %p121
      %p124 = scmp.ne.s32.totalorder %s107, %s123
      %p125 = scmp.eq.s32.totalorder %s33, 0
      %p126 = por %p124, %p125
      %s128 = sadd.s32 %s127, 1
      %p131 = scmp.eq.s32.totalorder %s27, 1
      %p132 = scmp.ne.s32.totalorder %s127, %s129
      %p133 = scmp.eq.s32.totalorder %s27, 0
      %p134 = por %p132, %p133
      %p135 = scmp.ne.s32.totalorder %s127, %s129
      %p136 = scmp.eq.s32.totalorder %s32, 1
      %p137 = por %p135, %p136
      %p138 = scmp.ne.s32.totalorder %s129, %s130
      %p139 = scmp.eq.s32.totalorder %s32, 0
      %p140 = por %p138, %p139
      %p141 = scmp.ne.s32.totalorder %s129, %s130
      %p142 = scmp.eq.s32.totalorder %s33, 1
      %p143 = por %p141, %p142
      %p145 = scmp.ne.s32.totalorder %s130, %s144
      %p146 = scmp.eq.s32.totalorder %s33, 0
      %p147 = por %p145, %p146
      %s149 = sadd.s32 %s148, 1
      %p152 = scmp.eq.s32.totalorder %s27, 1
      %p153 = scmp.ne.s32.totalorder %s148, %s150
      %p154 = scmp.eq.s32.totalorder %s27, 0
      %p155 = por %p153, %p154
      %p156 = scmp.ne.s32.totalorder %s148, %s150
      %p157 = scmp.eq.s32.totalorder %s32, 1
      %p158 = por %p156, %p157
      %p159 = scmp.ne.s32.totalorder %s150, %s151
      %p160 = scmp.eq.s32.totalorder %s32, 0
      %p161 = por %p159, %p160
      %p162 = scmp.ne.s32.totalorder %s150, %s151
      %p163 = scmp.eq.s32.totalorder %s33, 1
      %p164 = por %p162, %p163
      %p166 = scmp.ne.s32.totalorder %s151, %s165
      %p167 = scmp.eq.s32.totalorder %s33, 0
      %p168 = por %p166, %p167
      %s170 = sadd.s32 %s169, 1
      %p173 = scmp.eq.s32.totalorder %s27, 1
      %p174 = scmp.ne.s32.totalorder %s169, %s171
      %p175 = scmp.eq.s32.totalorder %s27, 0
      %p176 = por %p174, %p175
      %p177 = scmp.ne.s32.totalorder %s169, %s171
      %p178 = scmp.eq.s32.totalorder %s32, 1
      %p179 = por %p177, %p178
      %p180 = scmp.ne.s32.totalorder %s171, %s172
      %p181 = scmp.eq.s32.totalorder %s32, 0
      %p182 = por %p180, %p181
      %p183 = scmp.ne.s32.totalorder %s171, %s172
      %p184 = scmp.eq.s32.totalorder %s33, 1
      %p185 = por %p183, %p184
      %p187 = scmp.ne.s32.totalorder %s172, %s186
      %p188 = scmp.eq.s32.totalorder %s33, 0
      %p189 = por %p187, %p188
      %s191 = sadd.s32 %s190, 1
      %p194 = scmp.eq.s32.totalorder %s27, 1
      %p195 = scmp.ne.s32.totalorder %s190, %s192
      %p196 = scmp.eq.s32.totalorder %s27, 0
      %p197 = por %p195, %p196
      %p198 = scmp.ne.s32.totalorder %s190, %s192
      %p199 = scmp.eq.s32.totalorder %s32, 1
      %p200 = por %p198, %p199
      %p201 = scmp.ne.s32.totalorder %s192, %s193
      %p202 = scmp.eq.s32.totalorder %s32, 0
      %p203 = por %p201, %p202
      %p204 = scmp.ne.s32.totalorder %s192, %s193
      %p205 = scmp.eq.s32.totalorder %s33, 1
      %p206 = por %p204, %p205
      %p208 = scmp.ne.s32.totalorder %s193, %s207
      %p209 = scmp.eq.s32.totalorder %s33, 0
      %p210 = por %p208, %p209
      %s212 = sadd.s32 %s211, 1
      %p215 = scmp.eq.s32.totalorder %s27, 1
      %p216 = scmp.ne.s32.totalorder %s211, %s213
      %p217 = scmp.eq.s32.totalorder %s27, 0
      %p218 = por %p216, %p217
      %p219 = scmp.ne.s32.totalorder %s211, %s213
      %p220 = scmp.eq.s32.totalorder %s32, 1
      %p221 = por %p219, %p220
      %p222 = scmp.ne.s32.totalorder %s213, %s214
      %p223 = scmp.eq.s32.totalorder %s32, 0
      %p224 = por %p222, %p223
      %p225 = scmp.ne.s32.totalorder %s213, %s214
      %p226 = scmp.eq.s32.totalorder %s33, 1
      %p227 = por %p225, %p226
      %p229 = scmp.ne.s32.totalorder %s214, %s228
      %p230 = scmp.eq.s32.totalorder %s33, 0
      %p231 = por %p229, %p230
      %s233 = sadd.s32 %s232, 1
      %p236 = scmp.eq.s32.totalorder %s27, 1
      %p237 = scmp.ne.s32.totalorder %s232, %s234
      %p238 = scmp.eq.s32.totalorder %s27, 0
      %p239 = por %p237, %p238
      %p240 = scmp.ne.s32.totalorder %s232, %s234
      %p241 = scmp.eq.s32.totalorder %s32, 1
      %p242 = por %p240, %p241
      %p243 = scmp.ne.s32.totalorder %s234, %s235
      %p244 = scmp.eq.s32.totalorder %s32, 0
      %p245 = por %p243, %p244
      %p246 = scmp.ne.s32.totalorder %s234, %s235
      %p247 = scmp.eq.s32.totalorder %s33, 1
      %p248 = por %p246, %p247
      %p250 = scmp.ne.s32.totalorder %s235, %s249
      %p251 = scmp.eq.s32.totalorder %s33, 0
      %p252 = por %p250, %p251
      %s254 = sadd.s32 %s253, 1
      %p257 = scmp.eq.s32.totalorder %s27, 1
      %p258 = scmp.ne.s32.totalorder %s253, %s255
      %p259 = scmp.eq.s32.totalorder %s27, 0
      %p260 = por %p258, %p259
      %p261 = scmp.ne.s32.totalorder %s253, %s255
      %p262 = scmp.eq.s32.totalorder %s32, 1
      %p263 = por %p261, %p262
      %p264 = scmp.ne.s32.totalorder %s255, %s256
      %p265 = scmp.eq.s32.totalorder %s32, 0
      %p266 = por %p264, %p265
      %p267 = scmp.ne.s32.totalorder %s255, %s256
      %p268 = scmp.eq.s32.totalorder %s33, 1
      %p269 = por %p267, %p268
      %p271 = scmp.ne.s32.totalorder %s256, %s270
      %p272 = scmp.eq.s32.totalorder %s33, 0
      %p273 = por %p271, %p272
      %s274 = ssub.s32 %s34, %s46
      %s275 = ssub.s32 %s35, %s42
      %s276 = sor.u32 %s274, %s275
      %p277 = scmp.eq.s32.totalorder %s276, 0
      %s279 = sadd.s32 %s278, 1
      %s280 = scalar_select %p277, %s278, %s279
      %p283 = pneg %p277
      %p284 = scmp.eq.s32.totalorder %s27, 1
      %p285 = por %p283, %p284
      %p286 = scmp.ne.s32.totalorder %s278, %s281
      %p287 = scmp.eq.s32.totalorder %s27, 0
      %p288 = por %p286, %p287
      %p289 = scmp.ne.s32.totalorder %s278, %s281
      %p290 = scmp.eq.s32.totalorder %s32, 1
      %p291 = por %p289, %p290
      %p292 = scmp.ne.s32.totalorder %s281, %s282
      %p293 = scmp.eq.s32.totalorder %s32, 0
      %p294 = por %p292, %p293
      %p295 = scmp.ne.s32.totalorder %s281, %s282
      %p296 = scmp.eq.s32.totalorder %s33, 1
      %p297 = por %p295, %p296
      %p299 = scmp.ne.s32.totalorder %s282, %s298
      %p300 = scmp.eq.s32.totalorder %s33, 0
      %p301 = por %p299, %p300
      %s302 = ssub.s32 %s34, %s46
      %s303 = ssub.s32 %s35, %s42
      %s304 = sor.u32 %s302, %s303
      %p305 = scmp.eq.s32.totalorder %s304, 0
      %s307 = sadd.s32 %s306, 1
      %s308 = scalar_select %p305, %s306, %s307
      %p311 = pneg %p305
      %p312 = scmp.eq.s32.totalorder %s27, 1
      %p313 = por %p311, %p312
      %p314 = scmp.ne.s32.totalorder %s306, %s309
      %p315 = scmp.eq.s32.totalorder %s27, 0
      %p316 = por %p314, %p315
      %p317 = scmp.ne.s32.totalorder %s306, %s309
      %p318 = scmp.eq.s32.totalorder %s32, 1
      %p319 = por %p317, %p318
      %p320 = scmp.ne.s32.totalorder %s309, %s310
      %p321 = scmp.eq.s32.totalorder %s32, 0
      %p322 = por %p320, %p321
      %p323 = scmp.ne.s32.totalorder %s309, %s310
      %p324 = scmp.eq.s32.totalorder %s33, 1
      %p325 = por %p323, %p324
      %p327 = scmp.ne.s32.totalorder %s310, %s326
      %p328 = scmp.eq.s32.totalorder %s33, 0
      %p329 = por %p327, %p328
      %p330 = scmp.le.s32.totalorder 1, %s27
      %p331 = scmp.lt.s32.totalorder %s27, 3
      %p332 = pnand %p330, %p331
      %p333 = pneg %p332
      // Predicated region
      $region9: #{tpu_custom_call.1} parent=5 // pred_check
        _
      $region10: #{tpu_custom_call.1} parent=5 // pred_check_branch
        %335 = sbr.rel (%p332) target = $region12
      $region11: #{tpu_custom_call.1} parent=5 // pred_region
        %s336 = ssub.s32 %s27, 1
        // Predicated region
        $region13: #{tpu_custom_call.1} parent=11 // pred_check
          %p337 = pneg %p93
        $region14: #{tpu_custom_call.1} parent=11 // pred_check_branch
          %339 = sbr.rel (%p337) target = $region16
        $region15: #{tpu_custom_call.1} parent=11 // pred_region
          %s341 = ssub.s32 64, 64
          %342 = vsyncadd [#allocation5], %s341
          %s343 = smul.addr %s36, 64
          %s344 = scalar_lea.hbm %s1, %s343
          %s346 = sshll.u32 [#allocation4], 4
          %s347 = int_to_ptr.vmem [resolvable:$true] %s346
          %349 = dma.hbm_to_vmem [thread:$0]  %s344, 64, %s347, [#allocation5]
        $region16: #{tpu_custom_call.1} parent=11 // pred_fallthru
          _
        // Predicated region
        $region17: #{tpu_custom_call.1} parent=11 // pred_check
          %p350 = pneg %p119
        $region18: #{tpu_custom_call.1} parent=11 // pred_check_branch
          %352 = sbr.rel (%p350) target = $region20
        $region19: #{tpu_custom_call.1} parent=11 // pred_region
          %s354 = ssub.s32 64, 64
          %355 = vsyncadd [#allocation8], %s354
          %s356 = smul.addr %s36, 64
          %s357 = scalar_lea.hbm %s2, %s356
          %s359 = sshll.u32 [#allocation7], 4
          %s360 = int_to_ptr.vmem [resolvable:$true] %s359
          %362 = dma.hbm_to_vmem [thread:$0]  %s357, 64, %s360, [#allocation8]
        $region20: #{tpu_custom_call.1} parent=11 // pred_fallthru
          _
        // Predicated region
        $region21: #{tpu_custom_call.1} parent=11 // pred_check
          %p363 = pneg %p140
        $region22: #{tpu_custom_call.1} parent=11 // pred_check_branch
          %365 = sbr.rel (%p363) target = $region24
        $region23: #{tpu_custom_call.1} parent=11 // pred_region
          _
        $region24: #{tpu_custom_call.1} parent=11 // pred_fallthru
          _
        // Predicated region
        $region25: #{tpu_custom_call.1} parent=11 // pred_check
          %p366 = pneg %p161
        $region26: #{tpu_custom_call.1} parent=11 // pred_check_branch
          %368 = sbr.rel (%p366) target = $region28
        $region27: #{tpu_custom_call.1} parent=11 // pred_region
          %s370 = ssub.s32 16, 16
          %371 = vsyncadd [#allocation8], %s370
          %s373 = sshll.u32 [#allocation9], 4
          %s374 = int_to_ptr.vmem [resolvable:$true] %s373
          %376 = dma.hbm_to_vmem [thread:$0]  %s4, 16, %s374, [#allocation8]
        $region28: #{tpu_custom_call.1} parent=11 // pred_fallthru
          _
        // Predicated region
        $region29: #{tpu_custom_call.1} parent=11 // pred_check
          %p377 = pneg %p182
        $region30: #{tpu_custom_call.1} parent=11 // pred_check_branch
          %379 = sbr.rel (%p377) target = $region32
        $region31: #{tpu_custom_call.1} parent=11 // pred_region
          %s381 = ssub.s32 256, 256
          %382 = vsyncadd [#allocation11], %s381
          %s383 = sshll.u32 [#allocation10], 4
          %s384 = int_to_ptr.vmem [resolvable:$true] %s383
          %389 = dma.hbm_to_vmem [thread:$0]  %s5, 256, %s384, [#allocation11], 64, 64, 4
        $region32: #{tpu_custom_call.1} parent=11 // pred_fallthru
          _
        // Predicated region
        $region33: #{tpu_custom_call.1} parent=11 // pred_check
          %p390 = pneg %p203
        $region34: #{tpu_custom_call.1} parent=11 // pred_check_branch
          %392 = sbr.rel (%p390) target = $region36
        $region35: #{tpu_custom_call.1} parent=11 // pred_region
          %s394 = ssub.s32 16, 16
          %395 = vsyncadd [#allocation11], %s394
          %s397 = sshll.u32 [#allocation12], 4
          %s398 = int_to_ptr.vmem [resolvable:$true] %s397
          %400 = dma.hbm_to_vmem [thread:$0]  %s6, 16, %s398, [#allocation11]
        $region36: #{tpu_custom_call.1} parent=11 // pred_fallthru
          _
        // Predicated region
        $region37: #{tpu_custom_call.1} parent=11 // pred_check
          %p401 = pneg %p224
        $region38: #{tpu_custom_call.1} parent=11 // pred_check_branch
          %403 = sbr.rel (%p401) target = $region40
        $region39: #{tpu_custom_call.1} parent=11 // pred_region
          _
        $region40: #{tpu_custom_call.1} parent=11 // pred_fallthru
          _
        // Predicated region
        $region41: #{tpu_custom_call.1} parent=11 // pred_check
          %p404 = pneg %p245
        $region42: #{tpu_custom_call.1} parent=11 // pred_check_branch
          %406 = sbr.rel (%p404) target = $region44
        $region43: #{tpu_custom_call.1} parent=11 // pred_region
          _
        $region44: #{tpu_custom_call.1} parent=11 // pred_fallthru
          _
        // Predicated region
        $region45: #{tpu_custom_call.1} parent=11 // pred_check
          %p407 = pneg %p266
        $region46: #{tpu_custom_call.1} parent=11 // pred_check_branch
          %409 = sbr.rel (%p407) target = $region48
        $region47: #{tpu_custom_call.1} parent=11 // pred_region
          _
        $region48: #{tpu_custom_call.1} parent=11 // pred_fallthru
          _
      $region12: #{tpu_custom_call.1} parent=5 // pred_fallthru
        _
      %p410 = scmp.lt.s32.totalorder %s27, 2
      // Predicated region
      $region49: #{tpu_custom_call.1} parent=5 // pred_check
        %p411 = pneg %p410
      $region50: #{tpu_custom_call.1} parent=5 // pred_check_branch
        %413 = sbr.rel (%p411) target = $region52
      $region51: #{tpu_custom_call.1} parent=5 // pred_region
        // Predicated region
        $region53: #{tpu_custom_call.1} parent=51 // pred_check
          %p414 = pneg %p61
        $region54: #{tpu_custom_call.1} parent=51 // pred_check_branch
          %416 = sbr.rel (%p414) target = $region56
        $region55: #{tpu_custom_call.1} parent=51 // pred_region
          %p417 = scmp.lt.s32.totalorder %s34, 1
          %s418 = scalar_select %p417, %s34, 1
          %p419 = scmp.lt.s32.totalorder %s35, 0
          %s420 = scalar_select %p419, %s35, 0
          %s421 = sadd.s32 %s420, %s418
          %s422 = smul.addr %s421, 4
          %s423 = scalar_lea.vmem %s0, %s422
        $region56: #{tpu_custom_call.1} parent=51 // pred_fallthru
          _
      $region52: #{tpu_custom_call.1} parent=5 // pred_fallthru
        _
      %p424 = scmp.le.s32.totalorder 1, %s27
      %p425 = scmp.lt.s32.totalorder %s27, 3
      %p426 = pnand %p424, %p425
      %p427 = pneg %p426
      // Predicated region
      $region57: #{tpu_custom_call.1} parent=5 // pred_check
        _
      $region58: #{tpu_custom_call.1} parent=5 // pred_check_branch
        %429 = sbr.rel (%p426) target = $region60
      $region59: #{tpu_custom_call.1} parent=5 // pred_region
        %s430 = ssub.s32 %s27, 1
        // Predicated region
        $region61: #{tpu_custom_call.1} parent=59 // pred_check
          %p431 = pneg %p93
        $region62: #{tpu_custom_call.1} parent=59 // pred_check_branch
          %433 = sbr.rel (%p431) target = $region64
        $region63: #{tpu_custom_call.1} parent=59 // pred_region
          %434 = dma.done [#allocation5], 64
        $region64: #{tpu_custom_call.1} parent=59 // pred_fallthru
          _
        // Predicated region
        $region65: #{tpu_custom_call.1} parent=59 // pred_check
          %p435 = pneg %p119
        $region66: #{tpu_custom_call.1} parent=59 // pred_check_branch
          %437 = sbr.rel (%p435) target = $region68
        $region67: #{tpu_custom_call.1} parent=59 // pred_region
          %438 = dma.done [#allocation8], 64
        $region68: #{tpu_custom_call.1} parent=59 // pred_fallthru
          _
        // Predicated region
        $region69: #{tpu_custom_call.1} parent=59 // pred_check
          %p439 = pneg %p161
        $region70: #{tpu_custom_call.1} parent=59 // pred_check_branch
          %441 = sbr.rel (%p439) target = $region72
        $region71: #{tpu_custom_call.1} parent=59 // pred_region
          %442 = dma.done [#allocation8], 16
        $region72: #{tpu_custom_call.1} parent=59 // pred_fallthru
          _
        // Predicated region
        $region73: #{tpu_custom_call.1} parent=59 // pred_check
          %p443 = pneg %p182
        $region74: #{tpu_custom_call.1} parent=59 // pred_check_branch
          %445 = sbr.rel (%p443) target = $region76
        $region75: #{tpu_custom_call.1} parent=59 // pred_region
          %446 = dma.done [#allocation11], 256
        $region76: #{tpu_custom_call.1} parent=59 // pred_fallthru
          _
        // Predicated region
        $region77: #{tpu_custom_call.1} parent=59 // pred_check
          %p447 = pneg %p203
        $region78: #{tpu_custom_call.1} parent=59 // pred_check_branch
          %449 = sbr.rel (%p447) target = $region80
        $region79: #{tpu_custom_call.1} parent=59 // pred_region
          %450 = dma.done [#allocation11], 16
        $region80: #{tpu_custom_call.1} parent=59 // pred_fallthru
          _
        %p451 = scmp.lt.s32.totalorder %s36, 1
        %s452 = scalar_select %p451, %s36, 1
        %p453 = scmp.lt.s32.totalorder %s37, 0
        %s454 = scalar_select %p453, %s37, 0
        %s455 = sadd.s32 %s454, %s452
        %s456 = smul.addr %s455, 4
        %s457 = scalar_lea.vmem %s0, %s456
        %p458 = pneg %p67
        %p459 = pneg %p64
        %p460 = pneg %p93
        %p461 = pneg %p90
        %p462 = pneg %p119
        %p463 = pneg %p116
        %p464 = pneg %p140
        %p465 = pneg %p137
        %p466 = pneg %p161
        %p467 = pneg %p158
        %p468 = pneg %p182
        %p469 = pneg %p179
        %p470 = pneg %p203
        %p471 = pneg %p200
        %p472 = pneg %p224
        %p473 = pneg %p221
        %p474 = pneg %p245
        %p475 = pneg %p242
        %p476 = pneg %p266
        %p477 = pneg %p263
        %p478 = pneg %p294
        %p479 = pneg %p291
        %s480 = sand.u32 %s281, 1
        %s481 = scalar_lea.sflag [#allocation6], %s480
        %s482 = sand.u32 %s281, 1
        %s483 = smul.addr %s482, 8
        %s484 = scalar_lea.vmem [#allocation13], %s483
        %p485 = pneg %p322
        %p486 = pneg %p319
        %s487 = sand.u32 %s309, 1
        %s488 = scalar_lea.sflag [#allocation15], %s487
        %s489 = sand.u32 %s309, 1
        %s490 = smul.addr %s489, 4
        %s491 = scalar_lea.vmem [#allocation14], %s490
        %p492 = scmp.lt.s32.totalorder %s36, 1
        %s493 = scalar_select %p492, %s36, 1
        %p494 = scmp.lt.s32.totalorder %s37, 0
        %s495 = scalar_select %p494, %s37, 0
        %s496 = sadd.s32 %s495, %s493
        %s497 = smul.addr %s496, 4
        %s498 = scalar_lea.vmem %s0, %s497
        %p500 = scmp.eq.s32.totalorder %s37, 0
        // Predicated region
        $region81: #{tpu_custom_call.1} parent=59 // pred_check
          %p501 = pneg %p500
        $region82: #{tpu_custom_call.1} parent=59 // pred_check_branch
          %503 = sbr.rel (%p501) target = $region84
        $region83: #{tpu_custom_call.1} parent=59 // pred_region
          %v504 = vld [vmem:[#allocation4] sm:$0xf]
          %v505 = vld [vmem:[#allocation7] sm:$0xf]
          %v506 = vld [vmem:[#allocation10] sm:$0xf]
          %v507 = vld [vmem:[#allocation10 + $0x4] sm:$0xf]
          %v508 = vld [vmem:[#allocation10 + $0x8] sm:$0xf]
          %v509 = vld [vmem:[#allocation10 + $0xc] sm:$0xf]
          %v510 = vld [vmem:[#allocation12] sm:$0x1]
          %v512 = vlaneseq
          %v513 = vshrl.u32 %v512, 7
          %v514 = vsub.s32 0, %v513
          %v515 = vrot.slane %v510, %v514
          %v521 = vunpack.c.l.b16 %v506
          %v522 = vunpack.c.l.b16 %v507
          %v523 = vunpack.c.l.b16 %v508
          %v524 = vunpack.c.l.b16 %v509
          %v525 = vpack.c.b16 %v522, %v521
          %v526 = vpack.c.b16 %v524, %v523
          %vm529 = vcmask 261120
          %v531 = vsel %vm529, %v504, 0
          %533 = vmatprep.subr.bf16.mxu0 0
          %534 = vmatpush1.bf16.msra.mxu0 0
          %535 = vmatprep.subr.bf16.mxu0 0
          %536 = vmatpush1.bf16.msra.mxu0 0
          %537 = vmatprep.subr.bf16.mxu0 0
          %538 = vmatpush1.bf16.msra.mxu0 0
          %539 = vmatprep.subr.bf16.mxu0 0
          %540 = vmatpush1.bf16.msra.mxu0 0
          %541 = vmatprep.subr.bf16.mxu0 0
          %542 = vmatpush1.bf16.msra.mxu0 0
          %543 = vmatprep.subr.bf16.mxu0 0
          %544 = vmatpush1.bf16.msra.mxu0 0
          %545 = vmatprep.subr.bf16.mxu0 0
          %546 = vmatpush1.bf16.msra.mxu0 %v526
          %547 = vmatprep.subr.bf16.mxu0 0
          %548 = vmatpush1.bf16.msra.mxu0 %v525
          %549 = vmatprep.subr.bf16.mxu0 0
          %550 = vmatpush2.bf16.msra.mxu0 0
          %551 = vmatprep.subr.bf16.mxu0 0
          %552 = vmatpush2.bf16.msra.mxu0 0
          %553 = vmatprep.subr.bf16.mxu0 0
          %554 = vmatpush2.bf16.msra.mxu0 0
          %555 = vmatprep.subr.bf16.mxu0 0
          %556 = vmatpush2.bf16.msra.mxu0 0
          %557 = vmatprep.subr.bf16.mxu0 0
          %558 = vmatpush2.bf16.msra.mxu0 0
          %559 = vmatprep.subr.bf16.mxu0 0
          %560 = vmatpush2.bf16.msra.mxu0 0
          %561 = vmatprep.subr.bf16.mxu0 0
          %562 = vmatpush2.bf16.msra.mxu0 0
          %563 = vmatprep.subr.bf16.mxu0 0
          %564 = vmatpush2.bf16.msra.mxu0 0
          %565 = vmatprep.mubr.bf16.mxu0 0
          %566 = vmatmul.mubr.bf16.gmra.mxu0 %v531
          %v567 = vpop.f32.mrf.mxu0
          %v568 = vadd.f32 %v515, %v567
          %v569 = vpop.f32.mrf.mxu0
          %v570 = vpop.f32.mrf.mxu0
          %v571 = vpop.f32.mrf.mxu0
          %572 = vdwg.mxu0
          %v573 = vld [vmem:[%s7] sm:$0xf]
          %v574 = vld [vmem:[%s7 + $0x4] sm:$0xf]
          %v575 = vld [vmem:[%s7 + $0x8] sm:$0xf]
          %v576 = vld [vmem:[%s7 + $0xc] sm:$0xf]
          %v577 = vld [vmem:[%s8] sm:$0x1]
          %v579 = vlaneseq
          %v580 = vshrl.u32 %v579, 7
          %v581 = vsub.s32 0, %v580
          %v582 = vrot.slane %v577, %v581
          %v588 = vunpack.c.l.b16 %v573
          %v589 = vunpack.c.l.b16 %v574
          %v590 = vunpack.c.l.b16 %v575
          %v591 = vunpack.c.l.b16 %v576
          %v592 = vpack.c.b16 %v589, %v588
          %v593 = vpack.c.b16 %v591, %v590
          %v597 = vsel %vm529, %v505, 0
          %599 = vmatprep.subr.bf16.mxu0 0
          %600 = vmatpush1.bf16.msra.mxu0 0
          %601 = vmatprep.subr.bf16.mxu0 0
          %602 = vmatpush1.bf16.msra.mxu0 0
          %603 = vmatprep.subr.bf16.mxu0 0
          %604 = vmatpush1.bf16.msra.mxu0 0
          %605 = vmatprep.subr.bf16.mxu0 0
          %606 = vmatpush1.bf16.msra.mxu0 0
          %607 = vmatprep.subr.bf16.mxu0 0
          %608 = vmatpush1.bf16.msra.mxu0 0
          %609 = vmatprep.subr.bf16.mxu0 0
          %610 = vmatpush1.bf16.msra.mxu0 0
          %611 = vmatprep.subr.bf16.mxu0 0
          %612 = vmatpush1.bf16.msra.mxu0 %v593
          %613 = vmatprep.subr.bf16.mxu0 0
          %614 = vmatpush1.bf16.msra.mxu0 %v592
          %615 = vmatprep.subr.bf16.mxu0 0
          %616 = vmatpush2.bf16.msra.mxu0 0
          %617 = vmatprep.subr.bf16.mxu0 0
          %618 = vmatpush2.bf16.msra.mxu0 0
          %619 = vmatprep.subr.bf16.mxu0 0
          %620 = vmatpush2.bf16.msra.mxu0 0
          %621 = vmatprep.subr.bf16.mxu0 0
          %622 = vmatpush2.bf16.msra.mxu0 0
          %623 = vmatprep.subr.bf16.mxu0 0
          %624 = vmatpush2.bf16.msra.mxu0 0
          %625 = vmatprep.subr.bf16.mxu0 0
          %626 = vmatpush2.bf16.msra.mxu0 0
          %627 = vmatprep.subr.bf16.mxu0 0
          %628 = vmatpush2.bf16.msra.mxu0 0
          %629 = vmatprep.subr.bf16.mxu0 0
          %630 = vmatpush2.bf16.msra.mxu0 0
          %631 = vmatprep.mubr.bf16.mxu0 0
          %632 = vmatmul.mubr.bf16.gmra.mxu0 %v597
          %v633 = vpop.f32.mrf.mxu0
          %v634 = vadd.f32 %v582, %v633
          %v635 = vpop.f32.mrf.mxu0
          %v636 = vpop.f32.mrf.mxu0
          %v637 = vpop.f32.mrf.mxu0
          %638 = vdwg.mxu0
          %v639 = vpack.c.bf16 %v568, %v568
          %vm640 = vcmask 257024
          %641 = vst.msk [vmem:[#allocation2] sm:$0xf] %vm640, %v639
          %v642 = vpack.c.bf16 %v634, %v634
          %vm643 = vcmask 60416
          %644 = vst.msk [vmem:[#allocation3] sm:$0xf] %vm643, %v642
        $region84: #{tpu_custom_call.1} parent=59 // pred_fallthru
          _
        %v645 = vld [vmem:[%s498] sm:$0xf]
        %v646 = vld [vmem:[%s3] sm:$0xf]
        %v647 = vld [vmem:[%s3 + $0x4] sm:$0xf]
        %v648 = vld [vmem:[%s3 + $0x8] sm:$0xf]
        %v649 = vld [vmem:[%s3 + $0xc] sm:$0xf]
        %v650 = vld [vmem:[#allocation9] sm:$0x1]
        %v652 = vlaneseq
        %v653 = vshrl.u32 %v652, 7
        %v654 = vsub.s32 0, %v653
        %v655 = vrot.slane %v650, %v654
        %v661 = vunpack.c.l.b16 %v646
        %v662 = vunpack.c.l.b16 %v647
        %v663 = vunpack.c.l.b16 %v648
        %v664 = vunpack.c.l.b16 %v649
        %v665 = vpack.c.b16 %v662, %v661
        %v666 = vpack.c.b16 %v664, %v663
        %vm669 = vcmask 261120
        %v671 = vsel %vm669, %v645, 0
        %673 = vmatprep.subr.bf16.mxu0 0
        %674 = vmatpush1.bf16.msra.mxu0 0
        %675 = vmatprep.subr.bf16.mxu0 0
        %676 = vmatpush1.bf16.msra.mxu0 0
        %677 = vmatprep.subr.bf16.mxu0 0
        %678 = vmatpush1.bf16.msra.mxu0 0
        %679 = vmatprep.subr.bf16.mxu0 0
        %680 = vmatpush1.bf16.msra.mxu0 0
        %681 = vmatprep.subr.bf16.mxu0 0
        %682 = vmatpush1.bf16.msra.mxu0 0
        %683 = vmatprep.subr.bf16.mxu0 0
        %684 = vmatpush1.bf16.msra.mxu0 0
        %685 = vmatprep.subr.bf16.mxu0 0
        %686 = vmatpush1.bf16.msra.mxu0 %v666
        %687 = vmatprep.subr.bf16.mxu0 0
        %688 = vmatpush1.bf16.msra.mxu0 %v665
        %689 = vmatprep.subr.bf16.mxu0 0
        %690 = vmatpush2.bf16.msra.mxu0 0
        %691 = vmatprep.subr.bf16.mxu0 0
        %692 = vmatpush2.bf16.msra.mxu0 0
        %693 = vmatprep.subr.bf16.mxu0 0
        %694 = vmatpush2.bf16.msra.mxu0 0
        %695 = vmatprep.subr.bf16.mxu0 0
        %696 = vmatpush2.bf16.msra.mxu0 0
        %697 = vmatprep.subr.bf16.mxu0 0
        %698 = vmatpush2.bf16.msra.mxu0 0
        %699 = vmatprep.subr.bf16.mxu0 0
        %700 = vmatpush2.bf16.msra.mxu0 0
        %701 = vmatprep.subr.bf16.mxu0 0
        %702 = vmatpush2.bf16.msra.mxu0 0
        %703 = vmatprep.subr.bf16.mxu0 0
        %704 = vmatpush2.bf16.msra.mxu0 0
        %705 = vmatprep.mubr.bf16.mxu0 0
        %706 = vmatmul.mubr.bf16.gmra.mxu0 %v671
        %v707 = vpop.f32.mrf.mxu0
        %v708 = vadd.f32 %v655, %v707
        %v709 = vpop.f32.mrf.mxu0
        %v710 = vpop.f32.mrf.mxu0
        %v711 = vpop.f32.mrf.mxu0
        %712 = vdwg.mxu0
        %v713 = vpack.c.bf16 %v708, %v708
        %v714 = vld [vmem:[#allocation2] sm:$0xf]
        %v715 = vld [vmem:[#allocation3] sm:$0xf]
        %vm716 = vcmask 64512
        %v718 = vsel %vm716, %v713, 0
        %v721 = vsel %vm716, %v714, 0
        %723 = vmatprep.subr.bf16.mxu0 0
        %724 = vmatpush1.bf16.xpose.msra.mxu0 0
        %725 = vmatprep.subr.bf16.mxu0 0
        %726 = vmatpush1.bf16.xpose.msra.mxu0 0
        %727 = vmatprep.subr.bf16.mxu0 0
        %728 = vmatpush1.bf16.xpose.msra.mxu0 0
        %729 = vmatprep.subr.bf16.mxu0 0
        %730 = vmatpush1.bf16.xpose.msra.mxu0 0
        %731 = vmatprep.subr.bf16.mxu0 0
        %732 = vmatpush1.bf16.xpose.msra.mxu0 0
        %733 = vmatprep.subr.bf16.mxu0 0
        %734 = vmatpush1.bf16.xpose.msra.mxu0 0
        %735 = vmatprep.subr.bf16.mxu0 0
        %736 = vmatpush1.bf16.xpose.msra.mxu0 0
        %737 = vmatprep.subr.bf16.mxu0 0
        %738 = vmatpush1.bf16.xpose.msra.mxu0 %v721
        %739 = vmatprep.subr.bf16.mxu0 0
        %740 = vmatpush2.bf16.xpose.msra.mxu0 0
        %741 = vmatprep.subr.bf16.mxu0 0
        %742 = vmatpush2.bf16.xpose.msra.mxu0 0
        %743 = vmatprep.subr.bf16.mxu0 0
        %744 = vmatpush2.bf16.xpose.msra.mxu0 0
        %745 = vmatprep.subr.bf16.mxu0 0
        %746 = vmatpush2.bf16.xpose.msra.mxu0 0
        %747 = vmatprep.subr.bf16.mxu0 0
        %748 = vmatpush2.bf16.xpose.msra.mxu0 0
        %749 = vmatprep.subr.bf16.mxu0 0
        %750 = vmatpush2.bf16.xpose.msra.mxu0 0
        %751 = vmatprep.subr.bf16.mxu0 0
        %752 = vmatpush2.bf16.xpose.msra.mxu0 0
        %753 = vmatprep.subr.bf16.mxu0 0
        %754 = vmatpush2.bf16.xpose.msra.mxu0 0
        %755 = vmatprep.mubr.bf16.mxu0 0
        %756 = vmatmul.mubr.bf16.gmra.mxu0 %v718
        %v757 = vpop.f32.mrf.mxu0
        %v758 = vadd.f32 0.0, %v757
        %v759 = vpop.f32.mrf.mxu0
        %v760 = vpop.f32.mrf.mxu0
        %v761 = vpop.f32.mrf.mxu0
        %762 = vdwg.mxu0
        %v763 = vmul.f32 %v758, 0.35355338
        %v764 = vsel %vm716, %v763, -inf
        %765 = vmax.xlane.f32.xlu0 %v764
        %v766 = vpop.xlane.xlu0 %765
        %v767 = vsub.f32 %v763, %v766
        %v768 = vmul.f32 %v767, 1.442695
        %v769 = vpow.pop %v768
        %v770 = vsel %vm716, %v769, 0.0
        %771 = vadd.xlane.f32.xlu0 %v770
        %v772 = vpop.xlane.xlu0 %771
        %v773 = vrcp.pop %v772
        %v774 = vmul.f32 %v769, %v773
        %v775 = vpack.c.bf16 %v774, %v774
        %vm776 = vcmask 60416
        %777 = vst.msk [vmem:[%s491] sm:$0xf] %vm776, %v775
        %v778 = vadd.f32 %v774, 0.0
        %780 = vrot.lane.b32.xlu0 %v713, 120
        %v781 = vpop.permute.xlu0 %780
        %v783 = vunpack.c.l.b16 %v714
        %v784 = vpack.c.b16 %v783, %v783
        %785 = vrot.lane.b32.xlu0 %v784, 120
        %v786 = vpop.permute.xlu0 %785
        %v788 = vsel %vm716, %v781, 0
        %v791 = vsel %vm716, %v786, 0
        %793 = vmatprep.subr.bf16.mxu0 0
        %794 = vmatpush1.bf16.xpose.msra.mxu0 0
        %795 = vmatprep.subr.bf16.mxu0 0
        %796 = vmatpush1.bf16.xpose.msra.mxu0 0
        %797 = vmatprep.subr.bf16.mxu0 0
        %798 = vmatpush1.bf16.xpose.msra.mxu0 0
        %799 = vmatprep.subr.bf16.mxu0 0
        %800 = vmatpush1.bf16.xpose.msra.mxu0 0
        %801 = vmatprep.subr.bf16.mxu0 0
        %802 = vmatpush1.bf16.xpose.msra.mxu0 0
        %803 = vmatprep.subr.bf16.mxu0 0
        %804 = vmatpush1.bf16.xpose.msra.mxu0 0
        %805 = vmatprep.subr.bf16.mxu0 0
        %806 = vmatpush1.bf16.xpose.msra.mxu0 0
        %807 = vmatprep.subr.bf16.mxu0 0
        %808 = vmatpush1.bf16.xpose.msra.mxu0 %v791
        %809 = vmatprep.subr.bf16.mxu0 0
        %810 = vmatpush2.bf16.xpose.msra.mxu0 0
        %811 = vmatprep.subr.bf16.mxu0 0
        %812 = vmatpush2.bf16.xpose.msra.mxu0 0
        %813 = vmatprep.subr.bf16.mxu0 0
        %814 = vmatpush2.bf16.xpose.msra.mxu0 0
        %815 = vmatprep.subr.bf16.mxu0 0
        %816 = vmatpush2.bf16.xpose.msra.mxu0 0
        %817 = vmatprep.subr.bf16.mxu0 0
        %818 = vmatpush2.bf16.xpose.msra.mxu0 0
        %819 = vmatprep.subr.bf16.mxu0 0
        %820 = vmatpush2.bf16.xpose.msra.mxu0 0
        %821 = vmatprep.subr.bf16.mxu0 0
        %822 = vmatpush2.bf16.xpose.msra.mxu0 0
        %823 = vmatprep.subr.bf16.mxu0 0
        %824 = vmatpush2.bf16.xpose.msra.mxu0 0
        %825 = vmatprep.mubr.bf16.mxu0 0
        %826 = vmatmul.mubr.bf16.gmra.mxu0 %v788
        %v827 = vpop.f32.mrf.mxu0
        %v828 = vadd.f32 0.0, %v827
        %v829 = vpop.f32.mrf.mxu0
        %v830 = vpop.f32.mrf.mxu0
        %v831 = vpop.f32.mrf.mxu0
        %832 = vdwg.mxu0
        %v833 = vmul.f32 %v828, 0.35355338
        %v834 = vsel %vm716, %v833, -inf
        %835 = vmax.xlane.f32.xlu0 %v834
        %v836 = vpop.xlane.xlu0 %835
        %v837 = vsub.f32 %v833, %v836
        %v838 = vmul.f32 %v837, 1.442695
        %v839 = vpow.pop %v838
        %v840 = vsel %vm716, %v839, 0.0
        %841 = vadd.xlane.f32.xlu0 %v840
        %v842 = vpop.xlane.xlu0 %841
        %v843 = vrcp.pop %v842
        %v844 = vmul.f32 %v839, %v843
        %v845 = vpack.c.bf16 %v844, %v844
        %v847 = vunpack.c.l.b16 %v845
        %v848 = vpack.c.b16 %v847, %v847
        %849 = vrot.lane.b32.xlu0 %v848, 8
        %v850 = vpop.permute.xlu0 %849
        %vm852 = vcmask 126016
        %853 = vst.msk [vmem:[%s491] sm:$0xf] %vm852, %v850
        %v854 = vadd.f32 %v778, %v844
        %855 = vrot.lane.b32.xlu0 %v713, 112
        %v856 = vpop.permute.xlu0 %855
        %857 = vrot.lane.b32.xlu0 %v784, 112
        %v858 = vpop.permute.xlu0 %857
        %v860 = vsel %vm716, %v856, 0
        %v863 = vsel %vm716, %v858, 0
        %865 = vmatprep.subr.bf16.mxu0 0
        %866 = vmatpush1.bf16.xpose.msra.mxu0 0
        %867 = vmatprep.subr.bf16.mxu0 0
        %868 = vmatpush1.bf16.xpose.msra.mxu0 0
        %869 = vmatprep.subr.bf16.mxu0 0
        %870 = vmatpush1.bf16.xpose.msra.mxu0 0
        %871 = vmatprep.subr.bf16.mxu0 0
        %872 = vmatpush1.bf16.xpose.msra.mxu0 0
        %873 = vmatprep.subr.bf16.mxu0 0
        %874 = vmatpush1.bf16.xpose.msra.mxu0 0
        %875 = vmatprep.subr.bf16.mxu0 0
        %876 = vmatpush1.bf16.xpose.msra.mxu0 0
        %877 = vmatprep.subr.bf16.mxu0 0
        %878 = vmatpush1.bf16.xpose.msra.mxu0 0
        %879 = vmatprep.subr.bf16.mxu0 0
        %880 = vmatpush1.bf16.xpose.msra.mxu0 %v863
        %881 = vmatprep.subr.bf16.mxu0 0
        %882 = vmatpush2.bf16.xpose.msra.mxu0 0
        %883 = vmatprep.subr.bf16.mxu0 0
        %884 = vmatpush2.bf16.xpose.msra.mxu0 0
        %885 = vmatprep.subr.bf16.mxu0 0
        %886 = vmatpush2.bf16.xpose.msra.mxu0 0
        %887 = vmatprep.subr.bf16.mxu0 0
        %888 = vmatpush2.bf16.xpose.msra.mxu0 0
        %889 = vmatprep.subr.bf16.mxu0 0
        %890 = vmatpush2.bf16.xpose.msra.mxu0 0
        %891 = vmatprep.subr.bf16.mxu0 0
        %892 = vmatpush2.bf16.xpose.msra.mxu0 0
        %893 = vmatprep.subr.bf16.mxu0 0
        %894 = vmatpush2.bf16.xpose.msra.mxu0 0
        %895 = vmatprep.subr.bf16.mxu0 0
        %896 = vmatpush2.bf16.xpose.msra.mxu0 0
        %897 = vmatprep.mubr.bf16.mxu0 0
        %898 = vmatmul.mubr.bf16.gmra.mxu0 %v860
        %v899 = vpop.f32.mrf.mxu0
        %v900 = vadd.f32 0.0, %v899
        %v901 = vpop.f32.mrf.mxu0
        %v902 = vpop.f32.mrf.mxu0
        %v903 = vpop.f32.mrf.mxu0
        %904 = vdwg.mxu0
        %v905 = vmul.f32 %v900, 0.35355338
        %v906 = vsel %vm716, %v905, -inf
        %907 = vmax.xlane.f32.xlu0 %v906
        %v908 = vpop.xlane.xlu0 %907
        %v909 = vsub.f32 %v905, %v908
        %v910 = vmul.f32 %v909, 1.442695
        %v911 = vpow.pop %v910
        %v912 = vsel %vm716, %v911, 0.0
        %913 = vadd.xlane.f32.xlu0 %v912
        %v914 = vpop.xlane.xlu0 %913
        %v915 = vrcp.pop %v914
        %v916 = vmul.f32 %v911, %v915
        %v917 = vpack.c.bf16 %v916, %v916
        %v919 = vunpack.c.l.b16 %v917
        %v920 = vpack.c.b16 %v919, %v919
        %921 = vrot.lane.b32.xlu0 %v920, 16
        %v922 = vpop.permute.xlu0 %921
        %vm924 = vcmask 191616
        %925 = vst.msk [vmem:[%s491] sm:$0xf] %vm924, %v922
        %v926 = vadd.f32 %v854, %v916
        %927 = vrot.lane.b32.xlu0 %v713, 104
        %v928 = vpop.permute.xlu0 %927
        %929 = vrot.lane.b32.xlu0 %v784, 104
        %v930 = vpop.permute.xlu0 %929
        %v932 = vsel %vm716, %v928, 0
        %v935 = vsel %vm716, %v930, 0
        %937 = vmatprep.subr.bf16.mxu0 0
        %938 = vmatpush1.bf16.xpose.msra.mxu0 0
        %939 = vmatprep.subr.bf16.mxu0 0
        %940 = vmatpush1.bf16.xpose.msra.mxu0 0
        %941 = vmatprep.subr.bf16.mxu0 0
        %942 = vmatpush1.bf16.xpose.msra.mxu0 0
        %943 = vmatprep.subr.bf16.mxu0 0
        %944 = vmatpush1.bf16.xpose.msra.mxu0 0
        %945 = vmatprep.subr.bf16.mxu0 0
        %946 = vmatpush1.bf16.xpose.msra.mxu0 0
        %947 = vmatprep.subr.bf16.mxu0 0
        %948 = vmatpush1.bf16.xpose.msra.mxu0 0
        %949 = vmatprep.subr.bf16.mxu0 0
        %950 = vmatpush1.bf16.xpose.msra.mxu0 0
        %951 = vmatprep.subr.bf16.mxu0 0
        %952 = vmatpush1.bf16.xpose.msra.mxu0 %v935
        %953 = vmatprep.subr.bf16.mxu0 0
        %954 = vmatpush2.bf16.xpose.msra.mxu0 0
        %955 = vmatprep.subr.bf16.mxu0 0
        %956 = vmatpush2.bf16.xpose.msra.mxu0 0
        %957 = vmatprep.subr.bf16.mxu0 0
        %958 = vmatpush2.bf16.xpose.msra.mxu0 0
        %959 = vmatprep.subr.bf16.mxu0 0
        %960 = vmatpush2.bf16.xpose.msra.mxu0 0
        %961 = vmatprep.subr.bf16.mxu0 0
        %962 = vmatpush2.bf16.xpose.msra.mxu0 0
        %963 = vmatprep.subr.bf16.mxu0 0
        %964 = vmatpush2.bf16.xpose.msra.mxu0 0
        %965 = vmatprep.subr.bf16.mxu0 0
        %966 = vmatpush2.bf16.xpose.msra.mxu0 0
        %967 = vmatprep.subr.bf16.mxu0 0
        %968 = vmatpush2.bf16.xpose.msra.mxu0 0
        %969 = vmatprep.mubr.bf16.mxu0 0
        %970 = vmatmul.mubr.bf16.gmra.mxu0 %v932
        %v971 = vpop.f32.mrf.mxu0
        %v972 = vadd.f32 0.0, %v971
        %v973 = vpop.f32.mrf.mxu0
        %v974 = vpop.f32.mrf.mxu0
        %v975 = vpop.f32.mrf.mxu0
        %976 = vdwg.mxu0
        %v977 = vmul.f32 %v972, 0.35355338
        %v978 = vsel %vm716, %v977, -inf
        %979 = vmax.xlane.f32.xlu0 %v978
        %v980 = vpop.xlane.xlu0 %979
        %v981 = vsub.f32 %v977, %v980
        %v982 = vmul.f32 %v981, 1.442695
        %v983 = vpow.pop %v982
        %v984 = vsel %vm716, %v983, 0.0
        %985 = vadd.xlane.f32.xlu0 %v984
        %v986 = vpop.xlane.xlu0 %985
        %v987 = vrcp.pop %v986
        %v988 = vmul.f32 %v983, %v987
        %v989 = vpack.c.bf16 %v988, %v988
        %v991 = vunpack.c.l.b16 %v989
        %v992 = vpack.c.b16 %v991, %v991
        %993 = vrot.lane.b32.xlu0 %v992, 24
        %v994 = vpop.permute.xlu0 %993
        %vm996 = vcmask 257216
        %997 = vst.msk [vmem:[%s491] sm:$0xf] %vm996, %v994
        %v998 = vadd.f32 %v926, %v988
        %v999 = vmul.f32 %v998, 0.25
        %v1000 = vpack.c.bf16 %v999, %v999
        %v1002 = vsel %vm716, %v1000, 0
        %vm1004 = vcmask 1043456
        %v1006 = vsel %vm1004, %v715, 0
        %1008 = vmatprep.subr.bf16.mxu0 0
        %1009 = vmatpush1.bf16.msra.mxu0 0
        %1010 = vmatprep.subr.bf16.mxu0 0
        %1011 = vmatpush1.bf16.msra.mxu0 0
        %1012 = vmatprep.subr.bf16.mxu0 0
        %1013 = vmatpush1.bf16.msra.mxu0 0
        %1014 = vmatprep.subr.bf16.mxu0 0
        %1015 = vmatpush1.bf16.msra.mxu0 0
        %1016 = vmatprep.subr.bf16.mxu0 0
        %1017 = vmatpush1.bf16.msra.mxu0 0
        %1018 = vmatprep.subr.bf16.mxu0 0
        %1019 = vmatpush1.bf16.msra.mxu0 0
        %1020 = vmatprep.subr.bf16.mxu0 0
        %1021 = vmatpush1.bf16.msra.mxu0 0
        %1022 = vmatprep.subr.bf16.mxu0 0
        %1023 = vmatpush1.bf16.msra.mxu0 %v1006
        %1024 = vmatprep.subr.bf16.mxu0 0
        %1025 = vmatpush2.bf16.msra.mxu0 0
        %1026 = vmatprep.subr.bf16.mxu0 0
        %1027 = vmatpush2.bf16.msra.mxu0 0
        %1028 = vmatprep.subr.bf16.mxu0 0
        %1029 = vmatpush2.bf16.msra.mxu0 0
        %1030 = vmatprep.subr.bf16.mxu0 0
        %1031 = vmatpush2.bf16.msra.mxu0 0
        %1032 = vmatprep.subr.bf16.mxu0 0
        %1033 = vmatpush2.bf16.msra.mxu0 0
        %1034 = vmatprep.subr.bf16.mxu0 0
        %1035 = vmatpush2.bf16.msra.mxu0 0
        %1036 = vmatprep.subr.bf16.mxu0 0
        %1037 = vmatpush2.bf16.msra.mxu0 0
        %1038 = vmatprep.subr.bf16.mxu0 0
        %1039 = vmatpush2.bf16.msra.mxu0 0
        %1040 = vmatprep.mubr.bf16.mxu0 0
        %1041 = vmatmul.mubr.bf16.gmra.mxu0 %v1002
        %v1042 = vpop.f32.mrf.mxu0
        %v1043 = vadd.f32 0.0, %v1042
        %v1044 = vpop.f32.mrf.mxu0
        %v1045 = vpop.f32.mrf.mxu0
        %v1046 = vpop.f32.mrf.mxu0
        %1047 = vdwg.mxu0
        %v1048 = vpack.c.bf16 %v1043, %v1043
        %v1049 = vld [vmem:[%s9] sm:$0xf]
        %v1051 = vsel %vm716, %v1048, 0
        %v1054 = vsel %vm1004, %v1049, 0
        %1056 = vmatprep.subr.bf16.mxu0 0
        %1057 = vmatpush1.bf16.msra.mxu0 0
        %1058 = vmatprep.subr.bf16.mxu0 0
        %1059 = vmatpush1.bf16.msra.mxu0 0
        %1060 = vmatprep.subr.bf16.mxu0 0
        %1061 = vmatpush1.bf16.msra.mxu0 0
        %1062 = vmatprep.subr.bf16.mxu0 0
        %1063 = vmatpush1.bf16.msra.mxu0 0
        %1064 = vmatprep.subr.bf16.mxu0 0
        %1065 = vmatpush1.bf16.msra.mxu0 0
        %1066 = vmatprep.subr.bf16.mxu0 0
        %1067 = vmatpush1.bf16.msra.mxu0 0
        %1068 = vmatprep.subr.bf16.mxu0 0
        %1069 = vmatpush1.bf16.msra.mxu0 0
        %1070 = vmatprep.subr.bf16.mxu0 0
        %1071 = vmatpush1.bf16.msra.mxu0 %v1054
        %1072 = vmatprep.subr.bf16.mxu0 0
        %1073 = vmatpush2.bf16.msra.mxu0 0
        %1074 = vmatprep.subr.bf16.mxu0 0
        %1075 = vmatpush2.bf16.msra.mxu0 0
        %1076 = vmatprep.subr.bf16.mxu0 0
        %1077 = vmatpush2.bf16.msra.mxu0 0
        %1078 = vmatprep.subr.bf16.mxu0 0
        %1079 = vmatpush2.bf16.msra.mxu0 0
        %1080 = vmatprep.subr.bf16.mxu0 0
        %1081 = vmatpush2.bf16.msra.mxu0 0
        %1082 = vmatprep.subr.bf16.mxu0 0
        %1083 = vmatpush2.bf16.msra.mxu0 0
        %1084 = vmatprep.subr.bf16.mxu0 0
        %1085 = vmatpush2.bf16.msra.mxu0 0
        %1086 = vmatprep.subr.bf16.mxu0 0
        %1087 = vmatpush2.bf16.msra.mxu0 0
        %1088 = vmatprep.mubr.bf16.mxu0 0
        %1089 = vmatmul.mubr.bf16.gmra.mxu0 %v1051
        %v1090 = vpop.f32.mrf.mxu0
        %v1091 = vadd.f32 0.0, %v1090
        %v1092 = vpop.f32.mrf.mxu0
        %v1093 = vpop.f32.mrf.mxu0
        %v1094 = vpop.f32.mrf.mxu0
        %1095 = vdwg.mxu0
        %1096 = vst.msk [vmem:[%s484] sm:$0xff] %vm669, %v1091
        %s1097 = sand.u32 %s281, 1
        %s1098 = scalar_lea.sflag [#allocation6], %s1097
        %s1099 = sand.u32 %s281, 1
        %s1100 = smul.addr %s1099, 8
        %s1101 = scalar_lea.vmem [#allocation13], %s1100
        %s1102 = sand.u32 %s309, 1
        %s1103 = scalar_lea.sflag [#allocation15], %s1102
        %s1104 = sand.u32 %s309, 1
        %s1105 = smul.addr %s1104, 4
        %s1106 = scalar_lea.vmem [#allocation14], %s1105
        // Predicated region
        $region85: #{tpu_custom_call.1} parent=59 // pred_check
          %p1107 = pneg %p291
        $region86: #{tpu_custom_call.1} parent=59 // pred_check_branch
          %1109 = sbr.rel (%p1107) target = $region88
        $region87: #{tpu_custom_call.1} parent=59 // pred_region
          %s1111 = ssub.s32 128, 128
          %1112 = vsyncadd %s1098, %s1111
          %s1113 = sadd.s32 %s37, %s36
          %s1114 = smul.addr %s1113, 128
          %s1115 = scalar_lea.hbm %s10, %s1114
          %s1117 = sshll.u32 %s1101, 4
          %s1118 = int_to_ptr.vmem [resolvable:$true] %s1117
          %1120 = dma.vmem_to_hbm [thread:$0]  %s1118, 128, %s1115, %s1098
        $region88: #{tpu_custom_call.1} parent=59 // pred_fallthru
          _
        // Predicated region
        $region89: #{tpu_custom_call.1} parent=59 // pred_check
          %p1121 = pneg %p319
        $region90: #{tpu_custom_call.1} parent=59 // pred_check_branch
          %1123 = sbr.rel (%p1121) target = $region92
        $region91: #{tpu_custom_call.1} parent=59 // pred_region
          %s1125 = ssub.s32 64, 64
          %1126 = vsyncadd %s1103, %s1125
          %s1127 = sadd.s32 %s37, %s36
          %s1128 = smul.addr %s1127, 64
          %s1129 = scalar_lea.hbm %s11, %s1128
          %s1131 = sshll.u32 %s1106, 4
          %s1132 = int_to_ptr.vmem [resolvable:$true] %s1131
          %1134 = dma.vmem_to_hbm [thread:$0]  %s1132, 64, %s1129, %s1103
        $region92: #{tpu_custom_call.1} parent=59 // pred_fallthru
          _
      $region60: #{tpu_custom_call.1} parent=5 // pred_fallthru
        _
      %p1135 = scmp.le.s32.totalorder 2, %s27
      // Predicated region
      $region93: #{tpu_custom_call.1} parent=5 // pred_check
        %p1136 = pneg %p1135
      $region94: #{tpu_custom_call.1} parent=5 // pred_check_branch
        %1138 = sbr.rel (%p1136) target = $region96
      $region95: #{tpu_custom_call.1} parent=5 // pred_region
        %s1139 = ssub.s32 %s27, 2
        // Predicated region
        $region97: #{tpu_custom_call.1} parent=95 // pred_check
          %p1140 = pneg %p297
        $region98: #{tpu_custom_call.1} parent=95 // pred_check_branch
          %1142 = sbr.rel (%p1140) target = $region100
        $region99: #{tpu_custom_call.1} parent=95 // pred_region
          %s1143 = sand.u32 %s282, 1
          %s1144 = scalar_lea.sflag [#allocation6], %s1143
          %s1145 = sand.u32 %s282, 1
          %s1146 = smul.addr %s1145, 8
          %s1147 = scalar_lea.vmem [#allocation13], %s1146
          %1148 = dma.done %s1144, 128
        $region100: #{tpu_custom_call.1} parent=95 // pred_fallthru
          _
        // Predicated region
        $region101: #{tpu_custom_call.1} parent=95 // pred_check
          %p1149 = pneg %p325
        $region102: #{tpu_custom_call.1} parent=95 // pred_check_branch
          %1151 = sbr.rel (%p1149) target = $region104
        $region103: #{tpu_custom_call.1} parent=95 // pred_region
          %s1152 = sand.u32 %s310, 1
          %s1153 = scalar_lea.sflag [#allocation15], %s1152
          %s1154 = sand.u32 %s310, 1
          %s1155 = smul.addr %s1154, 4
          %s1156 = scalar_lea.vmem [#allocation14], %s1155
          %1157 = dma.done %s1153, 64
        $region104: #{tpu_custom_call.1} parent=95 // pred_fallthru
          _
      $region96: #{tpu_custom_call.1} parent=5 // pred_fallthru
        _
    $region6: #{tpu_custom_call.1} parent=1 // loop_footer
      %s31 = sadd.s32 1, %s27
    $region7: #{tpu_custom_call.1} parent=1 // loop_footer_branch
      %26 = sbr.rel target = $region3
    $region8: #{tpu_custom_call.1} parent=1 // loop_exit
      _
    %1158 = vsyncpa [#allocation5], 1
    %s1159 = scalar_lea.sflag [#allocation5], 1
    %1160 = vsyncpa %s1159, 1
    %1161 = vsyncpa [#allocation8], 1
    %1162 = vsyncpa [#allocation11], 1
    %1163 = vsyncpa [#allocation6], 1
    %s1164 = scalar_lea.sflag [#allocation6], 1
    %1165 = vsyncpa %s1164, 1
    %1166 = vsyncpa [#allocation15], 1
    %s1167 = scalar_lea.sflag [#allocation15], 1
    %1168 = vsyncpa %s1167, 1

// kernel: tpu_custom_call.1
$region0: #{tpu_custom_call.1}
  #allocation0 [shape = 'u32[]', space=smem, size = 0x4, offset = 0x4, fixed_abs, tag = 'smem constant byte address 0x4 - core index']
  #allocation1 [shape = 'u32[144,128]{1,0:T(1,128)}', space=vmem, size = 0x12000, scoped, tag = 'internal scratch']
  #allocation2 [shape = 'bf16[8,32]{1,0:T(8,128)(2,1)}', space=vmem, size = 0x800, scoped, tag = 'scratch operand']
  #allocation3 [shape = 'bf16[8,8]{1,0:T(8,128)(2,1)}', space=vmem, size = 0x800, scoped, tag = 'scratch operand']
  %s0 = inlined_call_operand.vmem [shape: bf16[2,8,32], index: 0, kind: input, shape index: {}]
  %s1 = inlined_call_operand.hbm [shape: bf16[2,8,32], index: 1, kind: input, shape index: {}]
  %s2 = inlined_call_operand.hbm [shape: bf16[2,8,32], index: 2, kind: input, shape index: {}]
  %s3 = inlined_call_operand.vmem [shape: bf16[32,32], index: 3, kind: input, shape index: {}]
  %s4 = inlined_call_operand.hbm [shape: f32[1,32], index: 4, kind: input, shape index: {}]
  %s5 = inlined_call_operand.hbm [shape: bf16[32,32], index: 5, kind: input, shape index: {}]
  %s6 = inlined_call_operand.hbm [shape: f32[1,32], index: 6, kind: input, shape index: {}]
  %s7 = inlined_call_operand.vmem [shape: bf16[32,8], index: 7, kind: input, shape index: {}]
  %s8 = inlined_call_operand.vmem [shape: f32[1,8], index: 8, kind: input, shape index: {}]
  %s9 = inlined_call_operand.vmem [shape: bf16[8,32], index: 9, kind: input, shape index: {}]
  %s10 = inlined_call_operand.hbm [shape: f32[2,8,32], index: 10, kind: output, shape index: {0}]
  %s11 = inlined_call_operand.hbm [shape: bf16[2,8,32], index: 11, kind: output, shape index: {1}]
  %12 = xla_tuple %s10, %s11
  %s13 = sld [smem:[#allocation0]]
  $region105: #{tpu_custom_call.1} parent=0
    _
  %s15 = ssub.s32 1, %s13
  %s16 = scalar_select 0, %s15, %s13
  $region1: #{tpu_custom_call.1} parent=0
    #allocation4 [shape = 'u8[4096]{0}', space=vmem, size = 0x1000, scoped, tag = 'input window, operand 1']
    #allocation5 [shape = 's32[2]{0}', space=sflag, size = 0x8, scoped, tag = 'scoped memory for tpu_custom_call.1']
    #allocation6 [shape = 's32[2]{0}', space=sflag, size = 0x8, scoped, tag = 'scoped memory for tpu_custom_call.1']
    #allocation7 [shape = 'u8[4096]{0}', space=vmem, size = 0x1000, scoped, tag = 'input window, operand 2']
    #allocation8 [shape = 's32[2]{0}', space=sflag, size = 0x8, scoped, tag = 'scoped memory for tpu_custom_call.1']
    #allocation9 [shape = 'u8[512]{0}', space=vmem, size = 0x400, scoped, tag = 'input window, operand 4, single buffered']
    #allocation10 [shape = 'u8[8192]{0}', space=vmem, size = 0x2000, scoped, tag = 'input window, operand 5, single buffered']
    #allocation11 [shape = 's32[1]{0}', space=sflag, size = 0x4, scoped, tag = 'scoped memory for tpu_custom_call.1']
    #allocation12 [shape = 'u8[512]{0}', space=vmem, size = 0x400, scoped, tag = 'input window, operand 6, single buffered']
    #allocation13 [shape = 'u8[8192]{0}', space=vmem, size = 0x2000, scoped, tag = 'output window, operand 0']
    #allocation14 [shape = 'u8[4096]{0}', space=vmem, size = 0x1000, scoped, tag = 'output window, operand 1']
    #allocation15 [shape = 's32[2]{0}', space=sflag, size = 0x8, scoped, tag = 'scoped memory for tpu_custom_call.1']
    %17 = vsyncpa [#allocation5], 0
    %s18 = scalar_lea.sflag [#allocation5], 1
    %19 = vsyncpa %s18, 0
    %20 = vsyncpa [#allocation8], 0
    %s21 = scalar_lea.sflag [#allocation8], 1
    %22 = vsyncpa %s21, 0
    %23 = vsyncpa [#allocation11], 0
    %24 = vsyncpa [#allocation6], 0
    %s25 = scalar_lea.sflag [#allocation6], 1
    %26 = vsyncpa %s25, 0
    %27 = vsyncpa [#allocation15], 0
    %s28 = scalar_lea.sflag [#allocation15], 1
    %29 = vsyncpa %s28, 0
    loop: start=0, step=1, limit=4
    $region2: #{tpu_custom_call.1} parent=1 // loop_pre_header
      _
    $region3: #{tpu_custom_call.1} parent=1 // loop_header
      %s31 = sphi 0, %s35
      %p32 = scmp.ge.s32.totalorder %s31, 4
      %s38 = sphi 0, %s50
      %s39 = sphi 0, %s46
      %s40 = sphi 0, %s38
      %s41 = sphi 0, %s39
      %s42 = sphi 0, %s40
      %s43 = sphi 0, %s41
      %s55 = sphi 0, %s57
      %s58 = sphi 0, %s55
      %s59 = sphi 0, %s58
      %s75 = sphi 0, %s59
      %s81 = sphi 0, %s83
      %s84 = sphi 0, %s81
      %s85 = sphi 0, %s84
      %s101 = sphi 0, %s85
      %s107 = sphi 0, %s109
      %s110 = sphi 0, %s107
      %s111 = sphi 0, %s110
      %s127 = sphi 0, %s111
      %s131 = sphi 0, %s131
      %s133 = sphi 0, %s131
      %s134 = sphi 0, %s133
      %s148 = sphi 0, %s134
      %s152 = sphi 0, %s152
      %s154 = sphi 0, %s152
      %s155 = sphi 0, %s154
      %s169 = sphi 0, %s155
      %s173 = sphi 0, %s173
      %s175 = sphi 0, %s173
      %s176 = sphi 0, %s175
      %s190 = sphi 0, %s176
      %s194 = sphi 0, %s194
      %s196 = sphi 0, %s194
      %s197 = sphi 0, %s196
      %s211 = sphi 0, %s197
      %s215 = sphi 0, %s215
      %s217 = sphi 0, %s215
      %s218 = sphi 0, %s217
      %s232 = sphi 0, %s218
      %s236 = sphi 0, %s236
      %s238 = sphi 0, %s236
      %s239 = sphi 0, %s238
      %s253 = sphi 0, %s239
      %s257 = sphi 0, %s257
      %s259 = sphi 0, %s257
      %s260 = sphi 0, %s259
      %s274 = sphi 0, %s260
      %s282 = sphi 0, %s284
      %s285 = sphi 0, %s282
      %s286 = sphi 0, %s285
      %s302 = sphi 0, %s286
      %s310 = sphi 0, %s312
      %s313 = sphi 0, %s310
      %s314 = sphi 0, %s313
      %s330 = sphi 0, %s314
    $region4: #{tpu_custom_call.1} parent=1 // loop_header_branch
      %34 = sbr.rel (%p32) target = $region8
    $region5: #{tpu_custom_call.1} parent=1 // loop_body
      %s36 = ssub.s32 %s31, 1
      %s37 = ssub.s32 %s31, 2
      %s44 = sadd.s32 1, %s39
      %p45 = scmp.ge.s32.totalorder %s44, 1
      %s46 = scalar_select %p45, 0, %s44
      %s47 = sadd.s32 1, %s38
      %s48 = scalar_select %p45, %s47, %s38
      %p49 = scmp.ge.s32.totalorder %s48, 2
      %s50 = scalar_select %p49, 0, %s48
      %s51 = ssub.s32 %s38, %s50
      %s52 = ssub.s32 %s39, %s46
      %s53 = sor.u32 %s51, %s52
      %p54 = scmp.eq.s32.totalorder %s53, 0
      %s56 = sadd.s32 %s55, 1
      %s57 = scalar_select %p54, %s55, %s56
      %p60 = pneg %p54
      %p61 = scmp.eq.s32.totalorder %s31, 1
      %p62 = por %p60, %p61
      %p63 = scmp.ne.s32.totalorder %s55, %s58
      %p64 = scmp.eq.s32.totalorder %s31, 0
      %p65 = por %p63, %p64
      %p66 = scmp.ne.s32.totalorder %s55, %s58
      %p67 = scmp.eq.s32.totalorder %s36, 1
      %p68 = por %p66, %p67
      %p69 = scmp.ne.s32.totalorder %s58, %s59
      %p70 = scmp.eq.s32.totalorder %s36, 0
      %p71 = por %p69, %p70
      %p72 = scmp.ne.s32.totalorder %s58, %s59
      %p73 = scmp.eq.s32.totalorder %s37, 1
      %p74 = por %p72, %p73
      %p76 = scmp.ne.s32.totalorder %s59, %s75
      %p77 = scmp.eq.s32.totalorder %s37, 0
      %p78 = por %p76, %p77
      %s79 = ssub.s32 %s38, %s50
      %p80 = scmp.eq.s32.totalorder %s79, 0
      %s82 = sadd.s32 %s81, 1
      %s83 = scalar_select %p80, %s81, %s82
      %p86 = pneg %p80
      %p87 = scmp.eq.s32.totalorder %s31, 1
      %p88 = por %p86, %p87
      %p89 = scmp.ne.s32.totalorder %s81, %s84
      %p90 = scmp.eq.s32.totalorder %s31, 0
      %p91 = por %p89, %p90
      %p92 = scmp.ne.s32.totalorder %s81, %s84
      %p93 = scmp.eq.s32.totalorder %s36, 1
      %p94 = por %p92, %p93
      %p95 = scmp.ne.s32.totalorder %s84, %s85
      %p96 = scmp.eq.s32.totalorder %s36, 0
      %p97 = por %p95, %p96
      %p98 = scmp.ne.s32.totalorder %s84, %s85
      %p99 = scmp.eq.s32.totalorder %s37, 1
      %p100 = por %p98, %p99
      %p102 = scmp.ne.s32.totalorder %s85, %s101
      %p103 = scmp.eq.s32.totalorder %s37, 0
      %p104 = por %p102, %p103
      %s105 = ssub.s32 %s38, %s50
      %p106 = scmp.eq.s32.totalorder %s105, 0
      %s108 = sadd.s32 %s107, 1
      %s109 = scalar_select %p106, %s107, %s108
      %p112 = pneg %p106
      %p113 = scmp.eq.s32.totalorder %s31, 1
      %p114 = por %p112, %p113
      %p115 = scmp.ne.s32.totalorder %s107, %s110
      %p116 = scmp.eq.s32.totalorder %s31, 0
      %p117 = por %p115, %p116
      %p118 = scmp.ne.s32.totalorder %s107, %s110
      %p119 = scmp.eq.s32.totalorder %s36, 1
      %p120 = por %p118, %p119
      %p121 = scmp.ne.s32.totalorder %s110, %s111
      %p122 = scmp.eq.s32.totalorder %s36, 0
      %p123 = por %p121, %p122
      %p124 = scmp.ne.s32.totalorder %s110, %s111
      %p125 = scmp.eq.s32.totalorder %s37, 1
      %p126 = por %p124, %p125
      %p128 = scmp.ne.s32.totalorder %s111, %s127
      %p129 = scmp.eq.s32.totalorder %s37, 0
      %p130 = por %p128, %p129
      %s132 = sadd.s32 %s131, 1
      %p135 = scmp.eq.s32.totalorder %s31, 1
      %p136 = scmp.ne.s32.totalorder %s131, %s133
      %p137 = scmp.eq.s32.totalorder %s31, 0
      %p138 = por %p136, %p137
      %p139 = scmp.ne.s32.totalorder %s131, %s133
      %p140 = scmp.eq.s32.totalorder %s36, 1
      %p141 = por %p139, %p140
      %p142 = scmp.ne.s32.totalorder %s133, %s134
      %p143 = scmp.eq.s32.totalorder %s36, 0
      %p144 = por %p142, %p143
      %p145 = scmp.ne.s32.totalorder %s133, %s134
      %p146 = scmp.eq.s32.totalorder %s37, 1
      %p147 = por %p145, %p146
      %p149 = scmp.ne.s32.totalorder %s134, %s148
      %p150 = scmp.eq.s32.totalorder %s37, 0
      %p151 = por %p149, %p150
      %s153 = sadd.s32 %s152, 1
      %p156 = scmp.eq.s32.totalorder %s31, 1
      %p157 = scmp.ne.s32.totalorder %s152, %s154
      %p158 = scmp.eq.s32.totalorder %s31, 0
      %p159 = por %p157, %p158
      %p160 = scmp.ne.s32.totalorder %s152, %s154
      %p161 = scmp.eq.s32.totalorder %s36, 1
      %p162 = por %p160, %p161
      %p163 = scmp.ne.s32.totalorder %s154, %s155
      %p164 = scmp.eq.s32.totalorder %s36, 0
      %p165 = por %p163, %p164
      %p166 = scmp.ne.s32.totalorder %s154, %s155
      %p167 = scmp.eq.s32.totalorder %s37, 1
      %p168 = por %p166, %p167
      %p170 = scmp.ne.s32.totalorder %s155, %s169
      %p171 = scmp.eq.s32.totalorder %s37, 0
      %p172 = por %p170, %p171
      %s174 = sadd.s32 %s173, 1
      %p177 = scmp.eq.s32.totalorder %s31, 1
      %p178 = scmp.ne.s32.totalorder %s173, %s175
      %p179 = scmp.eq.s32.totalorder %s31, 0
      %p180 = por %p178, %p179
      %p181 = scmp.ne.s32.totalorder %s173, %s175
      %p182 = scmp.eq.s32.totalorder %s36, 1
      %p183 = por %p181, %p182
      %p184 = scmp.ne.s32.totalorder %s175, %s176
      %p185 = scmp.eq.s32.totalorder %s36, 0
      %p186 = por %p184, %p185
      %p187 = scmp.ne.s32.totalorder %s175, %s176
      %p188 = scmp.eq.s32.totalorder %s37, 1
      %p189 = por %p187, %p188
      %p191 = scmp.ne.s32.totalorder %s176, %s190
      %p192 = scmp.eq.s32.totalorder %s37, 0
      %p193 = por %p191, %p192
      %s195 = sadd.s32 %s194, 1
      %p198 = scmp.eq.s32.totalorder %s31, 1
      %p199 = scmp.ne.s32.totalorder %s194, %s196
      %p200 = scmp.eq.s32.totalorder %s31, 0
      %p201 = por %p199, %p200
      %p202 = scmp.ne.s32.totalorder %s194, %s196
      %p203 = scmp.eq.s32.totalorder %s36, 1
      %p204 = por %p202, %p203
      %p205 = scmp.ne.s32.totalorder %s196, %s197
      %p206 = scmp.eq.s32.totalorder %s36, 0
      %p207 = por %p205, %p206
      %p208 = scmp.ne.s32.totalorder %s196, %s197
      %p209 = scmp.eq.s32.totalorder %s37, 1
      %p210 = por %p208, %p209
      %p212 = scmp.ne.s32.totalorder %s197, %s211
      %p213 = scmp.eq.s32.totalorder %s37, 0
      %p214 = por %p212, %p213
      %s216 = sadd.s32 %s215, 1
      %p219 = scmp.eq.s32.totalorder %s31, 1
      %p220 = scmp.ne.s32.totalorder %s215, %s217
      %p221 = scmp.eq.s32.totalorder %s31, 0
      %p222 = por %p220, %p221
      %p223 = scmp.ne.s32.totalorder %s215, %s217
      %p224 = scmp.eq.s32.totalorder %s36, 1
      %p225 = por %p223, %p224
      %p226 = scmp.ne.s32.totalorder %s217, %s218
      %p227 = scmp.eq.s32.totalorder %s36, 0
      %p228 = por %p226, %p227
      %p229 = scmp.ne.s32.totalorder %s217, %s218
      %p230 = scmp.eq.s32.totalorder %s37, 1
      %p231 = por %p229, %p230
      %p233 = scmp.ne.s32.totalorder %s218, %s232
      %p234 = scmp.eq.s32.totalorder %s37, 0
      %p235 = por %p233, %p234
      %s237 = sadd.s32 %s236, 1
      %p240 = scmp.eq.s32.totalorder %s31, 1
      %p241 = scmp.ne.s32.totalorder %s236, %s238
      %p242 = scmp.eq.s32.totalorder %s31, 0
      %p243 = por %p241, %p242
      %p244 = scmp.ne.s32.totalorder %s236, %s238
      %p245 = scmp.eq.s32.totalorder %s36, 1
      %p246 = por %p244, %p245
      %p247 = scmp.ne.s32.totalorder %s238, %s239
      %p248 = scmp.eq.s32.totalorder %s36, 0
      %p249 = por %p247, %p248
      %p250 = scmp.ne.s32.totalorder %s238, %s239
      %p251 = scmp.eq.s32.totalorder %s37, 1
      %p252 = por %p250, %p251
      %p254 = scmp.ne.s32.totalorder %s239, %s253
      %p255 = scmp.eq.s32.totalorder %s37, 0
      %p256 = por %p254, %p255
      %s258 = sadd.s32 %s257, 1
      %p261 = scmp.eq.s32.totalorder %s31, 1
      %p262 = scmp.ne.s32.totalorder %s257, %s259
      %p263 = scmp.eq.s32.totalorder %s31, 0
      %p264 = por %p262, %p263
      %p265 = scmp.ne.s32.totalorder %s257, %s259
      %p266 = scmp.eq.s32.totalorder %s36, 1
      %p267 = por %p265, %p266
      %p268 = scmp.ne.s32.totalorder %s259, %s260
      %p269 = scmp.eq.s32.totalorder %s36, 0
      %p270 = por %p268, %p269
      %p271 = scmp.ne.s32.totalorder %s259, %s260
      %p272 = scmp.eq.s32.totalorder %s37, 1
      %p273 = por %p271, %p272
      %p275 = scmp.ne.s32.totalorder %s260, %s274
      %p276 = scmp.eq.s32.totalorder %s37, 0
      %p277 = por %p275, %p276
      %s278 = ssub.s32 %s38, %s50
      %s279 = ssub.s32 %s39, %s46
      %s280 = sor.u32 %s278, %s279
      %p281 = scmp.eq.s32.totalorder %s280, 0
      %s283 = sadd.s32 %s282, 1
      %s284 = scalar_select %p281, %s282, %s283
      %p287 = pneg %p281
      %p288 = scmp.eq.s32.totalorder %s31, 1
      %p289 = por %p287, %p288
      %p290 = scmp.ne.s32.totalorder %s282, %s285
      %p291 = scmp.eq.s32.totalorder %s31, 0
      %p292 = por %p290, %p291
      %p293 = scmp.ne.s32.totalorder %s282, %s285
      %p294 = scmp.eq.s32.totalorder %s36, 1
      %p295 = por %p293, %p294
      %p296 = scmp.ne.s32.totalorder %s285, %s286
      %p297 = scmp.eq.s32.totalorder %s36, 0
      %p298 = por %p296, %p297
      %p299 = scmp.ne.s32.totalorder %s285, %s286
      %p300 = scmp.eq.s32.totalorder %s37, 1
      %p301 = por %p299, %p300
      %p303 = scmp.ne.s32.totalorder %s286, %s302
      %p304 = scmp.eq.s32.totalorder %s37, 0
      %p305 = por %p303, %p304
      %s306 = ssub.s32 %s38, %s50
      %s307 = ssub.s32 %s39, %s46
      %s308 = sor.u32 %s306, %s307
      %p309 = scmp.eq.s32.totalorder %s308, 0
      %s311 = sadd.s32 %s310, 1
      %s312 = scalar_select %p309, %s310, %s311
      %p315 = pneg %p309
      %p316 = scmp.eq.s32.totalorder %s31, 1
      %p317 = por %p315, %p316
      %p318 = scmp.ne.s32.totalorder %s310, %s313
      %p319 = scmp.eq.s32.totalorder %s31, 0
      %p320 = por %p318, %p319
      %p321 = scmp.ne.s32.totalorder %s310, %s313
      %p322 = scmp.eq.s32.totalorder %s36, 1
      %p323 = por %p321, %p322
      %p324 = scmp.ne.s32.totalorder %s313, %s314
      %p325 = scmp.eq.s32.totalorder %s36, 0
      %p326 = por %p324, %p325
      %p327 = scmp.ne.s32.totalorder %s313, %s314
      %p328 = scmp.eq.s32.totalorder %s37, 1
      %p329 = por %p327, %p328
      %p331 = scmp.ne.s32.totalorder %s314, %s330
      %p332 = scmp.eq.s32.totalorder %s37, 0
      %p333 = por %p331, %p332
      %p334 = scmp.le.s32.totalorder 1, %s31
      %p335 = scmp.lt.s32.totalorder %s31, 3
      %p336 = pnand %p334, %p335
      %p337 = pneg %p336
      // Predicated region
      $region9: #{tpu_custom_call.1} parent=5 // pred_check
        _
      $region10: #{tpu_custom_call.1} parent=5 // pred_check_branch
        %339 = sbr.rel (%p336) target = $region12
      $region11: #{tpu_custom_call.1} parent=5 // pred_region
        %s340 = ssub.s32 %s31, 1
        // Predicated region
        $region13: #{tpu_custom_call.1} parent=11 // pred_check
          %p341 = pneg %p144
        $region14: #{tpu_custom_call.1} parent=11 // pred_check_branch
          %343 = sbr.rel (%p341) target = $region16
        $region15: #{tpu_custom_call.1} parent=11 // pred_region
          _
        $region16: #{tpu_custom_call.1} parent=11 // pred_fallthru
          _
        // Predicated region
        $region17: #{tpu_custom_call.1} parent=11 // pred_check
          %p344 = pneg %p165
        $region18: #{tpu_custom_call.1} parent=11 // pred_check_branch
          %346 = sbr.rel (%p344) target = $region20
        $region19: #{tpu_custom_call.1} parent=11 // pred_region
          %s348 = ssub.s32 16, 16
          %349 = vsyncadd [#allocation8], %s348
          %s351 = sshll.u32 [#allocation9], 4
          %s352 = int_to_ptr.vmem [resolvable:$true] %s351
          %354 = dma.hbm_to_vmem [thread:$0]  %s4, 16, %s352, [#allocation8]
        $region20: #{tpu_custom_call.1} parent=11 // pred_fallthru
          _
        // Predicated region
        $region21: #{tpu_custom_call.1} parent=11 // pred_check
          %p355 = pneg %p186
        $region22: #{tpu_custom_call.1} parent=11 // pred_check_branch
          %357 = sbr.rel (%p355) target = $region24
        $region23: #{tpu_custom_call.1} parent=11 // pred_region
          %s359 = ssub.s32 256, 256
          %360 = vsyncadd [#allocation11], %s359
          %s361 = sshll.u32 [#allocation10], 4
          %s362 = int_to_ptr.vmem [resolvable:$true] %s361
          %367 = dma.hbm_to_vmem [thread:$0]  %s5, 256, %s362, [#allocation11], 64, 64, 4
        $region24: #{tpu_custom_call.1} parent=11 // pred_fallthru
          _
        // Predicated region
        $region25: #{tpu_custom_call.1} parent=11 // pred_check
          %p368 = pneg %p207
        $region26: #{tpu_custom_call.1} parent=11 // pred_check_branch
          %370 = sbr.rel (%p368) target = $region28
        $region27: #{tpu_custom_call.1} parent=11 // pred_region
          %s372 = ssub.s32 16, 16
          %373 = vsyncadd [#allocation11], %s372
          %s375 = sshll.u32 [#allocation12], 4
          %s376 = int_to_ptr.vmem [resolvable:$true] %s375
          %378 = dma.hbm_to_vmem [thread:$0]  %s6, 16, %s376, [#allocation11]
        $region28: #{tpu_custom_call.1} parent=11 // pred_fallthru
          _
        // Predicated region
        $region29: #{tpu_custom_call.1} parent=11 // pred_check
          %p379 = pneg %p228
        $region30: #{tpu_custom_call.1} parent=11 // pred_check_branch
          %381 = sbr.rel (%p379) target = $region32
        $region31: #{tpu_custom_call.1} parent=11 // pred_region
          _
        $region32: #{tpu_custom_call.1} parent=11 // pred_fallthru
          _
        // Predicated region
        $region33: #{tpu_custom_call.1} parent=11 // pred_check
          %p382 = pneg %p249
        $region34: #{tpu_custom_call.1} parent=11 // pred_check_branch
          %384 = sbr.rel (%p382) target = $region36
        $region35: #{tpu_custom_call.1} parent=11 // pred_region
          _
        $region36: #{tpu_custom_call.1} parent=11 // pred_fallthru
          _
        // Predicated region
        $region37: #{tpu_custom_call.1} parent=11 // pred_check
          %p385 = pneg %p270
        $region38: #{tpu_custom_call.1} parent=11 // pred_check_branch
          %387 = sbr.rel (%p385) target = $region40
        $region39: #{tpu_custom_call.1} parent=11 // pred_region
          _
        $region40: #{tpu_custom_call.1} parent=11 // pred_fallthru
          _
      $region12: #{tpu_custom_call.1} parent=5 // pred_fallthru
        _
      %p388 = scmp.lt.s32.totalorder %s31, 2
      // Predicated region
      $region41: #{tpu_custom_call.1} parent=5 // pred_check
        %p389 = pneg %p388
      $region42: #{tpu_custom_call.1} parent=5 // pred_check_branch
        %391 = sbr.rel (%p389) target = $region44
      $region43: #{tpu_custom_call.1} parent=5 // pred_region
        // Predicated region
        $region45: #{tpu_custom_call.1} parent=43 // pred_check
          %p392 = pneg %p65
        $region46: #{tpu_custom_call.1} parent=43 // pred_check_branch
          %394 = sbr.rel (%p392) target = $region48
        $region47: #{tpu_custom_call.1} parent=43 // pred_region
          %p395 = scmp.lt.s32.totalorder %s38, 1
          %s396 = scalar_select %p395, %s38, 1
          %p397 = scmp.lt.s32.totalorder %s39, 0
          %s398 = scalar_select %p397, %s39, 0
          %s399 = sadd.s32 %s398, %s396
          %s400 = smul.addr %s399, 4
          %s401 = scalar_lea.vmem %s0, %s400
        $region48: #{tpu_custom_call.1} parent=43 // pred_fallthru
          _
        // Predicated region
        $region49: #{tpu_custom_call.1} parent=43 // pred_check
          %p402 = pneg %p91
        $region50: #{tpu_custom_call.1} parent=43 // pred_check_branch
          %404 = sbr.rel (%p402) target = $region52
        $region51: #{tpu_custom_call.1} parent=43 // pred_region
          %s405 = sand.u32 %s81, 1
          %s406 = scalar_lea.sflag [#allocation5], %s405
          %s407 = sand.u32 %s81, 1
          %s408 = smul.addr %s407, 4
          %s409 = scalar_lea.vmem [#allocation4], %s408
          %s411 = ssub.s32 64, 64
          %412 = vsyncadd %s406, %s411
          %s413 = smul.addr %s38, 64
          %s414 = scalar_lea.hbm %s1, %s413
          %s416 = sshll.u32 %s409, 4
          %s417 = int_to_ptr.vmem [resolvable:$true] %s416
          %419 = dma.hbm_to_vmem [thread:$0]  %s414, 64, %s417, %s406
        $region52: #{tpu_custom_call.1} parent=43 // pred_fallthru
          _
        // Predicated region
        $region53: #{tpu_custom_call.1} parent=43 // pred_check
          %p420 = pneg %p117
        $region54: #{tpu_custom_call.1} parent=43 // pred_check_branch
          %422 = sbr.rel (%p420) target = $region56
        $region55: #{tpu_custom_call.1} parent=43 // pred_region
          %s423 = sand.u32 %s31, 1
          %s424 = scalar_lea.sflag [#allocation8], %s423
          %s425 = sand.u32 %s107, 1
          %s426 = smul.addr %s425, 4
          %s427 = scalar_lea.vmem [#allocation7], %s426
          %s429 = ssub.s32 64, 64
          %430 = vsyncadd %s424, %s429
          %s431 = smul.addr %s38, 64
          %s432 = scalar_lea.hbm %s2, %s431
          %s434 = sshll.u32 %s427, 4
          %s435 = int_to_ptr.vmem [resolvable:$true] %s434
          %437 = dma.hbm_to_vmem [thread:$0]  %s432, 64, %s435, %s424
        $region56: #{tpu_custom_call.1} parent=43 // pred_fallthru
          _
      $region44: #{tpu_custom_call.1} parent=5 // pred_fallthru
        _
      %p438 = scmp.le.s32.totalorder 1, %s31
      %p439 = scmp.lt.s32.totalorder %s31, 3
      %p440 = pnand %p438, %p439
      %p441 = pneg %p440
      // Predicated region
      $region57: #{tpu_custom_call.1} parent=5 // pred_check
        _
      $region58: #{tpu_custom_call.1} parent=5 // pred_check_branch
        %443 = sbr.rel (%p440) target = $region60
      $region59: #{tpu_custom_call.1} parent=5 // pred_region
        %s444 = ssub.s32 %s31, 1
        %s445 = sand.u32 %s84, 1
        %s446 = scalar_lea.sflag [#allocation5], %s445
        %s447 = sand.u32 %s84, 1
        %s448 = smul.addr %s447, 4
        %s449 = scalar_lea.vmem [#allocation4], %s448
        // Predicated region
        $region61: #{tpu_custom_call.1} parent=59 // pred_check
          %p450 = pneg %p97
        $region62: #{tpu_custom_call.1} parent=59 // pred_check_branch
          %452 = sbr.rel (%p450) target = $region64
        $region63: #{tpu_custom_call.1} parent=59 // pred_region
          %453 = dma.done %s446, 64
        $region64: #{tpu_custom_call.1} parent=59 // pred_fallthru
          _
        %s454 = sand.u32 %s36, 1
        %s455 = scalar_lea.sflag [#allocation8], %s454
        %s456 = sand.u32 %s110, 1
        %s457 = smul.addr %s456, 4
        %s458 = scalar_lea.vmem [#allocation7], %s457
        // Predicated region
        $region65: #{tpu_custom_call.1} parent=59 // pred_check
          %p459 = pneg %p123
        $region66: #{tpu_custom_call.1} parent=59 // pred_check_branch
          %461 = sbr.rel (%p459) target = $region68
        $region67: #{tpu_custom_call.1} parent=59 // pred_region
          %462 = dma.done %s455, 64
        $region68: #{tpu_custom_call.1} parent=59 // pred_fallthru
          _
        // Predicated region
        $region69: #{tpu_custom_call.1} parent=59 // pred_check
          %p463 = pneg %p165
        $region70: #{tpu_custom_call.1} parent=59 // pred_check_branch
          %465 = sbr.rel (%p463) target = $region72
        $region71: #{tpu_custom_call.1} parent=59 // pred_region
          %466 = dma.done [#allocation8], 16
        $region72: #{tpu_custom_call.1} parent=59 // pred_fallthru
          _
        // Predicated region
        $region73: #{tpu_custom_call.1} parent=59 // pred_check
          %p467 = pneg %p186
        $region74: #{tpu_custom_call.1} parent=59 // pred_check_branch
          %469 = sbr.rel (%p467) target = $region76
        $region75: #{tpu_custom_call.1} parent=59 // pred_region
          %470 = dma.done [#allocation11], 256
        $region76: #{tpu_custom_call.1} parent=59 // pred_fallthru
          _
        // Predicated region
        $region77: #{tpu_custom_call.1} parent=59 // pred_check
          %p471 = pneg %p207
        $region78: #{tpu_custom_call.1} parent=59 // pred_check_branch
          %473 = sbr.rel (%p471) target = $region80
        $region79: #{tpu_custom_call.1} parent=59 // pred_region
          %474 = dma.done [#allocation11], 16
        $region80: #{tpu_custom_call.1} parent=59 // pred_fallthru
          _
        %p475 = scmp.lt.s32.totalorder %s40, 1
        %s476 = scalar_select %p475, %s40, 1
        %p477 = scmp.lt.s32.totalorder %s41, 0
        %s478 = scalar_select %p477, %s41, 0
        %s479 = sadd.s32 %s478, %s476
        %s480 = smul.addr %s479, 4
        %s481 = scalar_lea.vmem %s0, %s480
        %p482 = pneg %p71
        %p483 = pneg %p68
        %s484 = sand.u32 %s84, 1
        %s485 = scalar_lea.sflag [#allocation5], %s484
        %s486 = sand.u32 %s84, 1
        %s487 = smul.addr %s486, 4
        %s488 = scalar_lea.vmem [#allocation4], %s487
        %p489 = pneg %p97
        %p490 = pneg %p94
        %s491 = sand.u32 %s36, 1
        %s492 = scalar_lea.sflag [#allocation8], %s491
        %s493 = sand.u32 %s110, 1
        %s494 = smul.addr %s493, 4
        %s495 = scalar_lea.vmem [#allocation7], %s494
        %p496 = pneg %p123
        %p497 = pneg %p120
        %p498 = pneg %p144
        %p499 = pneg %p141
        %p500 = pneg %p165
        %p501 = pneg %p162
        %p502 = pneg %p186
        %p503 = pneg %p183
        %p504 = pneg %p207
        %p505 = pneg %p204
        %p506 = pneg %p228
        %p507 = pneg %p225
        %p508 = pneg %p249
        %p509 = pneg %p246
        %p510 = pneg %p270
        %p511 = pneg %p267
        %p512 = pneg %p298
        %p513 = pneg %p295
        %s514 = sand.u32 %s285, 1
        %s515 = scalar_lea.sflag [#allocation6], %s514
        %s516 = sand.u32 %s285, 1
        %s517 = smul.addr %s516, 8
        %s518 = scalar_lea.vmem [#allocation13], %s517
        %p519 = pneg %p326
        %p520 = pneg %p323
        %s521 = sand.u32 %s313, 1
        %s522 = scalar_lea.sflag [#allocation15], %s521
        %s523 = sand.u32 %s313, 1
        %s524 = smul.addr %s523, 4
        %s525 = scalar_lea.vmem [#allocation14], %s524
        %p526 = scmp.lt.s32.totalorder %s40, 1
        %s527 = scalar_select %p526, %s40, 1
        %p528 = scmp.lt.s32.totalorder %s41, 0
        %s529 = scalar_select %p528, %s41, 0
        %s530 = sadd.s32 %s529, %s527
        %s531 = smul.addr %s530, 4
        %s532 = scalar_lea.vmem %s0, %s531
        %p534 = scmp.eq.s32.totalorder %s41, 0
        // Predicated region
        $region81: #{tpu_custom_call.1} parent=59 // pred_check
          %p535 = pneg %p534
        $region82: #{tpu_custom_call.1} parent=59 // pred_check_branch
          %537 = sbr.rel (%p535) target = $region84
        $region83: #{tpu_custom_call.1} parent=59 // pred_region
          %v538 = vld [vmem:[%s449] sm:$0xf]
          %v539 = vld [vmem:[%s458] sm:$0xf]
          %v540 = vld [vmem:[#allocation10] sm:$0xf]
          %v541 = vld [vmem:[#allocation10 + $0x4] sm:$0xf]
          %v542 = vld [vmem:[#allocation10 + $0x8] sm:$0xf]
          %v543 = vld [vmem:[#allocation10 + $0xc] sm:$0xf]
          %v544 = vld [vmem:[#allocation12] sm:$0x1]
          %v546 = vlaneseq
          %v547 = vshrl.u32 %v546, 7
          %v548 = vsub.s32 0, %v547
          %v549 = vrot.slane %v544, %v548
          %v555 = vunpack.c.l.b16 %v540
          %v556 = vunpack.c.l.b16 %v541
          %v557 = vunpack.c.l.b16 %v542
          %v558 = vunpack.c.l.b16 %v543
          %v559 = vpack.c.b16 %v556, %v555
          %v560 = vpack.c.b16 %v558, %v557
          %vm563 = vcmask 261120
          %v565 = vsel %vm563, %v538, 0
          %567 = vmatprep.subr.bf16.mxu0 0
          %568 = vmatpush1.bf16.msra.mxu0 0
          %569 = vmatprep.subr.bf16.mxu0 0
          %570 = vmatpush1.bf16.msra.mxu0 0
          %571 = vmatprep.subr.bf16.mxu0 0
          %572 = vmatpush1.bf16.msra.mxu0 0
          %573 = vmatprep.subr.bf16.mxu0 0
          %574 = vmatpush1.bf16.msra.mxu0 0
          %575 = vmatprep.subr.bf16.mxu0 0
          %576 = vmatpush1.bf16.msra.mxu0 0
          %577 = vmatprep.subr.bf16.mxu0 0
          %578 = vmatpush1.bf16.msra.mxu0 0
          %579 = vmatprep.subr.bf16.mxu0 0
          %580 = vmatpush1.bf16.msra.mxu0 %v560
          %581 = vmatprep.subr.bf16.mxu0 0
          %582 = vmatpush1.bf16.msra.mxu0 %v559
          %583 = vmatprep.subr.bf16.mxu0 0
          %584 = vmatpush2.bf16.msra.mxu0 0
          %585 = vmatprep.subr.bf16.mxu0 0
          %586 = vmatpush2.bf16.msra.mxu0 0
          %587 = vmatprep.subr.bf16.mxu0 0
          %588 = vmatpush2.bf16.msra.mxu0 0
          %589 = vmatprep.subr.bf16.mxu0 0
          %590 = vmatpush2.bf16.msra.mxu0 0
          %591 = vmatprep.subr.bf16.mxu0 0
          %592 = vmatpush2.bf16.msra.mxu0 0
          %593 = vmatprep.subr.bf16.mxu0 0
          %594 = vmatpush2.bf16.msra.mxu0 0
          %595 = vmatprep.subr.bf16.mxu0 0
          %596 = vmatpush2.bf16.msra.mxu0 0
          %597 = vmatprep.subr.bf16.mxu0 0
          %598 = vmatpush2.bf16.msra.mxu0 0
          %599 = vmatprep.mubr.bf16.mxu0 0
          %600 = vmatmul.mubr.bf16.gmra.mxu0 %v565
          %v601 = vpop.f32.mrf.mxu0
          %v602 = vadd.f32 %v549, %v601
          %v603 = vpop.f32.mrf.mxu0
          %v604 = vpop.f32.mrf.mxu0
          %v605 = vpop.f32.mrf.mxu0
          %606 = vdwg.mxu0
          %v607 = vld [vmem:[%s7] sm:$0xf]
          %v608 = vld [vmem:[%s7 + $0x4] sm:$0xf]
          %v609 = vld [vmem:[%s7 + $0x8] sm:$0xf]
          %v610 = vld [vmem:[%s7 + $0xc] sm:$0xf]
          %v611 = vld [vmem:[%s8] sm:$0x1]
          %v613 = vlaneseq
          %v614 = vshrl.u32 %v613, 7
          %v615 = vsub.s32 0, %v614
          %v616 = vrot.slane %v611, %v615
          %v622 = vunpack.c.l.b16 %v607
          %v623 = vunpack.c.l.b16 %v608
          %v624 = vunpack.c.l.b16 %v609
          %v625 = vunpack.c.l.b16 %v610
          %v626 = vpack.c.b16 %v623, %v622
          %v627 = vpack.c.b16 %v625, %v624
          %v631 = vsel %vm563, %v539, 0
          %633 = vmatprep.subr.bf16.mxu0 0
          %634 = vmatpush1.bf16.msra.mxu0 0
          %635 = vmatprep.subr.bf16.mxu0 0
          %636 = vmatpush1.bf16.msra.mxu0 0
          %637 = vmatprep.subr.bf16.mxu0 0
          %638 = vmatpush1.bf16.msra.mxu0 0
          %639 = vmatprep.subr.bf16.mxu0 0
          %640 = vmatpush1.bf16.msra.mxu0 0
          %641 = vmatprep.subr.bf16.mxu0 0
          %642 = vmatpush1.bf16.msra.mxu0 0
          %643 = vmatprep.subr.bf16.mxu0 0
          %644 = vmatpush1.bf16.msra.mxu0 0
          %645 = vmatprep.subr.bf16.mxu0 0
          %646 = vmatpush1.bf16.msra.mxu0 %v627
          %647 = vmatprep.subr.bf16.mxu0 0
          %648 = vmatpush1.bf16.msra.mxu0 %v626
          %649 = vmatprep.subr.bf16.mxu0 0
          %650 = vmatpush2.bf16.msra.mxu0 0
          %651 = vmatprep.subr.bf16.mxu0 0
          %652 = vmatpush2.bf16.msra.mxu0 0
          %653 = vmatprep.subr.bf16.mxu0 0
          %654 = vmatpush2.bf16.msra.mxu0 0
          %655 = vmatprep.subr.bf16.mxu0 0
          %656 = vmatpush2.bf16.msra.mxu0 0
          %657 = vmatprep.subr.bf16.mxu0 0
          %658 = vmatpush2.bf16.msra.mxu0 0
          %659 = vmatprep.subr.bf16.mxu0 0
          %660 = vmatpush2.bf16.msra.mxu0 0
          %661 = vmatprep.subr.bf16.mxu0 0
          %662 = vmatpush2.bf16.msra.mxu0 0
          %663 = vmatprep.subr.bf16.mxu0 0
          %664 = vmatpush2.bf16.msra.mxu0 0
          %665 = vmatprep.mubr.bf16.mxu0 0
          %666 = vmatmul.mubr.bf16.gmra.mxu0 %v631
          %v667 = vpop.f32.mrf.mxu0
          %v668 = vadd.f32 %v616, %v667
          %v669 = vpop.f32.mrf.mxu0
          %v670 = vpop.f32.mrf.mxu0
          %v671 = vpop.f32.mrf.mxu0
          %672 = vdwg.mxu0
          %v673 = vpack.c.bf16 %v602, %v602
          %vm674 = vcmask 257024
          %675 = vst.msk [vmem:[#allocation2] sm:$0xf] %vm674, %v673
          %v676 = vpack.c.bf16 %v668, %v668
          %vm677 = vcmask 60416
          %678 = vst.msk [vmem:[#allocation3] sm:$0xf] %vm677, %v676
        $region84: #{tpu_custom_call.1} parent=59 // pred_fallthru
          _
        %v679 = vld [vmem:[%s532] sm:$0xf]
        %v680 = vld [vmem:[%s3] sm:$0xf]
        %v681 = vld [vmem:[%s3 + $0x4] sm:$0xf]
        %v682 = vld [vmem:[%s3 + $0x8] sm:$0xf]
        %v683 = vld [vmem:[%s3 + $0xc] sm:$0xf]
        %v684 = vld [vmem:[#allocation9] sm:$0x1]
        %v686 = vlaneseq
        %v687 = vshrl.u32 %v686, 7
        %v688 = vsub.s32 0, %v687
        %v689 = vrot.slane %v684, %v688
        %v695 = vunpack.c.l.b16 %v680
        %v696 = vunpack.c.l.b16 %v681
        %v697 = vunpack.c.l.b16 %v682
        %v698 = vunpack.c.l.b16 %v683
        %v699 = vpack.c.b16 %v696, %v695
        %v700 = vpack.c.b16 %v698, %v697
        %vm703 = vcmask 261120
        %v705 = vsel %vm703, %v679, 0
        %707 = vmatprep.subr.bf16.mxu0 0
        %708 = vmatpush1.bf16.msra.mxu0 0
        %709 = vmatprep.subr.bf16.mxu0 0
        %710 = vmatpush1.bf16.msra.mxu0 0
        %711 = vmatprep.subr.bf16.mxu0 0
        %712 = vmatpush1.bf16.msra.mxu0 0
        %713 = vmatprep.subr.bf16.mxu0 0
        %714 = vmatpush1.bf16.msra.mxu0 0
        %715 = vmatprep.subr.bf16.mxu0 0
        %716 = vmatpush1.bf16.msra.mxu0 0
        %717 = vmatprep.subr.bf16.mxu0 0
        %718 = vmatpush1.bf16.msra.mxu0 0
        %719 = vmatprep.subr.bf16.mxu0 0
        %720 = vmatpush1.bf16.msra.mxu0 %v700
        %721 = vmatprep.subr.bf16.mxu0 0
        %722 = vmatpush1.bf16.msra.mxu0 %v699
        %723 = vmatprep.subr.bf16.mxu0 0
        %724 = vmatpush2.bf16.msra.mxu0 0
        %725 = vmatprep.subr.bf16.mxu0 0
        %726 = vmatpush2.bf16.msra.mxu0 0
        %727 = vmatprep.subr.bf16.mxu0 0
        %728 = vmatpush2.bf16.msra.mxu0 0
        %729 = vmatprep.subr.bf16.mxu0 0
        %730 = vmatpush2.bf16.msra.mxu0 0
        %731 = vmatprep.subr.bf16.mxu0 0
        %732 = vmatpush2.bf16.msra.mxu0 0
        %733 = vmatprep.subr.bf16.mxu0 0
        %734 = vmatpush2.bf16.msra.mxu0 0
        %735 = vmatprep.subr.bf16.mxu0 0
        %736 = vmatpush2.bf16.msra.mxu0 0
        %737 = vmatprep.subr.bf16.mxu0 0
        %738 = vmatpush2.bf16.msra.mxu0 0
        %739 = vmatprep.mubr.bf16.mxu0 0
        %740 = vmatmul.mubr.bf16.gmra.mxu0 %v705
        %v741 = vpop.f32.mrf.mxu0
        %v742 = vadd.f32 %v689, %v741
        %v743 = vpop.f32.mrf.mxu0
        %v744 = vpop.f32.mrf.mxu0
        %v745 = vpop.f32.mrf.mxu0
        %746 = vdwg.mxu0
        %v747 = vpack.c.bf16 %v742, %v742
        %v748 = vld [vmem:[#allocation2] sm:$0xf]
        %v749 = vld [vmem:[#allocation3] sm:$0xf]
        %vm750 = vcmask 64512
        %v752 = vsel %vm750, %v747, 0
        %v755 = vsel %vm750, %v748, 0
        %757 = vmatprep.subr.bf16.mxu0 0
        %758 = vmatpush1.bf16.xpose.msra.mxu0 0
        %759 = vmatprep.subr.bf16.mxu0 0
        %760 = vmatpush1.bf16.xpose.msra.mxu0 0
        %761 = vmatprep.subr.bf16.mxu0 0
        %762 = vmatpush1.bf16.xpose.msra.mxu0 0
        %763 = vmatprep.subr.bf16.mxu0 0
        %764 = vmatpush1.bf16.xpose.msra.mxu0 0
        %765 = vmatprep.subr.bf16.mxu0 0
        %766 = vmatpush1.bf16.xpose.msra.mxu0 0
        %767 = vmatprep.subr.bf16.mxu0 0
        %768 = vmatpush1.bf16.xpose.msra.mxu0 0
        %769 = vmatprep.subr.bf16.mxu0 0
        %770 = vmatpush1.bf16.xpose.msra.mxu0 0
        %771 = vmatprep.subr.bf16.mxu0 0
        %772 = vmatpush1.bf16.xpose.msra.mxu0 %v755
        %773 = vmatprep.subr.bf16.mxu0 0
        %774 = vmatpush2.bf16.xpose.msra.mxu0 0
        %775 = vmatprep.subr.bf16.mxu0 0
        %776 = vmatpush2.bf16.xpose.msra.mxu0 0
        %777 = vmatprep.subr.bf16.mxu0 0
        %778 = vmatpush2.bf16.xpose.msra.mxu0 0
        %779 = vmatprep.subr.bf16.mxu0 0
        %780 = vmatpush2.bf16.xpose.msra.mxu0 0
        %781 = vmatprep.subr.bf16.mxu0 0
        %782 = vmatpush2.bf16.xpose.msra.mxu0 0
        %783 = vmatprep.subr.bf16.mxu0 0
        %784 = vmatpush2.bf16.xpose.msra.mxu0 0
        %785 = vmatprep.subr.bf16.mxu0 0
        %786 = vmatpush2.bf16.xpose.msra.mxu0 0
        %787 = vmatprep.subr.bf16.mxu0 0
        %788 = vmatpush2.bf16.xpose.msra.mxu0 0
        %789 = vmatprep.mubr.bf16.mxu0 0
        %790 = vmatmul.mubr.bf16.gmra.mxu0 %v752
        %v791 = vpop.f32.mrf.mxu0
        %v792 = vadd.f32 0.0, %v791
        %v793 = vpop.f32.mrf.mxu0
        %v794 = vpop.f32.mrf.mxu0
        %v795 = vpop.f32.mrf.mxu0
        %796 = vdwg.mxu0
        %v797 = vmul.f32 %v792, 0.35355338
        %v798 = vsel %vm750, %v797, -inf
        %799 = vmax.xlane.f32.xlu0 %v798
        %v800 = vpop.xlane.xlu0 %799
        %v801 = vsub.f32 %v797, %v800
        %v802 = vmul.f32 %v801, 1.442695
        %v803 = vpow.pop %v802
        %v804 = vsel %vm750, %v803, 0.0
        %805 = vadd.xlane.f32.xlu0 %v804
        %v806 = vpop.xlane.xlu0 %805
        %v807 = vrcp.pop %v806
        %v808 = vmul.f32 %v803, %v807
        %v809 = vpack.c.bf16 %v808, %v808
        %vm810 = vcmask 60416
        %811 = vst.msk [vmem:[%s525] sm:$0xf] %vm810, %v809
        %v812 = vadd.f32 %v808, 0.0
        %814 = vrot.lane.b32.xlu0 %v747, 120
        %v815 = vpop.permute.xlu0 %814
        %v817 = vunpack.c.l.b16 %v748
        %v818 = vpack.c.b16 %v817, %v817
        %819 = vrot.lane.b32.xlu0 %v818, 120
        %v820 = vpop.permute.xlu0 %819
        %v822 = vsel %vm750, %v815, 0
        %v825 = vsel %vm750, %v820, 0
        %827 = vmatprep.subr.bf16.mxu0 0
        %828 = vmatpush1.bf16.xpose.msra.mxu0 0
        %829 = vmatprep.subr.bf16.mxu0 0
        %830 = vmatpush1.bf16.xpose.msra.mxu0 0
        %831 = vmatprep.subr.bf16.mxu0 0
        %832 = vmatpush1.bf16.xpose.msra.mxu0 0
        %833 = vmatprep.subr.bf16.mxu0 0
        %834 = vmatpush1.bf16.xpose.msra.mxu0 0
        %835 = vmatprep.subr.bf16.mxu0 0
        %836 = vmatpush1.bf16.xpose.msra.mxu0 0
        %837 = vmatprep.subr.bf16.mxu0 0
        %838 = vmatpush1.bf16.xpose.msra.mxu0 0
        %839 = vmatprep.subr.bf16.mxu0 0
        %840 = vmatpush1.bf16.xpose.msra.mxu0 0
        %841 = vmatprep.subr.bf16.mxu0 0
        %842 = vmatpush1.bf16.xpose.msra.mxu0 %v825
        %843 = vmatprep.subr.bf16.mxu0 0
        %844 = vmatpush2.bf16.xpose.msra.mxu0 0
        %845 = vmatprep.subr.bf16.mxu0 0
        %846 = vmatpush2.bf16.xpose.msra.mxu0 0
        %847 = vmatprep.subr.bf16.mxu0 0
        %848 = vmatpush2.bf16.xpose.msra.mxu0 0
        %849 = vmatprep.subr.bf16.mxu0 0
        %850 = vmatpush2.bf16.xpose.msra.mxu0 0
        %851 = vmatprep.subr.bf16.mxu0 0
        %852 = vmatpush2.bf16.xpose.msra.mxu0 0
        %853 = vmatprep.subr.bf16.mxu0 0
        %854 = vmatpush2.bf16.xpose.msra.mxu0 0
        %855 = vmatprep.subr.bf16.mxu0 0
        %856 = vmatpush2.bf16.xpose.msra.mxu0 0
        %857 = vmatprep.subr.bf16.mxu0 0
        %858 = vmatpush2.bf16.xpose.msra.mxu0 0
        %859 = vmatprep.mubr.bf16.mxu0 0
        %860 = vmatmul.mubr.bf16.gmra.mxu0 %v822
        %v861 = vpop.f32.mrf.mxu0
        %v862 = vadd.f32 0.0, %v861
        %v863 = vpop.f32.mrf.mxu0
        %v864 = vpop.f32.mrf.mxu0
        %v865 = vpop.f32.mrf.mxu0
        %866 = vdwg.mxu0
        %v867 = vmul.f32 %v862, 0.35355338
        %v868 = vsel %vm750, %v867, -inf
        %869 = vmax.xlane.f32.xlu0 %v868
        %v870 = vpop.xlane.xlu0 %869
        %v871 = vsub.f32 %v867, %v870
        %v872 = vmul.f32 %v871, 1.442695
        %v873 = vpow.pop %v872
        %v874 = vsel %vm750, %v873, 0.0
        %875 = vadd.xlane.f32.xlu0 %v874
        %v876 = vpop.xlane.xlu0 %875
        %v877 = vrcp.pop %v876
        %v878 = vmul.f32 %v873, %v877
        %v879 = vpack.c.bf16 %v878, %v878
        %v881 = vunpack.c.l.b16 %v879
        %v882 = vpack.c.b16 %v881, %v881
        %883 = vrot.lane.b32.xlu0 %v882, 8
        %v884 = vpop.permute.xlu0 %883
        %vm886 = vcmask 126016
        %887 = vst.msk [vmem:[%s525] sm:$0xf] %vm886, %v884
        %v888 = vadd.f32 %v812, %v878
        %889 = vrot.lane.b32.xlu0 %v747, 112
        %v890 = vpop.permute.xlu0 %889
        %891 = vrot.lane.b32.xlu0 %v818, 112
        %v892 = vpop.permute.xlu0 %891
        %v894 = vsel %vm750, %v890, 0
        %v897 = vsel %vm750, %v892, 0
        %899 = vmatprep.subr.bf16.mxu0 0
        %900 = vmatpush1.bf16.xpose.msra.mxu0 0
        %901 = vmatprep.subr.bf16.mxu0 0
        %902 = vmatpush1.bf16.xpose.msra.mxu0 0
        %903 = vmatprep.subr.bf16.mxu0 0
        %904 = vmatpush1.bf16.xpose.msra.mxu0 0
        %905 = vmatprep.subr.bf16.mxu0 0
        %906 = vmatpush1.bf16.xpose.msra.mxu0 0
        %907 = vmatprep.subr.bf16.mxu0 0
        %908 = vmatpush1.bf16.xpose.msra.mxu0 0
        %909 = vmatprep.subr.bf16.mxu0 0
        %910 = vmatpush1.bf16.xpose.msra.mxu0 0
        %911 = vmatprep.subr.bf16.mxu0 0
        %912 = vmatpush1.bf16.xpose.msra.mxu0 0
        %913 = vmatprep.subr.bf16.mxu0 0
        %914 = vmatpush1.bf16.xpose.msra.mxu0 %v897
        %915 = vmatprep.subr.bf16.mxu0 0
        %916 = vmatpush2.bf16.xpose.msra.mxu0 0
        %917 = vmatprep.subr.bf16.mxu0 0
        %918 = vmatpush2.bf16.xpose.msra.mxu0 0
        %919 = vmatprep.subr.bf16.mxu0 0
        %920 = vmatpush2.bf16.xpose.msra.mxu0 0
        %921 = vmatprep.subr.bf16.mxu0 0
        %922 = vmatpush2.bf16.xpose.msra.mxu0 0
        %923 = vmatprep.subr.bf16.mxu0 0
        %924 = vmatpush2.bf16.xpose.msra.mxu0 0
        %925 = vmatprep.subr.bf16.mxu0 0
        %926 = vmatpush2.bf16.xpose.msra.mxu0 0
        %927 = vmatprep.subr.bf16.mxu0 0
        %928 = vmatpush2.bf16.xpose.msra.mxu0 0
        %929 = vmatprep.subr.bf16.mxu0 0
        %930 = vmatpush2.bf16.xpose.msra.mxu0 0
        %931 = vmatprep.mubr.bf16.mxu0 0
        %932 = vmatmul.mubr.bf16.gmra.mxu0 %v894
        %v933 = vpop.f32.mrf.mxu0
        %v934 = vadd.f32 0.0, %v933
        %v935 = vpop.f32.mrf.mxu0
        %v936 = vpop.f32.mrf.mxu0
        %v937 = vpop.f32.mrf.mxu0
        %938 = vdwg.mxu0
        %v939 = vmul.f32 %v934, 0.35355338
        %v940 = vsel %vm750, %v939, -inf
        %941 = vmax.xlane.f32.xlu0 %v940
        %v942 = vpop.xlane.xlu0 %941
        %v943 = vsub.f32 %v939, %v942
        %v944 = vmul.f32 %v943, 1.442695
        %v945 = vpow.pop %v944
        %v946 = vsel %vm750, %v945, 0.0
        %947 = vadd.xlane.f32.xlu0 %v946
        %v948 = vpop.xlane.xlu0 %947
        %v949 = vrcp.pop %v948
        %v950 = vmul.f32 %v945, %v949
        %v951 = vpack.c.bf16 %v950, %v950
        %v953 = vunpack.c.l.b16 %v951
        %v954 = vpack.c.b16 %v953, %v953
        %955 = vrot.lane.b32.xlu0 %v954, 16
        %v956 = vpop.permute.xlu0 %955
        %vm958 = vcmask 191616
        %959 = vst.msk [vmem:[%s525] sm:$0xf] %vm958, %v956
        %v960 = vadd.f32 %v888, %v950
        %961 = vrot.lane.b32.xlu0 %v747, 104
        %v962 = vpop.permute.xlu0 %961
        %963 = vrot.lane.b32.xlu0 %v818, 104
        %v964 = vpop.permute.xlu0 %963
        %v966 = vsel %vm750, %v962, 0
        %v969 = vsel %vm750, %v964, 0
        %971 = vmatprep.subr.bf16.mxu0 0
        %972 = vmatpush1.bf16.xpose.msra.mxu0 0
        %973 = vmatprep.subr.bf16.mxu0 0
        %974 = vmatpush1.bf16.xpose.msra.mxu0 0
        %975 = vmatprep.subr.bf16.mxu0 0
        %976 = vmatpush1.bf16.xpose.msra.mxu0 0
        %977 = vmatprep.subr.bf16.mxu0 0
        %978 = vmatpush1.bf16.xpose.msra.mxu0 0
        %979 = vmatprep.subr.bf16.mxu0 0
        %980 = vmatpush1.bf16.xpose.msra.mxu0 0
        %981 = vmatprep.subr.bf16.mxu0 0
        %982 = vmatpush1.bf16.xpose.msra.mxu0 0
        %983 = vmatprep.subr.bf16.mxu0 0
        %984 = vmatpush1.bf16.xpose.msra.mxu0 0
        %985 = vmatprep.subr.bf16.mxu0 0
        %986 = vmatpush1.bf16.xpose.msra.mxu0 %v969
        %987 = vmatprep.subr.bf16.mxu0 0
        %988 = vmatpush2.bf16.xpose.msra.mxu0 0
        %989 = vmatprep.subr.bf16.mxu0 0
        %990 = vmatpush2.bf16.xpose.msra.mxu0 0
        %991 = vmatprep.subr.bf16.mxu0 0
        %992 = vmatpush2.bf16.xpose.msra.mxu0 0
        %993 = vmatprep.subr.bf16.mxu0 0
        %994 = vmatpush2.bf16.xpose.msra.mxu0 0
        %995 = vmatprep.subr.bf16.mxu0 0
        %996 = vmatpush2.bf16.xpose.msra.mxu0 0
        %997 = vmatprep.subr.bf16.mxu0 0
        %998 = vmatpush2.bf16.xpose.msra.mxu0 0
        %999 = vmatprep.subr.bf16.mxu0 0
        %1000 = vmatpush2.bf16.xpose.msra.mxu0 0
        %1001 = vmatprep.subr.bf16.mxu0 0
        %1002 = vmatpush2.bf16.xpose.msra.mxu0 0
        %1003 = vmatprep.mubr.bf16.mxu0 0
        %1004 = vmatmul.mubr.bf16.gmra.mxu0 %v966
        %v1005 = vpop.f32.mrf.mxu0
        %v1006 = vadd.f32 0.0, %v1005
        %v1007 = vpop.f32.mrf.mxu0
        %v1008 = vpop.f32.mrf.mxu0
        %v1009 = vpop.f32.mrf.mxu0
        %1010 = vdwg.mxu0
        %v1011 = vmul.f32 %v1006, 0.35355338
        %v1012 = vsel %vm750, %v1011, -inf
        %1013 = vmax.xlane.f32.xlu0 %v1012
        %v1014 = vpop.xlane.xlu0 %1013
        %v1015 = vsub.f32 %v1011, %v1014
        %v1016 = vmul.f32 %v1015, 1.442695
        %v1017 = vpow.pop %v1016
        %v1018 = vsel %vm750, %v1017, 0.0
        %1019 = vadd.xlane.f32.xlu0 %v1018
        %v1020 = vpop.xlane.xlu0 %1019
        %v1021 = vrcp.pop %v1020
        %v1022 = vmul.f32 %v1017, %v1021
        %v1023 = vpack.c.bf16 %v1022, %v1022
        %v1025 = vunpack.c.l.b16 %v1023
        %v1026 = vpack.c.b16 %v1025, %v1025
        %1027 = vrot.lane.b32.xlu0 %v1026, 24
        %v1028 = vpop.permute.xlu0 %1027
        %vm1030 = vcmask 257216
        %1031 = vst.msk [vmem:[%s525] sm:$0xf] %vm1030, %v1028
        %v1032 = vadd.f32 %v960, %v1022
        %v1033 = vmul.f32 %v1032, 0.25
        %v1034 = vpack.c.bf16 %v1033, %v1033
        %v1036 = vsel %vm750, %v1034, 0
        %vm1038 = vcmask 1043456
        %v1040 = vsel %vm1038, %v749, 0
        %1042 = vmatprep.subr.bf16.mxu0 0
        %1043 = vmatpush1.bf16.msra.mxu0 0
        %1044 = vmatprep.subr.bf16.mxu0 0
        %1045 = vmatpush1.bf16.msra.mxu0 0
        %1046 = vmatprep.subr.bf16.mxu0 0
        %1047 = vmatpush1.bf16.msra.mxu0 0
        %1048 = vmatprep.subr.bf16.mxu0 0
        %1049 = vmatpush1.bf16.msra.mxu0 0
        %1050 = vmatprep.subr.bf16.mxu0 0
        %1051 = vmatpush1.bf16.msra.mxu0 0
        %1052 = vmatprep.subr.bf16.mxu0 0
        %1053 = vmatpush1.bf16.msra.mxu0 0
        %1054 = vmatprep.subr.bf16.mxu0 0
        %1055 = vmatpush1.bf16.msra.mxu0 0
        %1056 = vmatprep.subr.bf16.mxu0 0
        %1057 = vmatpush1.bf16.msra.mxu0 %v1040
        %1058 = vmatprep.subr.bf16.mxu0 0
        %1059 = vmatpush2.bf16.msra.mxu0 0
        %1060 = vmatprep.subr.bf16.mxu0 0
        %1061 = vmatpush2.bf16.msra.mxu0 0
        %1062 = vmatprep.subr.bf16.mxu0 0
        %1063 = vmatpush2.bf16.msra.mxu0 0
        %1064 = vmatprep.subr.bf16.mxu0 0
        %1065 = vmatpush2.bf16.msra.mxu0 0
        %1066 = vmatprep.subr.bf16.mxu0 0
        %1067 = vmatpush2.bf16.msra.mxu0 0
        %1068 = vmatprep.subr.bf16.mxu0 0
        %1069 = vmatpush2.bf16.msra.mxu0 0
        %1070 = vmatprep.subr.bf16.mxu0 0
        %1071 = vmatpush2.bf16.msra.mxu0 0
        %1072 = vmatprep.subr.bf16.mxu0 0
        %1073 = vmatpush2.bf16.msra.mxu0 0
        %1074 = vmatprep.mubr.bf16.mxu0 0
        %1075 = vmatmul.mubr.bf16.gmra.mxu0 %v1036
        %v1076 = vpop.f32.mrf.mxu0
        %v1077 = vadd.f32 0.0, %v1076
        %v1078 = vpop.f32.mrf.mxu0
        %v1079 = vpop.f32.mrf.mxu0
        %v1080 = vpop.f32.mrf.mxu0
        %1081 = vdwg.mxu0
        %v1082 = vpack.c.bf16 %v1077, %v1077
        %v1083 = vld [vmem:[%s9] sm:$0xf]
        %v1085 = vsel %vm750, %v1082, 0
        %v1088 = vsel %vm1038, %v1083, 0
        %1090 = vmatprep.subr.bf16.mxu0 0
        %1091 = vmatpush1.bf16.msra.mxu0 0
        %1092 = vmatprep.subr.bf16.mxu0 0
        %1093 = vmatpush1.bf16.msra.mxu0 0
        %1094 = vmatprep.subr.bf16.mxu0 0
        %1095 = vmatpush1.bf16.msra.mxu0 0
        %1096 = vmatprep.subr.bf16.mxu0 0
        %1097 = vmatpush1.bf16.msra.mxu0 0
        %1098 = vmatprep.subr.bf16.mxu0 0
        %1099 = vmatpush1.bf16.msra.mxu0 0
        %1100 = vmatprep.subr.bf16.mxu0 0
        %1101 = vmatpush1.bf16.msra.mxu0 0
        %1102 = vmatprep.subr.bf16.mxu0 0
        %1103 = vmatpush1.bf16.msra.mxu0 0
        %1104 = vmatprep.subr.bf16.mxu0 0
        %1105 = vmatpush1.bf16.msra.mxu0 %v1088
        %1106 = vmatprep.subr.bf16.mxu0 0
        %1107 = vmatpush2.bf16.msra.mxu0 0
        %1108 = vmatprep.subr.bf16.mxu0 0
        %1109 = vmatpush2.bf16.msra.mxu0 0
        %1110 = vmatprep.subr.bf16.mxu0 0
        %1111 = vmatpush2.bf16.msra.mxu0 0
        %1112 = vmatprep.subr.bf16.mxu0 0
        %1113 = vmatpush2.bf16.msra.mxu0 0
        %1114 = vmatprep.subr.bf16.mxu0 0
        %1115 = vmatpush2.bf16.msra.mxu0 0
        %1116 = vmatprep.subr.bf16.mxu0 0
        %1117 = vmatpush2.bf16.msra.mxu0 0
        %1118 = vmatprep.subr.bf16.mxu0 0
        %1119 = vmatpush2.bf16.msra.mxu0 0
        %1120 = vmatprep.subr.bf16.mxu0 0
        %1121 = vmatpush2.bf16.msra.mxu0 0
        %1122 = vmatprep.mubr.bf16.mxu0 0
        %1123 = vmatmul.mubr.bf16.gmra.mxu0 %v1085
        %v1124 = vpop.f32.mrf.mxu0
        %v1125 = vadd.f32 0.0, %v1124
        %v1126 = vpop.f32.mrf.mxu0
        %v1127 = vpop.f32.mrf.mxu0
        %v1128 = vpop.f32.mrf.mxu0
        %1129 = vdwg.mxu0
        %1130 = vst.msk [vmem:[%s518] sm:$0xff] %vm703, %v1125
        %s1131 = sand.u32 %s285, 1
        %s1132 = scalar_lea.sflag [#allocation6], %s1131
        %s1133 = sand.u32 %s285, 1
        %s1134 = smul.addr %s1133, 8
        %s1135 = scalar_lea.vmem [#allocation13], %s1134
        %s1136 = sand.u32 %s313, 1
        %s1137 = scalar_lea.sflag [#allocation15], %s1136
        %s1138 = sand.u32 %s313, 1
        %s1139 = smul.addr %s1138, 4
        %s1140 = scalar_lea.vmem [#allocation14], %s1139
        // Predicated region
        $region85: #{tpu_custom_call.1} parent=59 // pred_check
          %p1141 = pneg %p295
        $region86: #{tpu_custom_call.1} parent=59 // pred_check_branch
          %1143 = sbr.rel (%p1141) target = $region88
        $region87: #{tpu_custom_call.1} parent=59 // pred_region
          %s1145 = ssub.s32 128, 128
          %1146 = vsyncadd %s1132, %s1145
          %s1147 = sadd.s32 %s41, %s40
          %s1148 = smul.addr %s1147, 128
          %s1149 = scalar_lea.hbm %s10, %s1148
          %s1151 = sshll.u32 %s1135, 4
          %s1152 = int_to_ptr.vmem [resolvable:$true] %s1151
          %1154 = dma.vmem_to_hbm [thread:$0]  %s1152, 128, %s1149, %s1132
        $region88: #{tpu_custom_call.1} parent=59 // pred_fallthru
          _
        // Predicated region
        $region89: #{tpu_custom_call.1} parent=59 // pred_check
          %p1155 = pneg %p323
        $region90: #{tpu_custom_call.1} parent=59 // pred_check_branch
          %1157 = sbr.rel (%p1155) target = $region92
        $region91: #{tpu_custom_call.1} parent=59 // pred_region
          %s1159 = ssub.s32 64, 64
          %1160 = vsyncadd %s1137, %s1159
          %s1161 = sadd.s32 %s41, %s40
          %s1162 = smul.addr %s1161, 64
          %s1163 = scalar_lea.hbm %s11, %s1162
          %s1165 = sshll.u32 %s1140, 4
          %s1166 = int_to_ptr.vmem [resolvable:$true] %s1165
          %1168 = dma.vmem_to_hbm [thread:$0]  %s1166, 64, %s1163, %s1137
        $region92: #{tpu_custom_call.1} parent=59 // pred_fallthru
          _
      $region60: #{tpu_custom_call.1} parent=5 // pred_fallthru
        _
      %p1169 = scmp.le.s32.totalorder 2, %s31
      // Predicated region
      $region93: #{tpu_custom_call.1} parent=5 // pred_check
        %p1170 = pneg %p1169
      $region94: #{tpu_custom_call.1} parent=5 // pred_check_branch
        %1172 = sbr.rel (%p1170) target = $region96
      $region95: #{tpu_custom_call.1} parent=5 // pred_region
        %s1173 = ssub.s32 %s31, 2
        // Predicated region
        $region97: #{tpu_custom_call.1} parent=95 // pred_check
          %p1174 = pneg %p301
        $region98: #{tpu_custom_call.1} parent=95 // pred_check_branch
          %1176 = sbr.rel (%p1174) target = $region100
        $region99: #{tpu_custom_call.1} parent=95 // pred_region
          %s1177 = sand.u32 %s286, 1
          %s1178 = scalar_lea.sflag [#allocation6], %s1177
          %s1179 = sand.u32 %s286, 1
          %s1180 = smul.addr %s1179, 8
          %s1181 = scalar_lea.vmem [#allocation13], %s1180
          %1182 = dma.done %s1178, 128
        $region100: #{tpu_custom_call.1} parent=95 // pred_fallthru
          _
        // Predicated region
        $region101: #{tpu_custom_call.1} parent=95 // pred_check
          %p1183 = pneg %p329
        $region102: #{tpu_custom_call.1} parent=95 // pred_check_branch
          %1185 = sbr.rel (%p1183) target = $region104
        $region103: #{tpu_custom_call.1} parent=95 // pred_region
          %s1186 = sand.u32 %s314, 1
          %s1187 = scalar_lea.sflag [#allocation15], %s1186
          %s1188 = sand.u32 %s314, 1
          %s1189 = smul.addr %s1188, 4
          %s1190 = scalar_lea.vmem [#allocation14], %s1189
          %1191 = dma.done %s1187, 64
        $region104: #{tpu_custom_call.1} parent=95 // pred_fallthru
          _
      $region96: #{tpu_custom_call.1} parent=5 // pred_fallthru
        _
    $region6: #{tpu_custom_call.1} parent=1 // loop_footer
      %s35 = sadd.s32 1, %s31
    $region7: #{tpu_custom_call.1} parent=1 // loop_footer_branch
      %30 = sbr.rel target = $region3
    $region8: #{tpu_custom_call.1} parent=1 // loop_exit
      _
    %1192 = vsyncpa [#allocation5], 1
    %s1193 = scalar_lea.sflag [#allocation5], 1
    %1194 = vsyncpa %s1193, 1
    %1195 = vsyncpa [#allocation8], 1
    %s1196 = scalar_lea.sflag [#allocation8], 1
    %1197 = vsyncpa %s1196, 1
    %1198 = vsyncpa [#allocation11], 1
    %1199 = vsyncpa [#allocation6], 1
    %s1200 = scalar_lea.sflag [#allocation6], 1
    %1201 = vsyncpa %s1200, 1
    %1202 = vsyncpa [#allocation15], 1
    %s1203 = scalar_lea.sflag [#allocation15], 1
    %1204 = vsyncpa %s1203, 1

</llo_original>
